<compile_context>
chip_gen: v7x
topology: tpu7x:2x2x1
jax: 0.10.0
libtpu: 0.0.40
codegen_flags: <defaults>
</compile_context>

<pallas_src>
import jax
import jax.numpy as jnp
from jax.experimental import pallas as pl
from jax.experimental.pallas import tpu as pltpu

B = 2             # batch
CIN = 320         # channels out of the last MBConv stage of EfficientNet-B0
H = W = 7         # spatial size of the last stage (224/32)
CHEAD = 1280      # conv_head output channels ("outputsize" in the module)
NUM_CLASSES = 4


def head_kernel(x_ref, wh_ref, p_ref, wc_ref, o_ref):
    # x_ref : [M_pad, CIN]          bf16, flattened (batch*spatial) rows, zero-padded
    # wh_ref: [CIN, CHEAD]          bf16 1x1 conv_head weight
    # p_ref : [B, M_pad]            f32 block-diag mean-pool matrix (1/HW on valid rows)
    # wc_ref: [CHEAD, NUM_CLASSES]  f32 classifier weight
    # o_ref : [B, NUM_CLASSES]      f32 logits (classifier bias added in the wrapper)

    # conv_head: 1x1 conv == one 2D MXU matmul, bf16 operands, f32 accumulation
    h = jnp.dot(x_ref[...], wh_ref[...], preferred_element_type=jnp.float32)

    # SiLU / swish in f32 (EUP sigmoid + VPU mul); zero-padded rows stay exactly 0
    h = h * jax.nn.sigmoid(h)

    # per-batch global average pool as a second small MXU matmul: [B,M_pad]@[M_pad,CHEAD]
    pooled = jnp.dot(p_ref[...], h, preferred_element_type=jnp.float32)

    # classifier: Linear(1280, num_classes) (bias added outside the kernel)
    o_ref[...] = jnp.dot(pooled, wc_ref[...], preferred_element_type=jnp.float32)


def classifier_forward(x_nchw, w_head, w_cls, b_cls):
    """x_nchw: [B, CIN, H, W] (PyTorch layout). Returns logits [B, NUM_CLASSES]."""
    b, c, h, w = x_nchw.shape
    hw = h * w
    m = b * hw                       # 98
    m_pad = ((m + 7) // 8) * 8       # 104: 8-sublane aligned M

    # NCHW -> [B*HW, C] (channels on lanes), zero-pad rows, bf16 for HBM-facing operands
    x2d = jnp.transpose(x_nchw, (0, 2, 3, 1)).reshape(m, c)
    x2d = jnp.pad(x2d, ((0, m_pad - m), (0, 0))).astype(jnp.bfloat16)
    wh = w_head.astype(jnp.bfloat16)

    # block-diagonal mean-pool matrix: P[b, r] = 1/HW iff row r belongs to batch b
    # (padding rows r >= B*HW map to batch id >= B -> zero entries; divisor stays HW)
    row_batch = jnp.arange(m_pad) // hw
    pool = (jnp.arange(b)[:, None] == row_batch[None, :]).astype(jnp.float32) / hw

    logits = pl.pallas_call(
        head_kernel,
        out_shape=jax.ShapeDtypeStruct((b, NUM_CLASSES), jnp.float32),
        grid=(1,),
        in_specs=[
            pl.BlockSpec((m_pad, c), lambda i: (0, 0)),
            pl.BlockSpec((c, CHEAD), lambda i: (0, 0)),
            pl.BlockSpec((b, m_pad), lambda i: (0, 0)),
            pl.BlockSpec((CHEAD, NUM_CLASSES), lambda i: (0, 0)),
        ],
        out_specs=pl.BlockSpec((b, NUM_CLASSES), lambda i: (0, 0)),
        compiler_params=pltpu.CompilerParams(
            dimension_semantics=("arbitrary",)
        ),
    )(x2d, wh, pool, w_cls)

    # classifier bias: tiny [B, NUM_CLASSES] add, fused by XLA around the kernel
    return logits + b_cls[None, :]


def reference_forward(x_nchw, w_head, w_cls, b_cls):
    """Pure-JAX f32 reference of the same tail computation."""
    b, c, h, w = x_nchw.shape
    x = jnp.transpose(x_nchw, (0, 2, 3, 1)).reshape(b, h * w, c).astype(jnp.float32)
    hmap = jnp.einsum("bnc,cd->bnd", x, w_head.astype(jnp.float32))
    hmap = hmap * jax.nn.sigmoid(hmap)
    pooled = jnp.mean(hmap, axis=1)
    return pooled @ w_cls.astype(jnp.float32) + b_cls


if __name__ == "__main__":
    key = jax.random.PRNGKey(0)
    k_x, k_wh, k_wc, k_bc = jax.random.split(key, 4)

    # deterministic synthetic inputs / parameters
    x = jax.random.normal(k_x, (B, CIN, H, W), dtype=jnp.float32)
    w_head = jax.random.normal(k_wh, (CIN, CHEAD), dtype=jnp.float32) * (1.0 / CIN**0.5)
    w_cls = jax.random.normal(k_wc, (CHEAD, NUM_CLASSES), dtype=jnp.float32) * (1.0 / CHEAD**0.5)
    b_cls = jax.random.normal(k_bc, (NUM_CLASSES,), dtype=jnp.float32) * 0.01

    fwd = jax.jit(classifier_forward)
    logits = fwd(x, w_head, w_cls, b_cls)
    logits = jax.block_until_ready(logits)

    ref = reference_forward(x, w_head, w_cls, b_cls)
    assert logits.shape == (B, NUM_CLASSES)
    # bf16 matmul operands -> loosened tolerance vs the f32 reference
    assert jnp.allclose(logits, ref, rtol=2e-2, atol=2e-2), "mismatch vs JAX reference"

    print("KERNEL_OK")
</pallas_src>

<mosaic_0001>
module attributes {stable_mosaic.version = 11 : i64} {
  func.func @head_kernel(%arg0: i32, %arg1: memref<104x320xbf16, #tpu.memory_space<vmem>>, %arg2: memref<320x1280xbf16, #tpu.memory_space<vmem>>, %arg3: memref<2x104xf32, #tpu.memory_space<vmem>>, %arg4: memref<1280x4xf32, #tpu.memory_space<vmem>>, %arg5: memref<2x4xf32, #tpu.memory_space<vmem>>) attributes {dimension_semantics = [#tpu.dimension_semantics<arbitrary>], iteration_bounds = array<i64: 1>, scalar_prefetch = 0 : i64, scratch_operands = 0 : i64, tpu.core_type = #tpu.core_type<tc>, window_params = [{pipeline_mode = #tpu.pipeline_mode<synchronous>, transform_indices = @transform_0, window_bounds = array<i64: 104, 320>}, {pipeline_mode = #tpu.pipeline_mode<synchronous>, transform_indices = @transform_1, window_bounds = array<i64: 320, 1280>}, {pipeline_mode = #tpu.pipeline_mode<synchronous>, transform_indices = @transform_2, window_bounds = array<i64: 2, 104>}, {pipeline_mode = #tpu.pipeline_mode<synchronous>, transform_indices = @transform_3, window_bounds = array<i64: 1280, 4>}, {pipeline_mode = #tpu.pipeline_mode<synchronous>, transform_indices = @transform_4, window_bounds = array<i64: 2, 4>}]} {
    %c0 = arith.constant 0 : index
    %c0_0 = arith.constant 0 : index
    %0 = vector.load %arg1[%c0, %c0_0] : memref<104x320xbf16, #tpu.memory_space<vmem>>, vector<104x320xbf16>
    %c0_1 = arith.constant 0 : index
    %c0_2 = arith.constant 0 : index
    %1 = vector.load %arg2[%c0_1, %c0_2] : memref<320x1280xbf16, #tpu.memory_space<vmem>>, vector<320x1280xbf16>
    %cst = arith.constant dense<0.000000e+00> : vector<104x1280xf32>
    %2 = tpu.matmul %0, %1, %cst {dimension_numbers = #tpu.dot_dimension_numbers<[1], [0], [0], [1], [0, 0, 1, 1], [], []>} : vector<104x320xbf16>, vector<320x1280xbf16>, vector<104x1280xf32> -> vector<104x1280xf32>
    %3 = arith.negf %2 : vector<104x1280xf32>
    %4 = math.exp %3 : vector<104x1280xf32>
    %cst_3 = arith.constant 1.000000e+00 : f32
    %5 = vector.broadcast %cst_3 : f32 to vector<104x1280xf32>
    %6 = arith.addf %5, %4 : vector<104x1280xf32>
    %7 = arith.divf %5, %6 : vector<104x1280xf32>
    %8 = arith.mulf %2, %7 : vector<104x1280xf32>
    %c0_4 = arith.constant 0 : index
    %c0_5 = arith.constant 0 : index
    %9 = vector.load %arg3[%c0_4, %c0_5] : memref<2x104xf32, #tpu.memory_space<vmem>>, vector<2x104xf32>
    %cst_6 = arith.constant dense<0.000000e+00> : vector<2x1280xf32>
    %10 = tpu.matmul %9, %8, %cst_6 {dimension_numbers = #tpu.dot_dimension_numbers<[1], [0], [0], [1], [0, 0, 1, 1], [], []>} : vector<2x104xf32>, vector<104x1280xf32>, vector<2x1280xf32> -> vector<2x1280xf32>
    %c0_7 = arith.constant 0 : index
    %c0_8 = arith.constant 0 : index
    %11 = vector.load %arg4[%c0_7, %c0_8] : memref<1280x4xf32, #tpu.memory_space<vmem>>, vector<1280x4xf32>
    %cst_9 = arith.constant dense<0.000000e+00> : vector<2x4xf32>
    %12 = tpu.matmul %10, %11, %cst_9 {dimension_numbers = #tpu.dot_dimension_numbers<[1], [0], [0], [1], [0, 0, 1, 1], [], []>} : vector<2x1280xf32>, vector<1280x4xf32>, vector<2x4xf32> -> vector<2x4xf32>
    %c0_10 = arith.constant 0 : index
    %c0_11 = arith.constant 0 : index
    %13 = vector.load %arg5[%c0_10, %c0_11] : memref<2x4xf32, #tpu.memory_space<vmem>>, vector<2x4xf32>
    tpu.vector_store %arg5[%c0_10, %c0_11], %12 {strides = array<i32>} : memref<2x4xf32, #tpu.memory_space<vmem>>, vector<2x4xf32>,
    return
  }
  func.func @transform_0(%arg0: i32) -> (i32, i32) {
    %c0_i32 = arith.constant 0 : i32
    %c0_i32_0 = arith.constant 0 : i32
    %c0_i32_1 = arith.constant 0 : i32
    return %c0_i32, %c0_i32_0 : i32, i32
  }
  func.func @transform_1(%arg0: i32) -> (i32, i32) {
    %c0_i32 = arith.constant 0 : i32
    %c0_i32_0 = arith.constant 0 : i32
    %c0_i32_1 = arith.constant 0 : i32
    return %c0_i32, %c0_i32_0 : i32, i32
  }
  func.func @transform_2(%arg0: i32) -> (i32, i32) {
    %c0_i32 = arith.constant 0 : i32
    %c0_i32_0 = arith.constant 0 : i32
    %c0_i32_1 = arith.constant 0 : i32
    return %c0_i32, %c0_i32_0 : i32, i32
  }
  func.func @transform_3(%arg0: i32) -> (i32, i32) {
    %c0_i32 = arith.constant 0 : i32
    %c0_i32_0 = arith.constant 0 : i32
    %c0_i32_1 = arith.constant 0 : i32
    return %c0_i32, %c0_i32_0 : i32, i32
  }
  func.func @transform_4(%arg0: i32) -> (i32, i32) {
    %c0_i32 = arith.constant 0 : i32
    %c0_i32_0 = arith.constant 0 : i32
    %c0_i32_1 = arith.constant 0 : i32
    return %c0_i32, %c0_i32_0 : i32, i32
  }
}

</mosaic_0001>

<llo_original>
// kernel: classifier_forward.1
$region0: #{classifier_forward.1}
  #allocation0 [shape = 'u32[]', space=smem, size = 0x4, offset = 0x4, fixed_abs, tag = 'smem constant byte address 0x4 - core index']
  #allocation1 [shape = 'u32[144,128]{1,0:T(1,128)}', space=vmem, size = 0x12000, scoped, tag = 'internal scratch']
  %s0 = inlined_call_operand.vmem [shape: bf16[104,320], index: 0, kind: input, shape index: {}]
  %s1 = inlined_call_operand.vmem [shape: bf16[320,1280], index: 1, kind: input, shape index: {}]
  %s2 = inlined_call_operand.vmem [shape: f32[2,104], index: 2, kind: input, shape index: {}]
  %s3 = inlined_call_operand.vmem [shape: f32[1280,4], index: 3, kind: input, shape index: {}]
  %s4 = inlined_call_operand.vmem [shape: f32[2,4], index: 4, kind: output, shape index: {}]
  %s5 = sld [smem:[#allocation0]]
  $region26: #{classifier_forward.1} parent=0
    _
  %s7 = ssub.s32 1, %s5
  %s8 = scalar_select 0, %s7, %s5
  // Predicated region
  $region2: #{classifier_forward.1} parent=0 // pred_check
    _
  $region3: #{classifier_forward.1} parent=0 // pred_check_branch
    %10 = sbr.rel (0) target = $region5
  $region4: #{classifier_forward.1} parent=0 // pred_region
    _
  $region5: #{classifier_forward.1} parent=0 // pred_fallthru
    _
  // Predicated region
  $region6: #{classifier_forward.1} parent=0 // pred_check
    _
  $region7: #{classifier_forward.1} parent=0 // pred_check_branch
    %12 = sbr.rel (0) target = $region9
  $region8: #{classifier_forward.1} parent=0 // pred_region
    _
  $region9: #{classifier_forward.1} parent=0 // pred_fallthru
    _
  // Predicated region
  $region10: #{classifier_forward.1} parent=0 // pred_check
    _
  $region11: #{classifier_forward.1} parent=0 // pred_check_branch
    %14 = sbr.rel (0) target = $region13
  $region12: #{classifier_forward.1} parent=0 // pred_region
    _
  $region13: #{classifier_forward.1} parent=0 // pred_fallthru
    _
  // Predicated region
  $region14: #{classifier_forward.1} parent=0 // pred_check
    _
  $region15: #{classifier_forward.1} parent=0 // pred_check_branch
    %16 = sbr.rel (0) target = $region17
  $region16: #{classifier_forward.1} parent=0 // pred_region
    _
  $region17: #{classifier_forward.1} parent=0 // pred_fallthru
    _
  %v18 = vld [vmem:[%s0] sm:$0xff]
  %v19 = vld [vmem:[%s0 + $0x8] sm:$0xf]
  %v20 = vld [vmem:[%s0 + $0xc] sm:$0xff]
  %v21 = vld [vmem:[%s0 + $0x14] sm:$0xf]
  %v22 = vld [vmem:[%s0 + $0x18] sm:$0xff]
  %v23 = vld [vmem:[%s0 + $0x20] sm:$0xf]
  %v24 = vld [vmem:[%s0 + $0x24] sm:$0xff]
  %v25 = vld [vmem:[%s0 + $0x2c] sm:$0xf]
  %v26 = vld [vmem:[%s0 + $0x30] sm:$0xff]
  %v27 = vld [vmem:[%s0 + $0x38] sm:$0xf]
  %v28 = vld [vmem:[%s0 + $0x3c] sm:$0xff]
  %v29 = vld [vmem:[%s0 + $0x44] sm:$0xf]
  %v30 = vld [vmem:[%s0 + $0x48] sm:$0xff]
  %v31 = vld [vmem:[%s0 + $0x50] sm:$0xf]
  %v32 = vld [vmem:[%s0 + $0x54] sm:$0xff]
  %v33 = vld [vmem:[%s0 + $0x5c] sm:$0xf]
  %v34 = vld [vmem:[%s0 + $0x60] sm:$0xff]
  %v35 = vld [vmem:[%s0 + $0x68] sm:$0xf]
  %v36 = vld [vmem:[%s0 + $0x6c] sm:$0xff]
  %v37 = vld [vmem:[%s0 + $0x74] sm:$0xf]
  %v38 = vld [vmem:[%s0 + $0x78] sm:$0xff]
  %v39 = vld [vmem:[%s0 + $0x80] sm:$0xf]
  %v40 = vld [vmem:[%s0 + $0x84] sm:$0xff]
  %v41 = vld [vmem:[%s0 + $0x8c] sm:$0xf]
  %v42 = vld [vmem:[%s0 + $0x90] sm:$0xff]
  %v43 = vld [vmem:[%s0 + $0x98] sm:$0xf]
  %v44 = vld [vmem:[%s1] sm:$0xff]
  %v45 = vld [vmem:[%s1 + $0x8] sm:$0xff]
  %v46 = vld [vmem:[%s1 + $0x10] sm:$0xff]
  %v47 = vld [vmem:[%s1 + $0x18] sm:$0xff]
  %v48 = vld [vmem:[%s1 + $0x20] sm:$0xff]
  %v49 = vld [vmem:[%s1 + $0x28] sm:$0xff]
  %v50 = vld [vmem:[%s1 + $0x30] sm:$0xff]
  %v51 = vld [vmem:[%s1 + $0x38] sm:$0xff]
  %v52 = vld [vmem:[%s1 + $0x40] sm:$0xff]
  %v53 = vld [vmem:[%s1 + $0x48] sm:$0xff]
  %v54 = vld [vmem:[%s1 + $0x50] sm:$0xff]
  %v55 = vld [vmem:[%s1 + $0x58] sm:$0xff]
  %v56 = vld [vmem:[%s1 + $0x60] sm:$0xff]
  %v57 = vld [vmem:[%s1 + $0x68] sm:$0xff]
  %v58 = vld [vmem:[%s1 + $0x70] sm:$0xff]
  %v59 = vld [vmem:[%s1 + $0x78] sm:$0xff]
  %v60 = vld [vmem:[%s1 + $0x80] sm:$0xff]
  %v61 = vld [vmem:[%s1 + $0x88] sm:$0xff]
  %v62 = vld [vmem:[%s1 + $0x90] sm:$0xff]
  %v63 = vld [vmem:[%s1 + $0x98] sm:$0xff]
  %v64 = vld [vmem:[%s1 + $0xa0] sm:$0xff]
  %v65 = vld [vmem:[%s1 + $0xa8] sm:$0xff]
  %v66 = vld [vmem:[%s1 + $0xb0] sm:$0xff]
  %v67 = vld [vmem:[%s1 + $0xb8] sm:$0xff]
  %v68 = vld [vmem:[%s1 + $0xc0] sm:$0xff]
  %v69 = vld [vmem:[%s1 + $0xc8] sm:$0xff]
  %v70 = vld [vmem:[%s1 + $0xd0] sm:$0xff]
  %v71 = vld [vmem:[%s1 + $0xd8] sm:$0xff]
  %v72 = vld [vmem:[%s1 + $0xe0] sm:$0xff]
  %v73 = vld [vmem:[%s1 + $0xe8] sm:$0xff]
  %v74 = vld [vmem:[%s1 + $0xf0] sm:$0xff]
  %v75 = vld [vmem:[%s1 + $0xf8] sm:$0xff]
  %v76 = vld [vmem:[%s1 + $0x100] sm:$0xff]
  %v77 = vld [vmem:[%s1 + $0x108] sm:$0xff]
  %v78 = vld [vmem:[%s1 + $0x110] sm:$0xff]
  %v79 = vld [vmem:[%s1 + $0x118] sm:$0xff]
  %v80 = vld [vmem:[%s1 + $0x120] sm:$0xff]
  %v81 = vld [vmem:[%s1 + $0x128] sm:$0xff]
  %v82 = vld [vmem:[%s1 + $0x130] sm:$0xff]
  %v83 = vld [vmem:[%s1 + $0x138] sm:$0xff]
  %v84 = vld [vmem:[%s1 + $0x140] sm:$0xff]
  %v85 = vld [vmem:[%s1 + $0x148] sm:$0xff]
  %v86 = vld [vmem:[%s1 + $0x150] sm:$0xff]
  %v87 = vld [vmem:[%s1 + $0x158] sm:$0xff]
  %v88 = vld [vmem:[%s1 + $0x160] sm:$0xff]
  %v89 = vld [vmem:[%s1 + $0x168] sm:$0xff]
  %v90 = vld [vmem:[%s1 + $0x170] sm:$0xff]
  %v91 = vld [vmem:[%s1 + $0x178] sm:$0xff]
  %v92 = vld [vmem:[%s1 + $0x180] sm:$0xff]
  %v93 = vld [vmem:[%s1 + $0x188] sm:$0xff]
  %v94 = vld [vmem:[%s1 + $0x190] sm:$0xff]
  %v95 = vld [vmem:[%s1 + $0x198] sm:$0xff]
  %v96 = vld [vmem:[%s1 + $0x1a0] sm:$0xff]
  %v97 = vld [vmem:[%s1 + $0x1a8] sm:$0xff]
  %v98 = vld [vmem:[%s1 + $0x1b0] sm:$0xff]
  %v99 = vld [vmem:[%s1 + $0x1b8] sm:$0xff]
  %v100 = vld [vmem:[%s1 + $0x1c0] sm:$0xff]
  %v101 = vld [vmem:[%s1 + $0x1c8] sm:$0xff]
  %v102 = vld [vmem:[%s1 + $0x1d0] sm:$0xff]
  %v103 = vld [vmem:[%s1 + $0x1d8] sm:$0xff]
  %v104 = vld [vmem:[%s1 + $0x1e0] sm:$0xff]
  %v105 = vld [vmem:[%s1 + $0x1e8] sm:$0xff]
  %v106 = vld [vmem:[%s1 + $0x1f0] sm:$0xff]
  %v107 = vld [vmem:[%s1 + $0x1f8] sm:$0xff]
  %v108 = vld [vmem:[%s1 + $0x200] sm:$0xff]
  %v109 = vld [vmem:[%s1 + $0x208] sm:$0xff]
  %v110 = vld [vmem:[%s1 + $0x210] sm:$0xff]
  %v111 = vld [vmem:[%s1 + $0x218] sm:$0xff]
  %v112 = vld [vmem:[%s1 + $0x220] sm:$0xff]
  %v113 = vld [vmem:[%s1 + $0x228] sm:$0xff]
  %v114 = vld [vmem:[%s1 + $0x230] sm:$0xff]
  %v115 = vld [vmem:[%s1 + $0x238] sm:$0xff]
  %v116 = vld [vmem:[%s1 + $0x240] sm:$0xff]
  %v117 = vld [vmem:[%s1 + $0x248] sm:$0xff]
  %v118 = vld [vmem:[%s1 + $0x250] sm:$0xff]
  %v119 = vld [vmem:[%s1 + $0x258] sm:$0xff]
  %v120 = vld [vmem:[%s1 + $0x260] sm:$0xff]
  %v121 = vld [vmem:[%s1 + $0x268] sm:$0xff]
  %v122 = vld [vmem:[%s1 + $0x270] sm:$0xff]
  %v123 = vld [vmem:[%s1 + $0x278] sm:$0xff]
  %v124 = vld [vmem:[%s1 + $0x280] sm:$0xff]
  %v125 = vld [vmem:[%s1 + $0x288] sm:$0xff]
  %v126 = vld [vmem:[%s1 + $0x290] sm:$0xff]
  %v127 = vld [vmem:[%s1 + $0x298] sm:$0xff]
  %v128 = vld [vmem:[%s1 + $0x2a0] sm:$0xff]
  %v129 = vld [vmem:[%s1 + $0x2a8] sm:$0xff]
  %v130 = vld [vmem:[%s1 + $0x2b0] sm:$0xff]
  %v131 = vld [vmem:[%s1 + $0x2b8] sm:$0xff]
  %v132 = vld [vmem:[%s1 + $0x2c0] sm:$0xff]
  %v133 = vld [vmem:[%s1 + $0x2c8] sm:$0xff]
  %v134 = vld [vmem:[%s1 + $0x2d0] sm:$0xff]
  %v135 = vld [vmem:[%s1 + $0x2d8] sm:$0xff]
  %v136 = vld [vmem:[%s1 + $0x2e0] sm:$0xff]
  %v137 = vld [vmem:[%s1 + $0x2e8] sm:$0xff]
  %v138 = vld [vmem:[%s1 + $0x2f0] sm:$0xff]
  %v139 = vld [vmem:[%s1 + $0x2f8] sm:$0xff]
  %v140 = vld [vmem:[%s1 + $0x300] sm:$0xff]
  %v141 = vld [vmem:[%s1 + $0x308] sm:$0xff]
  %v142 = vld [vmem:[%s1 + $0x310] sm:$0xff]
  %v143 = vld [vmem:[%s1 + $0x318] sm:$0xff]
  %v144 = vld [vmem:[%s1 + $0x320] sm:$0xff]
  %v145 = vld [vmem:[%s1 + $0x328] sm:$0xff]
  %v146 = vld [vmem:[%s1 + $0x330] sm:$0xff]
  %v147 = vld [vmem:[%s1 + $0x338] sm:$0xff]
  %v148 = vld [vmem:[%s1 + $0x340] sm:$0xff]
  %v149 = vld [vmem:[%s1 + $0x348] sm:$0xff]
  %v150 = vld [vmem:[%s1 + $0x350] sm:$0xff]
  %v151 = vld [vmem:[%s1 + $0x358] sm:$0xff]
  %v152 = vld [vmem:[%s1 + $0x360] sm:$0xff]
  %v153 = vld [vmem:[%s1 + $0x368] sm:$0xff]
  %v154 = vld [vmem:[%s1 + $0x370] sm:$0xff]
  %v155 = vld [vmem:[%s1 + $0x378] sm:$0xff]
  %v156 = vld [vmem:[%s1 + $0x380] sm:$0xff]
  %v157 = vld [vmem:[%s1 + $0x388] sm:$0xff]
  %v158 = vld [vmem:[%s1 + $0x390] sm:$0xff]
  %v159 = vld [vmem:[%s1 + $0x398] sm:$0xff]
  %v160 = vld [vmem:[%s1 + $0x3a0] sm:$0xff]
  %v161 = vld [vmem:[%s1 + $0x3a8] sm:$0xff]
  %v162 = vld [vmem:[%s1 + $0x3b0] sm:$0xff]
  %v163 = vld [vmem:[%s1 + $0x3b8] sm:$0xff]
  %v164 = vld [vmem:[%s1 + $0x3c0] sm:$0xff]
  %v165 = vld [vmem:[%s1 + $0x3c8] sm:$0xff]
  %v166 = vld [vmem:[%s1 + $0x3d0] sm:$0xff]
  %v167 = vld [vmem:[%s1 + $0x3d8] sm:$0xff]
  %v168 = vld [vmem:[%s1 + $0x3e0] sm:$0xff]
  %v169 = vld [vmem:[%s1 + $0x3e8] sm:$0xff]
  %v170 = vld [vmem:[%s1 + $0x3f0] sm:$0xff]
  %v171 = vld [vmem:[%s1 + $0x3f8] sm:$0xff]
  %v172 = vld [vmem:[%s1 + $0x400] sm:$0xff]
  %v173 = vld [vmem:[%s1 + $0x408] sm:$0xff]
  %v174 = vld [vmem:[%s1 + $0x410] sm:$0xff]
  %v175 = vld [vmem:[%s1 + $0x418] sm:$0xff]
  %v176 = vld [vmem:[%s1 + $0x420] sm:$0xff]
  %v177 = vld [vmem:[%s1 + $0x428] sm:$0xff]
  %v178 = vld [vmem:[%s1 + $0x430] sm:$0xff]
  %v179 = vld [vmem:[%s1 + $0x438] sm:$0xff]
  %v180 = vld [vmem:[%s1 + $0x440] sm:$0xff]
  %v181 = vld [vmem:[%s1 + $0x448] sm:$0xff]
  %v182 = vld [vmem:[%s1 + $0x450] sm:$0xff]
  %v183 = vld [vmem:[%s1 + $0x458] sm:$0xff]
  %v184 = vld [vmem:[%s1 + $0x460] sm:$0xff]
  %v185 = vld [vmem:[%s1 + $0x468] sm:$0xff]
  %v186 = vld [vmem:[%s1 + $0x470] sm:$0xff]
  %v187 = vld [vmem:[%s1 + $0x478] sm:$0xff]
  %v188 = vld [vmem:[%s1 + $0x480] sm:$0xff]
  %v189 = vld [vmem:[%s1 + $0x488] sm:$0xff]
  %v190 = vld [vmem:[%s1 + $0x490] sm:$0xff]
  %v191 = vld [vmem:[%s1 + $0x498] sm:$0xff]
  %v192 = vld [vmem:[%s1 + $0x4a0] sm:$0xff]
  %v193 = vld [vmem:[%s1 + $0x4a8] sm:$0xff]
  %v194 = vld [vmem:[%s1 + $0x4b0] sm:$0xff]
  %v195 = vld [vmem:[%s1 + $0x4b8] sm:$0xff]
  %v196 = vld [vmem:[%s1 + $0x4c0] sm:$0xff]
  %v197 = vld [vmem:[%s1 + $0x4c8] sm:$0xff]
  %v198 = vld [vmem:[%s1 + $0x4d0] sm:$0xff]
  %v199 = vld [vmem:[%s1 + $0x4d8] sm:$0xff]
  %v200 = vld [vmem:[%s1 + $0x4e0] sm:$0xff]
  %v201 = vld [vmem:[%s1 + $0x4e8] sm:$0xff]
  %v202 = vld [vmem:[%s1 + $0x4f0] sm:$0xff]
  %v203 = vld [vmem:[%s1 + $0x4f8] sm:$0xff]
  %v204 = vld [vmem:[%s1 + $0x500] sm:$0xff]
  %v205 = vld [vmem:[%s1 + $0x508] sm:$0xff]
  %v206 = vld [vmem:[%s1 + $0x510] sm:$0xff]
  %v207 = vld [vmem:[%s1 + $0x518] sm:$0xff]
  %v208 = vld [vmem:[%s1 + $0x520] sm:$0xff]
  %v209 = vld [vmem:[%s1 + $0x528] sm:$0xff]
  %v210 = vld [vmem:[%s1 + $0x530] sm:$0xff]
  %v211 = vld [vmem:[%s1 + $0x538] sm:$0xff]
  %v212 = vld [vmem:[%s1 + $0x540] sm:$0xff]
  %v213 = vld [vmem:[%s1 + $0x548] sm:$0xff]
  %v214 = vld [vmem:[%s1 + $0x550] sm:$0xff]
  %v215 = vld [vmem:[%s1 + $0x558] sm:$0xff]
  %v216 = vld [vmem:[%s1 + $0x560] sm:$0xff]
  %v217 = vld [vmem:[%s1 + $0x568] sm:$0xff]
  %v218 = vld [vmem:[%s1 + $0x570] sm:$0xff]
  %v219 = vld [vmem:[%s1 + $0x578] sm:$0xff]
  %v220 = vld [vmem:[%s1 + $0x580] sm:$0xff]
  %v221 = vld [vmem:[%s1 + $0x588] sm:$0xff]
  %v222 = vld [vmem:[%s1 + $0x590] sm:$0xff]
  %v223 = vld [vmem:[%s1 + $0x598] sm:$0xff]
  %v224 = vld [vmem:[%s1 + $0x5a0] sm:$0xff]
  %v225 = vld [vmem:[%s1 + $0x5a8] sm:$0xff]
  %v226 = vld [vmem:[%s1 + $0x5b0] sm:$0xff]
  %v227 = vld [vmem:[%s1 + $0x5b8] sm:$0xff]
  %v228 = vld [vmem:[%s1 + $0x5c0] sm:$0xff]
  %v229 = vld [vmem:[%s1 + $0x5c8] sm:$0xff]
  %v230 = vld [vmem:[%s1 + $0x5d0] sm:$0xff]
  %v231 = vld [vmem:[%s1 + $0x5d8] sm:$0xff]
  %v232 = vld [vmem:[%s1 + $0x5e0] sm:$0xff]
  %v233 = vld [vmem:[%s1 + $0x5e8] sm:$0xff]
  %v234 = vld [vmem:[%s1 + $0x5f0] sm:$0xff]
  %v235 = vld [vmem:[%s1 + $0x5f8] sm:$0xff]
  %v236 = vld [vmem:[%s1 + $0x600] sm:$0xff]
  %v237 = vld [vmem:[%s1 + $0x608] sm:$0xff]
  %v238 = vld [vmem:[%s1 + $0x610] sm:$0xff]
  %v239 = vld [vmem:[%s1 + $0x618] sm:$0xff]
  %v240 = vld [vmem:[%s1 + $0x620] sm:$0xff]
  %v241 = vld [vmem:[%s1 + $0x628] sm:$0xff]
  %v242 = vld [vmem:[%s1 + $0x630] sm:$0xff]
  %v243 = vld [vmem:[%s1 + $0x638] sm:$0xff]
  %v270 = vunpack.c.l.b16 %v18
  %v271 = vunpack.c.h.b16 %v18
  %v272 = vunpack.c.l.b16 %v19
  %v273 = vunpack.c.l.b16 %v20
  %v274 = vunpack.c.h.b16 %v20
  %v275 = vunpack.c.l.b16 %v21
  %v276 = vunpack.c.l.b16 %v22
  %v277 = vunpack.c.h.b16 %v22
  %v278 = vunpack.c.l.b16 %v23
  %v279 = vunpack.c.l.b16 %v24
  %v280 = vunpack.c.h.b16 %v24
  %v281 = vunpack.c.l.b16 %v25
  %v282 = vunpack.c.l.b16 %v26
  %v283 = vunpack.c.h.b16 %v26
  %v284 = vunpack.c.l.b16 %v27
  %v285 = vunpack.c.l.b16 %v28
  %v286 = vunpack.c.h.b16 %v28
  %v287 = vunpack.c.l.b16 %v29
  %v288 = vunpack.c.l.b16 %v30
  %v289 = vunpack.c.h.b16 %v30
  %v290 = vunpack.c.l.b16 %v31
  %v291 = vunpack.c.l.b16 %v32
  %v292 = vunpack.c.h.b16 %v32
  %v293 = vunpack.c.l.b16 %v33
  %v294 = vunpack.c.l.b16 %v34
  %v295 = vunpack.c.h.b16 %v34
  %v296 = vunpack.c.l.b16 %v35
  %v297 = vunpack.c.l.b16 %v36
  %v298 = vunpack.c.h.b16 %v36
  %v299 = vunpack.c.l.b16 %v37
  %v300 = vunpack.c.l.b16 %v38
  %v301 = vunpack.c.h.b16 %v38
  %v302 = vunpack.c.l.b16 %v39
  %v303 = vunpack.c.l.b16 %v40
  %v304 = vunpack.c.h.b16 %v40
  %v305 = vunpack.c.l.b16 %v41
  %v306 = vunpack.c.l.b16 %v42
  %v307 = vunpack.c.h.b16 %v42
  %v308 = vunpack.c.l.b16 %v43
  %v309 = vpack.c.b16 %v273, %v270
  %v310 = vpack.c.b16 %v274, %v271
  %v311 = vpack.c.b16 %v275, %v272
  %v312 = vpack.c.b16 %v279, %v276
  %v313 = vpack.c.b16 %v280, %v277
  %v314 = vpack.c.b16 %v281, %v278
  %v315 = vpack.c.b16 %v285, %v282
  %v316 = vpack.c.b16 %v286, %v283
  %v317 = vpack.c.b16 %v287, %v284
  %v318 = vpack.c.b16 %v291, %v288
  %v319 = vpack.c.b16 %v292, %v289
  %v320 = vpack.c.b16 %v293, %v290
  %v321 = vpack.c.b16 %v297, %v294
  %v322 = vpack.c.b16 %v298, %v295
  %v323 = vpack.c.b16 %v299, %v296
  %v324 = vpack.c.b16 %v303, %v300
  %v325 = vpack.c.b16 %v304, %v301
  %v326 = vpack.c.b16 %v305, %v302
  %v327 = vpack.c.b16 %v306, %v306
  %v328 = vpack.c.b16 %v307, %v307
  %v329 = vpack.c.b16 %v308, %v308
  %v544 = vunpack.c.l.b16 %v44
  %v545 = vunpack.c.h.b16 %v44
  %v546 = vunpack.c.l.b16 %v45
  %v547 = vunpack.c.h.b16 %v45
  %v548 = vunpack.c.l.b16 %v46
  %v549 = vunpack.c.h.b16 %v46
  %v550 = vunpack.c.l.b16 %v47
  %v551 = vunpack.c.h.b16 %v47
  %v552 = vunpack.c.l.b16 %v48
  %v553 = vunpack.c.h.b16 %v48
  %v554 = vunpack.c.l.b16 %v49
  %v555 = vunpack.c.h.b16 %v49
  %v556 = vunpack.c.l.b16 %v50
  %v557 = vunpack.c.h.b16 %v50
  %v558 = vunpack.c.l.b16 %v51
  %v559 = vunpack.c.h.b16 %v51
  %v560 = vunpack.c.l.b16 %v52
  %v561 = vunpack.c.h.b16 %v52
  %v562 = vunpack.c.l.b16 %v53
  %v563 = vunpack.c.h.b16 %v53
  %v564 = vunpack.c.l.b16 %v54
  %v565 = vunpack.c.h.b16 %v54
  %v566 = vunpack.c.l.b16 %v55
  %v567 = vunpack.c.h.b16 %v55
  %v568 = vunpack.c.l.b16 %v56
  %v569 = vunpack.c.h.b16 %v56
  %v570 = vunpack.c.l.b16 %v57
  %v571 = vunpack.c.h.b16 %v57
  %v572 = vunpack.c.l.b16 %v58
  %v573 = vunpack.c.h.b16 %v58
  %v574 = vunpack.c.l.b16 %v59
  %v575 = vunpack.c.h.b16 %v59
  %v576 = vunpack.c.l.b16 %v60
  %v577 = vunpack.c.h.b16 %v60
  %v578 = vunpack.c.l.b16 %v61
  %v579 = vunpack.c.h.b16 %v61
  %v580 = vunpack.c.l.b16 %v62
  %v581 = vunpack.c.h.b16 %v62
  %v582 = vunpack.c.l.b16 %v63
  %v583 = vunpack.c.h.b16 %v63
  %v584 = vunpack.c.l.b16 %v64
  %v585 = vunpack.c.h.b16 %v64
  %v586 = vunpack.c.l.b16 %v65
  %v587 = vunpack.c.h.b16 %v65
  %v588 = vunpack.c.l.b16 %v66
  %v589 = vunpack.c.h.b16 %v66
  %v590 = vunpack.c.l.b16 %v67
  %v591 = vunpack.c.h.b16 %v67
  %v592 = vunpack.c.l.b16 %v68
  %v593 = vunpack.c.h.b16 %v68
  %v594 = vunpack.c.l.b16 %v69
  %v595 = vunpack.c.h.b16 %v69
  %v596 = vunpack.c.l.b16 %v70
  %v597 = vunpack.c.h.b16 %v70
  %v598 = vunpack.c.l.b16 %v71
  %v599 = vunpack.c.h.b16 %v71
  %v600 = vunpack.c.l.b16 %v72
  %v601 = vunpack.c.h.b16 %v72
  %v602 = vunpack.c.l.b16 %v73
  %v603 = vunpack.c.h.b16 %v73
  %v604 = vunpack.c.l.b16 %v74
  %v605 = vunpack.c.h.b16 %v74
  %v606 = vunpack.c.l.b16 %v75
  %v607 = vunpack.c.h.b16 %v75
  %v608 = vunpack.c.l.b16 %v76
  %v609 = vunpack.c.h.b16 %v76
  %v610 = vunpack.c.l.b16 %v77
  %v611 = vunpack.c.h.b16 %v77
  %v612 = vunpack.c.l.b16 %v78
  %v613 = vunpack.c.h.b16 %v78
  %v614 = vunpack.c.l.b16 %v79
  %v615 = vunpack.c.h.b16 %v79
  %v616 = vunpack.c.l.b16 %v80
  %v617 = vunpack.c.h.b16 %v80
  %v618 = vunpack.c.l.b16 %v81
  %v619 = vunpack.c.h.b16 %v81
  %v620 = vunpack.c.l.b16 %v82
  %v621 = vunpack.c.h.b16 %v82
  %v622 = vunpack.c.l.b16 %v83
  %v623 = vunpack.c.h.b16 %v83
  %v624 = vunpack.c.l.b16 %v84
  %v625 = vunpack.c.h.b16 %v84
  %v626 = vunpack.c.l.b16 %v85
  %v627 = vunpack.c.h.b16 %v85
  %v628 = vunpack.c.l.b16 %v86
  %v629 = vunpack.c.h.b16 %v86
  %v630 = vunpack.c.l.b16 %v87
  %v631 = vunpack.c.h.b16 %v87
  %v632 = vunpack.c.l.b16 %v88
  %v633 = vunpack.c.h.b16 %v88
  %v634 = vunpack.c.l.b16 %v89
  %v635 = vunpack.c.h.b16 %v89
  %v636 = vunpack.c.l.b16 %v90
  %v637 = vunpack.c.h.b16 %v90
  %v638 = vunpack.c.l.b16 %v91
  %v639 = vunpack.c.h.b16 %v91
  %v640 = vunpack.c.l.b16 %v92
  %v641 = vunpack.c.h.b16 %v92
  %v642 = vunpack.c.l.b16 %v93
  %v643 = vunpack.c.h.b16 %v93
  %v644 = vunpack.c.l.b16 %v94
  %v645 = vunpack.c.h.b16 %v94
  %v646 = vunpack.c.l.b16 %v95
  %v647 = vunpack.c.h.b16 %v95
  %v648 = vunpack.c.l.b16 %v96
  %v649 = vunpack.c.h.b16 %v96
  %v650 = vunpack.c.l.b16 %v97
  %v651 = vunpack.c.h.b16 %v97
  %v652 = vunpack.c.l.b16 %v98
  %v653 = vunpack.c.h.b16 %v98
  %v654 = vunpack.c.l.b16 %v99
  %v655 = vunpack.c.h.b16 %v99
  %v656 = vunpack.c.l.b16 %v100
  %v657 = vunpack.c.h.b16 %v100
  %v658 = vunpack.c.l.b16 %v101
  %v659 = vunpack.c.h.b16 %v101
  %v660 = vunpack.c.l.b16 %v102
  %v661 = vunpack.c.h.b16 %v102
  %v662 = vunpack.c.l.b16 %v103
  %v663 = vunpack.c.h.b16 %v103
  %v664 = vunpack.c.l.b16 %v104
  %v665 = vunpack.c.h.b16 %v104
  %v666 = vunpack.c.l.b16 %v105
  %v667 = vunpack.c.h.b16 %v105
  %v668 = vunpack.c.l.b16 %v106
  %v669 = vunpack.c.h.b16 %v106
  %v670 = vunpack.c.l.b16 %v107
  %v671 = vunpack.c.h.b16 %v107
  %v672 = vunpack.c.l.b16 %v108
  %v673 = vunpack.c.h.b16 %v108
  %v674 = vunpack.c.l.b16 %v109
  %v675 = vunpack.c.h.b16 %v109
  %v676 = vunpack.c.l.b16 %v110
  %v677 = vunpack.c.h.b16 %v110
  %v678 = vunpack.c.l.b16 %v111
  %v679 = vunpack.c.h.b16 %v111
  %v680 = vunpack.c.l.b16 %v112
  %v681 = vunpack.c.h.b16 %v112
  %v682 = vunpack.c.l.b16 %v113
  %v683 = vunpack.c.h.b16 %v113
  %v684 = vunpack.c.l.b16 %v114
  %v685 = vunpack.c.h.b16 %v114
  %v686 = vunpack.c.l.b16 %v115
  %v687 = vunpack.c.h.b16 %v115
  %v688 = vunpack.c.l.b16 %v116
  %v689 = vunpack.c.h.b16 %v116
  %v690 = vunpack.c.l.b16 %v117
  %v691 = vunpack.c.h.b16 %v117
  %v692 = vunpack.c.l.b16 %v118
  %v693 = vunpack.c.h.b16 %v118
  %v694 = vunpack.c.l.b16 %v119
  %v695 = vunpack.c.h.b16 %v119
  %v696 = vunpack.c.l.b16 %v120
  %v697 = vunpack.c.h.b16 %v120
  %v698 = vunpack.c.l.b16 %v121
  %v699 = vunpack.c.h.b16 %v121
  %v700 = vunpack.c.l.b16 %v122
  %v701 = vunpack.c.h.b16 %v122
  %v702 = vunpack.c.l.b16 %v123
  %v703 = vunpack.c.h.b16 %v123
  %v704 = vunpack.c.l.b16 %v124
  %v705 = vunpack.c.h.b16 %v124
  %v706 = vunpack.c.l.b16 %v125
  %v707 = vunpack.c.h.b16 %v125
  %v708 = vunpack.c.l.b16 %v126
  %v709 = vunpack.c.h.b16 %v126
  %v710 = vunpack.c.l.b16 %v127
  %v711 = vunpack.c.h.b16 %v127
  %v712 = vunpack.c.l.b16 %v128
  %v713 = vunpack.c.h.b16 %v128
  %v714 = vunpack.c.l.b16 %v129
  %v715 = vunpack.c.h.b16 %v129
  %v716 = vunpack.c.l.b16 %v130
  %v717 = vunpack.c.h.b16 %v130
  %v718 = vunpack.c.l.b16 %v131
  %v719 = vunpack.c.h.b16 %v131
  %v720 = vunpack.c.l.b16 %v132
  %v721 = vunpack.c.h.b16 %v132
  %v722 = vunpack.c.l.b16 %v133
  %v723 = vunpack.c.h.b16 %v133
  %v724 = vunpack.c.l.b16 %v134
  %v725 = vunpack.c.h.b16 %v134
  %v726 = vunpack.c.l.b16 %v135
  %v727 = vunpack.c.h.b16 %v135
  %v728 = vunpack.c.l.b16 %v136
  %v729 = vunpack.c.h.b16 %v136
  %v730 = vunpack.c.l.b16 %v137
  %v731 = vunpack.c.h.b16 %v137
  %v732 = vunpack.c.l.b16 %v138
  %v733 = vunpack.c.h.b16 %v138
  %v734 = vunpack.c.l.b16 %v139
  %v735 = vunpack.c.h.b16 %v139
  %v736 = vunpack.c.l.b16 %v140
  %v737 = vunpack.c.h.b16 %v140
  %v738 = vunpack.c.l.b16 %v141
  %v739 = vunpack.c.h.b16 %v141
  %v740 = vunpack.c.l.b16 %v142
  %v741 = vunpack.c.h.b16 %v142
  %v742 = vunpack.c.l.b16 %v143
  %v743 = vunpack.c.h.b16 %v143
  %v744 = vunpack.c.l.b16 %v144
  %v745 = vunpack.c.h.b16 %v144
  %v746 = vunpack.c.l.b16 %v145
  %v747 = vunpack.c.h.b16 %v145
  %v748 = vunpack.c.l.b16 %v146
  %v749 = vunpack.c.h.b16 %v146
  %v750 = vunpack.c.l.b16 %v147
  %v751 = vunpack.c.h.b16 %v147
  %v752 = vunpack.c.l.b16 %v148
  %v753 = vunpack.c.h.b16 %v148
  %v754 = vunpack.c.l.b16 %v149
  %v755 = vunpack.c.h.b16 %v149
  %v756 = vunpack.c.l.b16 %v150
  %v757 = vunpack.c.h.b16 %v150
  %v758 = vunpack.c.l.b16 %v151
  %v759 = vunpack.c.h.b16 %v151
  %v760 = vunpack.c.l.b16 %v152
  %v761 = vunpack.c.h.b16 %v152
  %v762 = vunpack.c.l.b16 %v153
  %v763 = vunpack.c.h.b16 %v153
  %v764 = vunpack.c.l.b16 %v154
  %v765 = vunpack.c.h.b16 %v154
  %v766 = vunpack.c.l.b16 %v155
  %v767 = vunpack.c.h.b16 %v155
  %v768 = vunpack.c.l.b16 %v156
  %v769 = vunpack.c.h.b16 %v156
  %v770 = vunpack.c.l.b16 %v157
  %v771 = vunpack.c.h.b16 %v157
  %v772 = vunpack.c.l.b16 %v158
  %v773 = vunpack.c.h.b16 %v158
  %v774 = vunpack.c.l.b16 %v159
  %v775 = vunpack.c.h.b16 %v159
  %v776 = vunpack.c.l.b16 %v160
  %v777 = vunpack.c.h.b16 %v160
  %v778 = vunpack.c.l.b16 %v161
  %v779 = vunpack.c.h.b16 %v161
  %v780 = vunpack.c.l.b16 %v162
  %v781 = vunpack.c.h.b16 %v162
  %v782 = vunpack.c.l.b16 %v163
  %v783 = vunpack.c.h.b16 %v163
  %v784 = vunpack.c.l.b16 %v164
  %v785 = vunpack.c.h.b16 %v164
  %v786 = vunpack.c.l.b16 %v165
  %v787 = vunpack.c.h.b16 %v165
  %v788 = vunpack.c.l.b16 %v166
  %v789 = vunpack.c.h.b16 %v166
  %v790 = vunpack.c.l.b16 %v167
  %v791 = vunpack.c.h.b16 %v167
  %v792 = vunpack.c.l.b16 %v168
  %v793 = vunpack.c.h.b16 %v168
  %v794 = vunpack.c.l.b16 %v169
  %v795 = vunpack.c.h.b16 %v169
  %v796 = vunpack.c.l.b16 %v170
  %v797 = vunpack.c.h.b16 %v170
  %v798 = vunpack.c.l.b16 %v171
  %v799 = vunpack.c.h.b16 %v171
  %v800 = vunpack.c.l.b16 %v172
  %v801 = vunpack.c.h.b16 %v172
  %v802 = vunpack.c.l.b16 %v173
  %v803 = vunpack.c.h.b16 %v173
  %v804 = vunpack.c.l.b16 %v174
  %v805 = vunpack.c.h.b16 %v174
  %v806 = vunpack.c.l.b16 %v175
  %v807 = vunpack.c.h.b16 %v175
  %v808 = vunpack.c.l.b16 %v176
  %v809 = vunpack.c.h.b16 %v176
  %v810 = vunpack.c.l.b16 %v177
  %v811 = vunpack.c.h.b16 %v177
  %v812 = vunpack.c.l.b16 %v178
  %v813 = vunpack.c.h.b16 %v178
  %v814 = vunpack.c.l.b16 %v179
  %v815 = vunpack.c.h.b16 %v179
  %v816 = vunpack.c.l.b16 %v180
  %v817 = vunpack.c.h.b16 %v180
  %v818 = vunpack.c.l.b16 %v181
  %v819 = vunpack.c.h.b16 %v181
  %v820 = vunpack.c.l.b16 %v182
  %v821 = vunpack.c.h.b16 %v182
  %v822 = vunpack.c.l.b16 %v183
  %v823 = vunpack.c.h.b16 %v183
  %v824 = vunpack.c.l.b16 %v184
  %v825 = vunpack.c.h.b16 %v184
  %v826 = vunpack.c.l.b16 %v185
  %v827 = vunpack.c.h.b16 %v185
  %v828 = vunpack.c.l.b16 %v186
  %v829 = vunpack.c.h.b16 %v186
  %v830 = vunpack.c.l.b16 %v187
  %v831 = vunpack.c.h.b16 %v187
  %v832 = vunpack.c.l.b16 %v188
  %v833 = vunpack.c.h.b16 %v188
  %v834 = vunpack.c.l.b16 %v189
  %v835 = vunpack.c.h.b16 %v189
  %v836 = vunpack.c.l.b16 %v190
  %v837 = vunpack.c.h.b16 %v190
  %v838 = vunpack.c.l.b16 %v191
  %v839 = vunpack.c.h.b16 %v191
  %v840 = vunpack.c.l.b16 %v192
  %v841 = vunpack.c.h.b16 %v192
  %v842 = vunpack.c.l.b16 %v193
  %v843 = vunpack.c.h.b16 %v193
  %v844 = vunpack.c.l.b16 %v194
  %v845 = vunpack.c.h.b16 %v194
  %v846 = vunpack.c.l.b16 %v195
  %v847 = vunpack.c.h.b16 %v195
  %v848 = vunpack.c.l.b16 %v196
  %v849 = vunpack.c.h.b16 %v196
  %v850 = vunpack.c.l.b16 %v197
  %v851 = vunpack.c.h.b16 %v197
  %v852 = vunpack.c.l.b16 %v198
  %v853 = vunpack.c.h.b16 %v198
  %v854 = vunpack.c.l.b16 %v199
  %v855 = vunpack.c.h.b16 %v199
  %v856 = vunpack.c.l.b16 %v200
  %v857 = vunpack.c.h.b16 %v200
  %v858 = vunpack.c.l.b16 %v201
  %v859 = vunpack.c.h.b16 %v201
  %v860 = vunpack.c.l.b16 %v202
  %v861 = vunpack.c.h.b16 %v202
  %v862 = vunpack.c.l.b16 %v203
  %v863 = vunpack.c.h.b16 %v203
  %v864 = vunpack.c.l.b16 %v204
  %v865 = vunpack.c.h.b16 %v204
  %v866 = vunpack.c.l.b16 %v205
  %v867 = vunpack.c.h.b16 %v205
  %v868 = vunpack.c.l.b16 %v206
  %v869 = vunpack.c.h.b16 %v206
  %v870 = vunpack.c.l.b16 %v207
  %v871 = vunpack.c.h.b16 %v207
  %v872 = vunpack.c.l.b16 %v208
  %v873 = vunpack.c.h.b16 %v208
  %v874 = vunpack.c.l.b16 %v209
  %v875 = vunpack.c.h.b16 %v209
  %v876 = vunpack.c.l.b16 %v210
  %v877 = vunpack.c.h.b16 %v210
  %v878 = vunpack.c.l.b16 %v211
  %v879 = vunpack.c.h.b16 %v211
  %v880 = vunpack.c.l.b16 %v212
  %v881 = vunpack.c.h.b16 %v212
  %v882 = vunpack.c.l.b16 %v213
  %v883 = vunpack.c.h.b16 %v213
  %v884 = vunpack.c.l.b16 %v214
  %v885 = vunpack.c.h.b16 %v214
  %v886 = vunpack.c.l.b16 %v215
  %v887 = vunpack.c.h.b16 %v215
  %v888 = vunpack.c.l.b16 %v216
  %v889 = vunpack.c.h.b16 %v216
  %v890 = vunpack.c.l.b16 %v217
  %v891 = vunpack.c.h.b16 %v217
  %v892 = vunpack.c.l.b16 %v218
  %v893 = vunpack.c.h.b16 %v218
  %v894 = vunpack.c.l.b16 %v219
  %v895 = vunpack.c.h.b16 %v219
  %v896 = vunpack.c.l.b16 %v220
  %v897 = vunpack.c.h.b16 %v220
  %v898 = vunpack.c.l.b16 %v221
  %v899 = vunpack.c.h.b16 %v221
  %v900 = vunpack.c.l.b16 %v222
  %v901 = vunpack.c.h.b16 %v222
  %v902 = vunpack.c.l.b16 %v223
  %v903 = vunpack.c.h.b16 %v223
  %v904 = vunpack.c.l.b16 %v224
  %v905 = vunpack.c.h.b16 %v224
  %v906 = vunpack.c.l.b16 %v225
  %v907 = vunpack.c.h.b16 %v225
  %v908 = vunpack.c.l.b16 %v226
  %v909 = vunpack.c.h.b16 %v226
  %v910 = vunpack.c.l.b16 %v227
  %v911 = vunpack.c.h.b16 %v227
  %v912 = vunpack.c.l.b16 %v228
  %v913 = vunpack.c.h.b16 %v228
  %v914 = vunpack.c.l.b16 %v229
  %v915 = vunpack.c.h.b16 %v229
  %v916 = vunpack.c.l.b16 %v230
  %v917 = vunpack.c.h.b16 %v230
  %v918 = vunpack.c.l.b16 %v231
  %v919 = vunpack.c.h.b16 %v231
  %v920 = vunpack.c.l.b16 %v232
  %v921 = vunpack.c.h.b16 %v232
  %v922 = vunpack.c.l.b16 %v233
  %v923 = vunpack.c.h.b16 %v233
  %v924 = vunpack.c.l.b16 %v234
  %v925 = vunpack.c.h.b16 %v234
  %v926 = vunpack.c.l.b16 %v235
  %v927 = vunpack.c.h.b16 %v235
  %v928 = vunpack.c.l.b16 %v236
  %v929 = vunpack.c.h.b16 %v236
  %v930 = vunpack.c.l.b16 %v237
  %v931 = vunpack.c.h.b16 %v237
  %v932 = vunpack.c.l.b16 %v238
  %v933 = vunpack.c.h.b16 %v238
  %v934 = vunpack.c.l.b16 %v239
  %v935 = vunpack.c.h.b16 %v239
  %v936 = vunpack.c.l.b16 %v240
  %v937 = vunpack.c.h.b16 %v240
  %v938 = vunpack.c.l.b16 %v241
  %v939 = vunpack.c.h.b16 %v241
  %v940 = vunpack.c.l.b16 %v242
  %v941 = vunpack.c.h.b16 %v242
  %v942 = vunpack.c.l.b16 %v243
  %v943 = vunpack.c.h.b16 %v243
  %v944 = vpack.c.b16 %v554, %v544
  %v945 = vpack.c.b16 %v555, %v545
  %v946 = vpack.c.b16 %v556, %v546
  %v947 = vpack.c.b16 %v557, %v547
  %v948 = vpack.c.b16 %v558, %v548
  %v949 = vpack.c.b16 %v559, %v549
  %v950 = vpack.c.b16 %v560, %v550
  %v951 = vpack.c.b16 %v561, %v551
  %v952 = vpack.c.b16 %v562, %v552
  %v953 = vpack.c.b16 %v563, %v553
  %v954 = vpack.c.b16 %v574, %v564
  %v955 = vpack.c.b16 %v575, %v565
  %v956 = vpack.c.b16 %v576, %v566
  %v957 = vpack.c.b16 %v577, %v567
  %v958 = vpack.c.b16 %v578, %v568
  %v959 = vpack.c.b16 %v579, %v569
  %v960 = vpack.c.b16 %v580, %v570
  %v961 = vpack.c.b16 %v581, %v571
  %v962 = vpack.c.b16 %v582, %v572
  %v963 = vpack.c.b16 %v583, %v573
  %v964 = vpack.c.b16 %v594, %v584
  %v965 = vpack.c.b16 %v595, %v585
  %v966 = vpack.c.b16 %v596, %v586
  %v967 = vpack.c.b16 %v597, %v587
  %v968 = vpack.c.b16 %v598, %v588
  %v969 = vpack.c.b16 %v599, %v589
  %v970 = vpack.c.b16 %v600, %v590
  %v971 = vpack.c.b16 %v601, %v591
  %v972 = vpack.c.b16 %v602, %v592
  %v973 = vpack.c.b16 %v603, %v593
  %v974 = vpack.c.b16 %v614, %v604
  %v975 = vpack.c.b16 %v615, %v605
  %v976 = vpack.c.b16 %v616, %v606
  %v977 = vpack.c.b16 %v617, %v607
  %v978 = vpack.c.b16 %v618, %v608
  %v979 = vpack.c.b16 %v619, %v609
  %v980 = vpack.c.b16 %v620, %v610
  %v981 = vpack.c.b16 %v621, %v611
  %v982 = vpack.c.b16 %v622, %v612
  %v983 = vpack.c.b16 %v623, %v613
  %v984 = vpack.c.b16 %v634, %v624
  %v985 = vpack.c.b16 %v635, %v625
  %v986 = vpack.c.b16 %v636, %v626
  %v987 = vpack.c.b16 %v637, %v627
  %v988 = vpack.c.b16 %v638, %v628
  %v989 = vpack.c.b16 %v639, %v629
  %v990 = vpack.c.b16 %v640, %v630
  %v991 = vpack.c.b16 %v641, %v631
  %v992 = vpack.c.b16 %v642, %v632
  %v993 = vpack.c.b16 %v643, %v633
  %v994 = vpack.c.b16 %v654, %v644
  %v995 = vpack.c.b16 %v655, %v645
  %v996 = vpack.c.b16 %v656, %v646
  %v997 = vpack.c.b16 %v657, %v647
  %v998 = vpack.c.b16 %v658, %v648
  %v999 = vpack.c.b16 %v659, %v649
  %v1000 = vpack.c.b16 %v660, %v650
  %v1001 = vpack.c.b16 %v661, %v651
  %v1002 = vpack.c.b16 %v662, %v652
  %v1003 = vpack.c.b16 %v663, %v653
  %v1004 = vpack.c.b16 %v674, %v664
  %v1005 = vpack.c.b16 %v675, %v665
  %v1006 = vpack.c.b16 %v676, %v666
  %v1007 = vpack.c.b16 %v677, %v667
  %v1008 = vpack.c.b16 %v678, %v668
  %v1009 = vpack.c.b16 %v679, %v669
  %v1010 = vpack.c.b16 %v680, %v670
  %v1011 = vpack.c.b16 %v681, %v671
  %v1012 = vpack.c.b16 %v682, %v672
  %v1013 = vpack.c.b16 %v683, %v673
  %v1014 = vpack.c.b16 %v694, %v684
  %v1015 = vpack.c.b16 %v695, %v685
  %v1016 = vpack.c.b16 %v696, %v686
  %v1017 = vpack.c.b16 %v697, %v687
  %v1018 = vpack.c.b16 %v698, %v688
  %v1019 = vpack.c.b16 %v699, %v689
  %v1020 = vpack.c.b16 %v700, %v690
  %v1021 = vpack.c.b16 %v701, %v691
  %v1022 = vpack.c.b16 %v702, %v692
  %v1023 = vpack.c.b16 %v703, %v693
  %v1024 = vpack.c.b16 %v714, %v704
  %v1025 = vpack.c.b16 %v715, %v705
  %v1026 = vpack.c.b16 %v716, %v706
  %v1027 = vpack.c.b16 %v717, %v707
  %v1028 = vpack.c.b16 %v718, %v708
  %v1029 = vpack.c.b16 %v719, %v709
  %v1030 = vpack.c.b16 %v720, %v710
  %v1031 = vpack.c.b16 %v721, %v711
  %v1032 = vpack.c.b16 %v722, %v712
  %v1033 = vpack.c.b16 %v723, %v713
  %v1034 = vpack.c.b16 %v734, %v724
  %v1035 = vpack.c.b16 %v735, %v725
  %v1036 = vpack.c.b16 %v736, %v726
  %v1037 = vpack.c.b16 %v737, %v727
  %v1038 = vpack.c.b16 %v738, %v728
  %v1039 = vpack.c.b16 %v739, %v729
  %v1040 = vpack.c.b16 %v740, %v730
  %v1041 = vpack.c.b16 %v741, %v731
  %v1042 = vpack.c.b16 %v742, %v732
  %v1043 = vpack.c.b16 %v743, %v733
  %v1044 = vpack.c.b16 %v754, %v744
  %v1045 = vpack.c.b16 %v755, %v745
  %v1046 = vpack.c.b16 %v756, %v746
  %v1047 = vpack.c.b16 %v757, %v747
  %v1048 = vpack.c.b16 %v758, %v748
  %v1049 = vpack.c.b16 %v759, %v749
  %v1050 = vpack.c.b16 %v760, %v750
  %v1051 = vpack.c.b16 %v761, %v751
  %v1052 = vpack.c.b16 %v762, %v752
  %v1053 = vpack.c.b16 %v763, %v753
  %v1054 = vpack.c.b16 %v774, %v764
  %v1055 = vpack.c.b16 %v775, %v765
  %v1056 = vpack.c.b16 %v776, %v766
  %v1057 = vpack.c.b16 %v777, %v767
  %v1058 = vpack.c.b16 %v778, %v768
  %v1059 = vpack.c.b16 %v779, %v769
  %v1060 = vpack.c.b16 %v780, %v770
  %v1061 = vpack.c.b16 %v781, %v771
  %v1062 = vpack.c.b16 %v782, %v772
  %v1063 = vpack.c.b16 %v783, %v773
  %v1064 = vpack.c.b16 %v794, %v784
  %v1065 = vpack.c.b16 %v795, %v785
  %v1066 = vpack.c.b16 %v796, %v786
  %v1067 = vpack.c.b16 %v797, %v787
  %v1068 = vpack.c.b16 %v798, %v788
  %v1069 = vpack.c.b16 %v799, %v789
  %v1070 = vpack.c.b16 %v800, %v790
  %v1071 = vpack.c.b16 %v801, %v791
  %v1072 = vpack.c.b16 %v802, %v792
  %v1073 = vpack.c.b16 %v803, %v793
  %v1074 = vpack.c.b16 %v814, %v804
  %v1075 = vpack.c.b16 %v815, %v805
  %v1076 = vpack.c.b16 %v816, %v806
  %v1077 = vpack.c.b16 %v817, %v807
  %v1078 = vpack.c.b16 %v818, %v808
  %v1079 = vpack.c.b16 %v819, %v809
  %v1080 = vpack.c.b16 %v820, %v810
  %v1081 = vpack.c.b16 %v821, %v811
  %v1082 = vpack.c.b16 %v822, %v812
  %v1083 = vpack.c.b16 %v823, %v813
  %v1084 = vpack.c.b16 %v834, %v824
  %v1085 = vpack.c.b16 %v835, %v825
  %v1086 = vpack.c.b16 %v836, %v826
  %v1087 = vpack.c.b16 %v837, %v827
  %v1088 = vpack.c.b16 %v838, %v828
  %v1089 = vpack.c.b16 %v839, %v829
  %v1090 = vpack.c.b16 %v840, %v830
  %v1091 = vpack.c.b16 %v841, %v831
  %v1092 = vpack.c.b16 %v842, %v832
  %v1093 = vpack.c.b16 %v843, %v833
  %v1094 = vpack.c.b16 %v854, %v844
  %v1095 = vpack.c.b16 %v855, %v845
  %v1096 = vpack.c.b16 %v856, %v846
  %v1097 = vpack.c.b16 %v857, %v847
  %v1098 = vpack.c.b16 %v858, %v848
  %v1099 = vpack.c.b16 %v859, %v849
  %v1100 = vpack.c.b16 %v860, %v850
  %v1101 = vpack.c.b16 %v861, %v851
  %v1102 = vpack.c.b16 %v862, %v852
  %v1103 = vpack.c.b16 %v863, %v853
  %v1104 = vpack.c.b16 %v874, %v864
  %v1105 = vpack.c.b16 %v875, %v865
  %v1106 = vpack.c.b16 %v876, %v866
  %v1107 = vpack.c.b16 %v877, %v867
  %v1108 = vpack.c.b16 %v878, %v868
  %v1109 = vpack.c.b16 %v879, %v869
  %v1110 = vpack.c.b16 %v880, %v870
  %v1111 = vpack.c.b16 %v881, %v871
  %v1112 = vpack.c.b16 %v882, %v872
  %v1113 = vpack.c.b16 %v883, %v873
  %v1114 = vpack.c.b16 %v894, %v884
  %v1115 = vpack.c.b16 %v895, %v885
  %v1116 = vpack.c.b16 %v896, %v886
  %v1117 = vpack.c.b16 %v897, %v887
  %v1118 = vpack.c.b16 %v898, %v888
  %v1119 = vpack.c.b16 %v899, %v889
  %v1120 = vpack.c.b16 %v900, %v890
  %v1121 = vpack.c.b16 %v901, %v891
  %v1122 = vpack.c.b16 %v902, %v892
  %v1123 = vpack.c.b16 %v903, %v893
  %v1124 = vpack.c.b16 %v914, %v904
  %v1125 = vpack.c.b16 %v915, %v905
  %v1126 = vpack.c.b16 %v916, %v906
  %v1127 = vpack.c.b16 %v917, %v907
  %v1128 = vpack.c.b16 %v918, %v908
  %v1129 = vpack.c.b16 %v919, %v909
  %v1130 = vpack.c.b16 %v920, %v910
  %v1131 = vpack.c.b16 %v921, %v911
  %v1132 = vpack.c.b16 %v922, %v912
  %v1133 = vpack.c.b16 %v923, %v913
  %v1134 = vpack.c.b16 %v934, %v924
  %v1135 = vpack.c.b16 %v935, %v925
  %v1136 = vpack.c.b16 %v936, %v926
  %v1137 = vpack.c.b16 %v937, %v927
  %v1138 = vpack.c.b16 %v938, %v928
  %v1139 = vpack.c.b16 %v939, %v929
  %v1140 = vpack.c.b16 %v940, %v930
  %v1141 = vpack.c.b16 %v941, %v931
  %v1142 = vpack.c.b16 %v942, %v932
  %v1143 = vpack.c.b16 %v943, %v933
  %vm1344 = vcmask 523264
  %v1346 = vsel %vm1344, %v311, 0
  %v1349 = vsel %vm1344, %v314, 0
  %v1352 = vsel %vm1344, %v317, 0
  %v1355 = vsel %vm1344, %v320, 0
  %v1358 = vsel %vm1344, %v323, 0
  %v1361 = vsel %vm1344, %v326, 0
  %v1364 = vsel %vm1344, %v329, 0
  %1366 = vmatprep.subr.bf16.mxu0 %v945
  %1367 = vmatpush1.bf16.msra.mxu0 %v944
  %1368 = vmatprep.subr.bf16.mxu0 %v955
  %1369 = vmatpush1.bf16.msra.mxu0 %v954
  %1370 = vmatprep.subr.bf16.mxu0 %v965
  %1371 = vmatpush1.bf16.msra.mxu0 %v964
  %1372 = vmatprep.subr.bf16.mxu0 %v975
  %1373 = vmatpush1.bf16.msra.mxu0 %v974
  %1374 = vmatprep.subr.bf16.mxu0 %v985
  %1375 = vmatpush1.bf16.msra.mxu0 %v984
  %1376 = vmatprep.subr.bf16.mxu0 %v995
  %1377 = vmatpush1.bf16.msra.mxu0 %v994
  %1378 = vmatprep.subr.bf16.mxu0 %v1005
  %1379 = vmatpush1.bf16.msra.mxu0 %v1004
  %1380 = vmatprep.subr.bf16.mxu0 %v1015
  %1381 = vmatpush1.bf16.msra.mxu0 %v1014
  %1382 = vmatprep.subr.bf16.mxu0 %v1025
  %1383 = vmatpush1.bf16.msra.mxu0 %v1024
  %1384 = vmatprep.subr.bf16.mxu0 %v1035
  %1385 = vmatpush1.bf16.msra.mxu0 %v1034
  %1386 = vmatprep.subr.bf16.mxu0 %v1045
  %1387 = vmatpush1.bf16.msra.mxu0 %v1044
  %1388 = vmatprep.subr.bf16.mxu0 %v1055
  %1389 = vmatpush1.bf16.msra.mxu0 %v1054
  %1390 = vmatprep.subr.bf16.mxu0 %v1065
  %1391 = vmatpush1.bf16.msra.mxu0 %v1064
  %1392 = vmatprep.subr.bf16.mxu0 %v1075
  %1393 = vmatpush1.bf16.msra.mxu0 %v1074
  %1394 = vmatprep.subr.bf16.mxu0 %v1085
  %1395 = vmatpush1.bf16.msra.mxu0 %v1084
  %1396 = vmatprep.subr.bf16.mxu0 %v1095
  %1397 = vmatpush1.bf16.msra.mxu0 %v1094
  %1398 = vmatprep.mubr.bf16.mxu0 %v310
  %1399 = vmatmul.mubr.bf16.gmra.mrb[0].mxu0 %v309
  %v1400 = vpop.f32.mrb[0].mxu0
  %v1401 = vadd.f32 0.0, %v1400
  %v1402 = vpop.f32.mrb[0].mxu0
  %v1403 = vadd.f32 0.0, %v1402
  %v1404 = vpop.f32.mrb[0].mxu0
  %v1405 = vadd.f32 0.0, %v1404
  %v1406 = vpop.f32.mrb[0].mxu0
  %v1407 = vadd.f32 0.0, %v1406
  %1408 = vmatprep.mubr.bf16.mxu0 %v313
  %1409 = vmatmul.mubr.bf16.gmra.mrb[0].mxu0 %v312
  %v1410 = vpop.f32.mrb[0].mxu0
  %v1411 = vadd.f32 0.0, %v1410
  %v1412 = vpop.f32.mrb[0].mxu0
  %v1413 = vadd.f32 0.0, %v1412
  %v1414 = vpop.f32.mrb[0].mxu0
  %v1415 = vadd.f32 0.0, %v1414
  %v1416 = vpop.f32.mrb[0].mxu0
  %v1417 = vadd.f32 0.0, %v1416
  %1418 = vmatprep.mubr.bf16.mxu0 %v316
  %1419 = vmatmul.mubr.bf16.gmra.mrb[0].mxu0 %v315
  %v1420 = vpop.f32.mrb[0].mxu0
  %v1421 = vadd.f32 0.0, %v1420
  %v1422 = vpop.f32.mrb[0].mxu0
  %v1423 = vadd.f32 0.0, %v1422
  %v1424 = vpop.f32.mrb[0].mxu0
  %v1425 = vadd.f32 0.0, %v1424
  %v1426 = vpop.f32.mrb[0].mxu0
  %v1427 = vadd.f32 0.0, %v1426
  %1428 = vmatprep.mubr.bf16.mxu0 %v319
  %1429 = vmatmul.mubr.bf16.gmra.mrb[0].mxu0 %v318
  %v1430 = vpop.f32.mrb[0].mxu0
  %v1431 = vadd.f32 0.0, %v1430
  %v1432 = vpop.f32.mrb[0].mxu0
  %v1433 = vadd.f32 0.0, %v1432
  %v1434 = vpop.f32.mrb[0].mxu0
  %v1435 = vadd.f32 0.0, %v1434
  %v1436 = vpop.f32.mrb[0].mxu0
  %v1437 = vadd.f32 0.0, %v1436
  %1438 = vmatprep.mubr.bf16.mxu0 %v322
  %1439 = vmatmul.mubr.bf16.gmra.mrb[0].mxu0 %v321
  %v1440 = vpop.f32.mrb[0].mxu0
  %v1441 = vadd.f32 0.0, %v1440
  %v1442 = vpop.f32.mrb[0].mxu0
  %v1443 = vadd.f32 0.0, %v1442
  %v1444 = vpop.f32.mrb[0].mxu0
  %v1445 = vadd.f32 0.0, %v1444
  %v1446 = vpop.f32.mrb[0].mxu0
  %v1447 = vadd.f32 0.0, %v1446
  %1448 = vmatprep.mubr.bf16.mxu0 %v325
  %1449 = vmatmul.mubr.bf16.gmra.mrb[0].mxu0 %v324
  %v1450 = vpop.f32.mrb[0].mxu0
  %v1451 = vadd.f32 0.0, %v1450
  %v1452 = vpop.f32.mrb[0].mxu0
  %v1453 = vadd.f32 0.0, %v1452
  %v1454 = vpop.f32.mrb[0].mxu0
  %v1455 = vadd.f32 0.0, %v1454
  %v1456 = vpop.f32.mrb[0].mxu0
  %v1457 = vadd.f32 0.0, %v1456
  %1458 = vmatprep.mubr.bf16.mxu0 %v328
  %1459 = vmatmul.mubr.bf16.gmra.mrb[0].mxu0 %v327
  %v1460 = vpop.f32.mrb[0].mxu0
  %v1461 = vadd.f32 0.0, %v1460
  %v1462 = vpop.f32.mrb[0].mxu0
  %v1463 = vadd.f32 0.0, %v1462
  %v1464 = vpop.f32.mrb[0].mxu0
  %v1465 = vpop.f32.mrb[0].mxu0
  %1466 = vdwg.mxu0
  %1467 = vmatprep.subr.bf16.mxu0 %v1105
  %1468 = vmatpush1.bf16.msra.mxu0 %v1104
  %1469 = vmatprep.subr.bf16.mxu0 %v1115
  %1470 = vmatpush1.bf16.msra.mxu0 %v1114
  %1471 = vmatprep.subr.bf16.mxu0 %v1125
  %1472 = vmatpush1.bf16.msra.mxu0 %v1124
  %1473 = vmatprep.subr.bf16.mxu0 %v1135
  %1474 = vmatpush1.bf16.msra.mxu0 %v1134
  %1475 = vmatprep.subr.bf16.mxu0 0
  %1476 = vmatpush1.bf16.msra.mxu0 0
  %1477 = vmatprep.subr.bf16.mxu0 0
  %1478 = vmatpush1.bf16.msra.mxu0 0
  %1479 = vmatprep.subr.bf16.mxu0 0
  %1480 = vmatpush1.bf16.msra.mxu0 0
  %1481 = vmatprep.subr.bf16.mxu0 0
  %1482 = vmatpush1.bf16.msra.mxu0 0
  %1483 = vmatprep.subr.bf16.mxu0 0
  %1484 = vmatpush1.bf16.msra.mxu0 0
  %1485 = vmatprep.subr.bf16.mxu0 0
  %1486 = vmatpush1.bf16.msra.mxu0 0
  %1487 = vmatprep.subr.bf16.mxu0 0
  %1488 = vmatpush1.bf16.msra.mxu0 0
  %1489 = vmatprep.subr.bf16.mxu0 0
  %1490 = vmatpush1.bf16.msra.mxu0 0
  %1491 = vmatprep.subr.bf16.mxu0 0
  %1492 = vmatpush1.bf16.msra.mxu0 0
  %1493 = vmatprep.subr.bf16.mxu0 0
  %1494 = vmatpush1.bf16.msra.mxu0 0
  %1495 = vmatprep.subr.bf16.mxu0 0
  %1496 = vmatpush1.bf16.msra.mxu0 0
  %1497 = vmatprep.subr.bf16.mxu0 0
  %1498 = vmatpush1.bf16.msra.mxu0 0
  %1499 = vmatprep.mubr.bf16.mxu0 0
  %1500 = vmatmul.mubr.bf16.gmra.mrb[0].mxu0 %v1346
  %v1501 = vpop.f32.mrb[0].mxu0
  %v1502 = vadd.f32 %v1401, %v1501
  %v1503 = vpop.f32.mrb[0].mxu0
  %v1504 = vadd.f32 %v1403, %v1503
  %v1505 = vpop.f32.mrb[0].mxu0
  %v1506 = vadd.f32 %v1405, %v1505
  %v1507 = vpop.f32.mrb[0].mxu0
  %v1508 = vadd.f32 %v1407, %v1507
  %1509 = vmatprep.mubr.bf16.mxu0 0
  %1510 = vmatmul.mubr.bf16.gmra.mrb[0].mxu0 %v1349
  %v1511 = vpop.f32.mrb[0].mxu0
  %v1512 = vadd.f32 %v1411, %v1511
  %v1513 = vpop.f32.mrb[0].mxu0
  %v1514 = vadd.f32 %v1413, %v1513
  %v1515 = vpop.f32.mrb[0].mxu0
  %v1516 = vadd.f32 %v1415, %v1515
  %v1517 = vpop.f32.mrb[0].mxu0
  %v1518 = vadd.f32 %v1417, %v1517
  %1519 = vmatprep.mubr.bf16.mxu0 0
  %1520 = vmatmul.mubr.bf16.gmra.mrb[0].mxu0 %v1352
  %v1521 = vpop.f32.mrb[0].mxu0
  %v1522 = vadd.f32 %v1421, %v1521
  %v1523 = vpop.f32.mrb[0].mxu0
  %v1524 = vadd.f32 %v1423, %v1523
  %v1525 = vpop.f32.mrb[0].mxu0
  %v1526 = vadd.f32 %v1425, %v1525
  %v1527 = vpop.f32.mrb[0].mxu0
  %v1528 = vadd.f32 %v1427, %v1527
  %1529 = vmatprep.mubr.bf16.mxu0 0
  %1530 = vmatmul.mubr.bf16.gmra.mrb[0].mxu0 %v1355
  %v1531 = vpop.f32.mrb[0].mxu0
  %v1532 = vadd.f32 %v1431, %v1531
  %v1533 = vpop.f32.mrb[0].mxu0
  %v1534 = vadd.f32 %v1433, %v1533
  %v1535 = vpop.f32.mrb[0].mxu0
  %v1536 = vadd.f32 %v1435, %v1535
  %v1537 = vpop.f32.mrb[0].mxu0
  %v1538 = vadd.f32 %v1437, %v1537
  %1539 = vmatprep.mubr.bf16.mxu0 0
  %1540 = vmatmul.mubr.bf16.gmra.mrb[0].mxu0 %v1358
  %v1541 = vpop.f32.mrb[0].mxu0
  %v1542 = vadd.f32 %v1441, %v1541
  %v1543 = vpop.f32.mrb[0].mxu0
  %v1544 = vadd.f32 %v1443, %v1543
  %v1545 = vpop.f32.mrb[0].mxu0
  %v1546 = vadd.f32 %v1445, %v1545
  %v1547 = vpop.f32.mrb[0].mxu0
  %v1548 = vadd.f32 %v1447, %v1547
  %1549 = vmatprep.mubr.bf16.mxu0 0
  %1550 = vmatmul.mubr.bf16.gmra.mrb[0].mxu0 %v1361
  %v1551 = vpop.f32.mrb[0].mxu0
  %v1552 = vadd.f32 %v1451, %v1551
  %v1553 = vpop.f32.mrb[0].mxu0
  %v1554 = vadd.f32 %v1453, %v1553
  %v1555 = vpop.f32.mrb[0].mxu0
  %v1556 = vadd.f32 %v1455, %v1555
  %v1557 = vpop.f32.mrb[0].mxu0
  %v1558 = vadd.f32 %v1457, %v1557
  %1559 = vmatprep.mubr.bf16.mxu0 0
  %1560 = vmatmul.mubr.bf16.gmra.mrb[0].mxu0 %v1364
  %v1561 = vpop.f32.mrb[0].mxu0
  %v1562 = vadd.f32 %v1461, %v1561
  %v1563 = vpop.f32.mrb[0].mxu0
  %v1564 = vadd.f32 %v1463, %v1563
  %v1565 = vpop.f32.mrb[0].mxu0
  %v1566 = vpop.f32.mrb[0].mxu0
  %1567 = vdwg.mxu0
  %1568 = vmatprep.subr.bf16.mxu0 %v947
  %1569 = vmatpush1.bf16.msra.mxu0 %v946
  %1570 = vmatprep.subr.bf16.mxu0 %v957
  %1571 = vmatpush1.bf16.msra.mxu0 %v956
  %1572 = vmatprep.subr.bf16.mxu0 %v967
  %1573 = vmatpush1.bf16.msra.mxu0 %v966
  %1574 = vmatprep.subr.bf16.mxu0 %v977
  %1575 = vmatpush1.bf16.msra.mxu0 %v976
  %1576 = vmatprep.subr.bf16.mxu0 %v987
  %1577 = vmatpush1.bf16.msra.mxu0 %v986
  %1578 = vmatprep.subr.bf16.mxu0 %v997
  %1579 = vmatpush1.bf16.msra.mxu0 %v996
  %1580 = vmatprep.subr.bf16.mxu0 %v1007
  %1581 = vmatpush1.bf16.msra.mxu0 %v1006
  %1582 = vmatprep.subr.bf16.mxu0 %v1017
  %1583 = vmatpush1.bf16.msra.mxu0 %v1016
  %1584 = vmatprep.subr.bf16.mxu0 %v1027
  %1585 = vmatpush1.bf16.msra.mxu0 %v1026
  %1586 = vmatprep.subr.bf16.mxu0 %v1037
  %1587 = vmatpush1.bf16.msra.mxu0 %v1036
  %1588 = vmatprep.subr.bf16.mxu0 %v1047
  %1589 = vmatpush1.bf16.msra.mxu0 %v1046
  %1590 = vmatprep.subr.bf16.mxu0 %v1057
  %1591 = vmatpush1.bf16.msra.mxu0 %v1056
  %1592 = vmatprep.subr.bf16.mxu0 %v1067
  %1593 = vmatpush1.bf16.msra.mxu0 %v1066
  %1594 = vmatprep.subr.bf16.mxu0 %v1077
  %1595 = vmatpush1.bf16.msra.mxu0 %v1076
  %1596 = vmatprep.subr.bf16.mxu0 %v1087
  %1597 = vmatpush1.bf16.msra.mxu0 %v1086
  %1598 = vmatprep.subr.bf16.mxu0 %v1097
  %1599 = vmatpush1.bf16.msra.mxu0 %v1096
  %1600 = vmatprep.mubr.bf16.mxu0 %v310
  %1601 = vmatmul.mubr.bf16.gmra.mrb[0].mxu0 %v309
  %v1602 = vpop.f32.mrb[0].mxu0
  %v1603 = vadd.f32 0.0, %v1602
  %v1604 = vpop.f32.mrb[0].mxu0
  %v1605 = vadd.f32 0.0, %v1604
  %v1606 = vpop.f32.mrb[0].mxu0
  %v1607 = vadd.f32 0.0, %v1606
  %v1608 = vpop.f32.mrb[0].mxu0
  %v1609 = vadd.f32 0.0, %v1608
  %1610 = vmatprep.mubr.bf16.mxu0 %v313
  %1611 = vmatmul.mubr.bf16.gmra.mrb[0].mxu0 %v312
  %v1612 = vpop.f32.mrb[0].mxu0
  %v1613 = vadd.f32 0.0, %v1612
  %v1614 = vpop.f32.mrb[0].mxu0
  %v1615 = vadd.f32 0.0, %v1614
  %v1616 = vpop.f32.mrb[0].mxu0
  %v1617 = vadd.f32 0.0, %v1616
  %v1618 = vpop.f32.mrb[0].mxu0
  %v1619 = vadd.f32 0.0, %v1618
  %1620 = vmatprep.mubr.bf16.mxu0 %v316
  %1621 = vmatmul.mubr.bf16.gmra.mrb[0].mxu0 %v315
  %v1622 = vpop.f32.mrb[0].mxu0
  %v1623 = vadd.f32 0.0, %v1622
  %v1624 = vpop.f32.mrb[0].mxu0
  %v1625 = vadd.f32 0.0, %v1624
  %v1626 = vpop.f32.mrb[0].mxu0
  %v1627 = vadd.f32 0.0, %v1626
  %v1628 = vpop.f32.mrb[0].mxu0
  %v1629 = vadd.f32 0.0, %v1628
  %1630 = vmatprep.mubr.bf16.mxu0 %v319
  %1631 = vmatmul.mubr.bf16.gmra.mrb[0].mxu0 %v318
  %v1632 = vpop.f32.mrb[0].mxu0
  %v1633 = vadd.f32 0.0, %v1632
  %v1634 = vpop.f32.mrb[0].mxu0
  %v1635 = vadd.f32 0.0, %v1634
  %v1636 = vpop.f32.mrb[0].mxu0
  %v1637 = vadd.f32 0.0, %v1636
  %v1638 = vpop.f32.mrb[0].mxu0
  %v1639 = vadd.f32 0.0, %v1638
  %1640 = vmatprep.mubr.bf16.mxu0 %v322
  %1641 = vmatmul.mubr.bf16.gmra.mrb[0].mxu0 %v321
  %v1642 = vpop.f32.mrb[0].mxu0
  %v1643 = vadd.f32 0.0, %v1642
  %v1644 = vpop.f32.mrb[0].mxu0
  %v1645 = vadd.f32 0.0, %v1644
  %v1646 = vpop.f32.mrb[0].mxu0
  %v1647 = vadd.f32 0.0, %v1646
  %v1648 = vpop.f32.mrb[0].mxu0
  %v1649 = vadd.f32 0.0, %v1648
  %1650 = vmatprep.mubr.bf16.mxu0 %v325
  %1651 = vmatmul.mubr.bf16.gmra.mrb[0].mxu0 %v324
  %v1652 = vpop.f32.mrb[0].mxu0
  %v1653 = vadd.f32 0.0, %v1652
  %v1654 = vpop.f32.mrb[0].mxu0
  %v1655 = vadd.f32 0.0, %v1654
  %v1656 = vpop.f32.mrb[0].mxu0
  %v1657 = vadd.f32 0.0, %v1656
  %v1658 = vpop.f32.mrb[0].mxu0
  %v1659 = vadd.f32 0.0, %v1658
  %1660 = vmatprep.mubr.bf16.mxu0 %v328
  %1661 = vmatmul.mubr.bf16.gmra.mrb[0].mxu0 %v327
  %v1662 = vpop.f32.mrb[0].mxu0
  %v1663 = vadd.f32 0.0, %v1662
  %v1664 = vpop.f32.mrb[0].mxu0
  %v1665 = vadd.f32 0.0, %v1664
  %v1666 = vpop.f32.mrb[0].mxu0
  %v1667 = vpop.f32.mrb[0].mxu0
  %1668 = vdwg.mxu0
  %1669 = vmatprep.subr.bf16.mxu0 %v1107
  %1670 = vmatpush1.bf16.msra.mxu0 %v1106
  %1671 = vmatprep.subr.bf16.mxu0 %v1117
  %1672 = vmatpush1.bf16.msra.mxu0 %v1116
  %1673 = vmatprep.subr.bf16.mxu0 %v1127
  %1674 = vmatpush1.bf16.msra.mxu0 %v1126
  %1675 = vmatprep.subr.bf16.mxu0 %v1137
  %1676 = vmatpush1.bf16.msra.mxu0 %v1136
  %1677 = vmatprep.subr.bf16.mxu0 0
  %1678 = vmatpush1.bf16.msra.mxu0 0
  %1679 = vmatprep.subr.bf16.mxu0 0
  %1680 = vmatpush1.bf16.msra.mxu0 0
  %1681 = vmatprep.subr.bf16.mxu0 0
  %1682 = vmatpush1.bf16.msra.mxu0 0
  %1683 = vmatprep.subr.bf16.mxu0 0
  %1684 = vmatpush1.bf16.msra.mxu0 0
  %1685 = vmatprep.subr.bf16.mxu0 0
  %1686 = vmatpush1.bf16.msra.mxu0 0
  %1687 = vmatprep.subr.bf16.mxu0 0
  %1688 = vmatpush1.bf16.msra.mxu0 0
  %1689 = vmatprep.subr.bf16.mxu0 0
  %1690 = vmatpush1.bf16.msra.mxu0 0
  %1691 = vmatprep.subr.bf16.mxu0 0
  %1692 = vmatpush1.bf16.msra.mxu0 0
  %1693 = vmatprep.subr.bf16.mxu0 0
  %1694 = vmatpush1.bf16.msra.mxu0 0
  %1695 = vmatprep.subr.bf16.mxu0 0
  %1696 = vmatpush1.bf16.msra.mxu0 0
  %1697 = vmatprep.subr.bf16.mxu0 0
  %1698 = vmatpush1.bf16.msra.mxu0 0
  %1699 = vmatprep.subr.bf16.mxu0 0
  %1700 = vmatpush1.bf16.msra.mxu0 0
  %1701 = vmatprep.mubr.bf16.mxu0 0
  %1702 = vmatmul.mubr.bf16.gmra.mrb[0].mxu0 %v1346
  %v1703 = vpop.f32.mrb[0].mxu0
  %v1704 = vadd.f32 %v1603, %v1703
  %v1705 = vpop.f32.mrb[0].mxu0
  %v1706 = vadd.f32 %v1605, %v1705
  %v1707 = vpop.f32.mrb[0].mxu0
  %v1708 = vadd.f32 %v1607, %v1707
  %v1709 = vpop.f32.mrb[0].mxu0
  %v1710 = vadd.f32 %v1609, %v1709
  %1711 = vmatprep.mubr.bf16.mxu0 0
  %1712 = vmatmul.mubr.bf16.gmra.mrb[0].mxu0 %v1349
  %v1713 = vpop.f32.mrb[0].mxu0
  %v1714 = vadd.f32 %v1613, %v1713
  %v1715 = vpop.f32.mrb[0].mxu0
  %v1716 = vadd.f32 %v1615, %v1715
  %v1717 = vpop.f32.mrb[0].mxu0
  %v1718 = vadd.f32 %v1617, %v1717
  %v1719 = vpop.f32.mrb[0].mxu0
  %v1720 = vadd.f32 %v1619, %v1719
  %1721 = vmatprep.mubr.bf16.mxu0 0
  %1722 = vmatmul.mubr.bf16.gmra.mrb[0].mxu0 %v1352
  %v1723 = vpop.f32.mrb[0].mxu0
  %v1724 = vadd.f32 %v1623, %v1723
  %v1725 = vpop.f32.mrb[0].mxu0
  %v1726 = vadd.f32 %v1625, %v1725
  %v1727 = vpop.f32.mrb[0].mxu0
  %v1728 = vadd.f32 %v1627, %v1727
  %v1729 = vpop.f32.mrb[0].mxu0
  %v1730 = vadd.f32 %v1629, %v1729
  %1731 = vmatprep.mubr.bf16.mxu0 0
  %1732 = vmatmul.mubr.bf16.gmra.mrb[0].mxu0 %v1355
  %v1733 = vpop.f32.mrb[0].mxu0
  %v1734 = vadd.f32 %v1633, %v1733
  %v1735 = vpop.f32.mrb[0].mxu0
  %v1736 = vadd.f32 %v1635, %v1735
  %v1737 = vpop.f32.mrb[0].mxu0
  %v1738 = vadd.f32 %v1637, %v1737
  %v1739 = vpop.f32.mrb[0].mxu0
  %v1740 = vadd.f32 %v1639, %v1739
  %1741 = vmatprep.mubr.bf16.mxu0 0
  %1742 = vmatmul.mubr.bf16.gmra.mrb[0].mxu0 %v1358
  %v1743 = vpop.f32.mrb[0].mxu0
  %v1744 = vadd.f32 %v1643, %v1743
  %v1745 = vpop.f32.mrb[0].mxu0
  %v1746 = vadd.f32 %v1645, %v1745
  %v1747 = vpop.f32.mrb[0].mxu0
  %v1748 = vadd.f32 %v1647, %v1747
  %v1749 = vpop.f32.mrb[0].mxu0
  %v1750 = vadd.f32 %v1649, %v1749
  %1751 = vmatprep.mubr.bf16.mxu0 0
  %1752 = vmatmul.mubr.bf16.gmra.mrb[0].mxu0 %v1361
  %v1753 = vpop.f32.mrb[0].mxu0
  %v1754 = vadd.f32 %v1653, %v1753
  %v1755 = vpop.f32.mrb[0].mxu0
  %v1756 = vadd.f32 %v1655, %v1755
  %v1757 = vpop.f32.mrb[0].mxu0
  %v1758 = vadd.f32 %v1657, %v1757
  %v1759 = vpop.f32.mrb[0].mxu0
  %v1760 = vadd.f32 %v1659, %v1759
  %1761 = vmatprep.mubr.bf16.mxu0 0
  %1762 = vmatmul.mubr.bf16.gmra.mrb[0].mxu0 %v1364
  %v1763 = vpop.f32.mrb[0].mxu0
  %v1764 = vadd.f32 %v1663, %v1763
  %v1765 = vpop.f32.mrb[0].mxu0
  %v1766 = vadd.f32 %v1665, %v1765
  %v1767 = vpop.f32.mrb[0].mxu0
  %v1768 = vpop.f32.mrb[0].mxu0
  %1769 = vdwg.mxu0
  %1770 = vmatprep.subr.bf16.mxu0 %v949
  %1771 = vmatpush1.bf16.msra.mxu0 %v948
  %1772 = vmatprep.subr.bf16.mxu0 %v959
  %1773 = vmatpush1.bf16.msra.mxu0 %v958
  %1774 = vmatprep.subr.bf16.mxu0 %v969
  %1775 = vmatpush1.bf16.msra.mxu0 %v968
  %1776 = vmatprep.subr.bf16.mxu0 %v979
  %1777 = vmatpush1.bf16.msra.mxu0 %v978
  %1778 = vmatprep.subr.bf16.mxu0 %v989
  %1779 = vmatpush1.bf16.msra.mxu0 %v988
  %1780 = vmatprep.subr.bf16.mxu0 %v999
  %1781 = vmatpush1.bf16.msra.mxu0 %v998
  %1782 = vmatprep.subr.bf16.mxu0 %v1009
  %1783 = vmatpush1.bf16.msra.mxu0 %v1008
  %1784 = vmatprep.subr.bf16.mxu0 %v1019
  %1785 = vmatpush1.bf16.msra.mxu0 %v1018
  %1786 = vmatprep.subr.bf16.mxu0 %v1029
  %1787 = vmatpush1.bf16.msra.mxu0 %v1028
  %1788 = vmatprep.subr.bf16.mxu0 %v1039
  %1789 = vmatpush1.bf16.msra.mxu0 %v1038
  %1790 = vmatprep.subr.bf16.mxu0 %v1049
  %1791 = vmatpush1.bf16.msra.mxu0 %v1048
  %1792 = vmatprep.subr.bf16.mxu0 %v1059
  %1793 = vmatpush1.bf16.msra.mxu0 %v1058
  %1794 = vmatprep.subr.bf16.mxu0 %v1069
  %1795 = vmatpush1.bf16.msra.mxu0 %v1068
  %1796 = vmatprep.subr.bf16.mxu0 %v1079
  %1797 = vmatpush1.bf16.msra.mxu0 %v1078
  %1798 = vmatprep.subr.bf16.mxu0 %v1089
  %1799 = vmatpush1.bf16.msra.mxu0 %v1088
  %1800 = vmatprep.subr.bf16.mxu0 %v1099
  %1801 = vmatpush1.bf16.msra.mxu0 %v1098
  %1802 = vmatprep.mubr.bf16.mxu0 %v310
  %1803 = vmatmul.mubr.bf16.gmra.mrb[0].mxu0 %v309
  %v1804 = vpop.f32.mrb[0].mxu0
  %v1805 = vadd.f32 0.0, %v1804
  %v1806 = vpop.f32.mrb[0].mxu0
  %v1807 = vadd.f32 0.0, %v1806
  %v1808 = vpop.f32.mrb[0].mxu0
  %v1809 = vadd.f32 0.0, %v1808
  %v1810 = vpop.f32.mrb[0].mxu0
  %v1811 = vadd.f32 0.0, %v1810
  %1812 = vmatprep.mubr.bf16.mxu0 %v313
  %1813 = vmatmul.mubr.bf16.gmra.mrb[0].mxu0 %v312
  %v1814 = vpop.f32.mrb[0].mxu0
  %v1815 = vadd.f32 0.0, %v1814
  %v1816 = vpop.f32.mrb[0].mxu0
  %v1817 = vadd.f32 0.0, %v1816
  %v1818 = vpop.f32.mrb[0].mxu0
  %v1819 = vadd.f32 0.0, %v1818
  %v1820 = vpop.f32.mrb[0].mxu0
  %v1821 = vadd.f32 0.0, %v1820
  %1822 = vmatprep.mubr.bf16.mxu0 %v316
  %1823 = vmatmul.mubr.bf16.gmra.mrb[0].mxu0 %v315
  %v1824 = vpop.f32.mrb[0].mxu0
  %v1825 = vadd.f32 0.0, %v1824
  %v1826 = vpop.f32.mrb[0].mxu0
  %v1827 = vadd.f32 0.0, %v1826
  %v1828 = vpop.f32.mrb[0].mxu0
  %v1829 = vadd.f32 0.0, %v1828
  %v1830 = vpop.f32.mrb[0].mxu0
  %v1831 = vadd.f32 0.0, %v1830
  %1832 = vmatprep.mubr.bf16.mxu0 %v319
  %1833 = vmatmul.mubr.bf16.gmra.mrb[0].mxu0 %v318
  %v1834 = vpop.f32.mrb[0].mxu0
  %v1835 = vadd.f32 0.0, %v1834
  %v1836 = vpop.f32.mrb[0].mxu0
  %v1837 = vadd.f32 0.0, %v1836
  %v1838 = vpop.f32.mrb[0].mxu0
  %v1839 = vadd.f32 0.0, %v1838
  %v1840 = vpop.f32.mrb[0].mxu0
  %v1841 = vadd.f32 0.0, %v1840
  %1842 = vmatprep.mubr.bf16.mxu0 %v322
  %1843 = vmatmul.mubr.bf16.gmra.mrb[0].mxu0 %v321
  %v1844 = vpop.f32.mrb[0].mxu0
  %v1845 = vadd.f32 0.0, %v1844
  %v1846 = vpop.f32.mrb[0].mxu0
  %v1847 = vadd.f32 0.0, %v1846
  %v1848 = vpop.f32.mrb[0].mxu0
  %v1849 = vadd.f32 0.0, %v1848
  %v1850 = vpop.f32.mrb[0].mxu0
  %v1851 = vadd.f32 0.0, %v1850
  %1852 = vmatprep.mubr.bf16.mxu0 %v325
  %1853 = vmatmul.mubr.bf16.gmra.mrb[0].mxu0 %v324
  %v1854 = vpop.f32.mrb[0].mxu0
  %v1855 = vadd.f32 0.0, %v1854
  %v1856 = vpop.f32.mrb[0].mxu0
  %v1857 = vadd.f32 0.0, %v1856
  %v1858 = vpop.f32.mrb[0].mxu0
  %v1859 = vadd.f32 0.0, %v1858
  %v1860 = vpop.f32.mrb[0].mxu0
  %v1861 = vadd.f32 0.0, %v1860
  %1862 = vmatprep.mubr.bf16.mxu0 %v328
  %1863 = vmatmul.mubr.bf16.gmra.mrb[0].mxu0 %v327
  %v1864 = vpop.f32.mrb[0].mxu0
  %v1865 = vadd.f32 0.0, %v1864
  %v1866 = vpop.f32.mrb[0].mxu0
  %v1867 = vadd.f32 0.0, %v1866
  %v1868 = vpop.f32.mrb[0].mxu0
  %v1869 = vpop.f32.mrb[0].mxu0
  %1870 = vdwg.mxu0
  %1871 = vmatprep.subr.bf16.mxu0 %v1109
  %1872 = vmatpush1.bf16.msra.mxu0 %v1108
  %1873 = vmatprep.subr.bf16.mxu0 %v1119
  %1874 = vmatpush1.bf16.msra.mxu0 %v1118
  %1875 = vmatprep.subr.bf16.mxu0 %v1129
  %1876 = vmatpush1.bf16.msra.mxu0 %v1128
  %1877 = vmatprep.subr.bf16.mxu0 %v1139
  %1878 = vmatpush1.bf16.msra.mxu0 %v1138
  %1879 = vmatprep.subr.bf16.mxu0 0
  %1880 = vmatpush1.bf16.msra.mxu0 0
  %1881 = vmatprep.subr.bf16.mxu0 0
  %1882 = vmatpush1.bf16.msra.mxu0 0
  %1883 = vmatprep.subr.bf16.mxu0 0
  %1884 = vmatpush1.bf16.msra.mxu0 0
  %1885 = vmatprep.subr.bf16.mxu0 0
  %1886 = vmatpush1.bf16.msra.mxu0 0
  %1887 = vmatprep.subr.bf16.mxu0 0
  %1888 = vmatpush1.bf16.msra.mxu0 0
  %1889 = vmatprep.subr.bf16.mxu0 0
  %1890 = vmatpush1.bf16.msra.mxu0 0
  %1891 = vmatprep.subr.bf16.mxu0 0
  %1892 = vmatpush1.bf16.msra.mxu0 0
  %1893 = vmatprep.subr.bf16.mxu0 0
  %1894 = vmatpush1.bf16.msra.mxu0 0
  %1895 = vmatprep.subr.bf16.mxu0 0
  %1896 = vmatpush1.bf16.msra.mxu0 0
  %1897 = vmatprep.subr.bf16.mxu0 0
  %1898 = vmatpush1.bf16.msra.mxu0 0
  %1899 = vmatprep.subr.bf16.mxu0 0
  %1900 = vmatpush1.bf16.msra.mxu0 0
  %1901 = vmatprep.subr.bf16.mxu0 0
  %1902 = vmatpush1.bf16.msra.mxu0 0
  %1903 = vmatprep.mubr.bf16.mxu0 0
  %1904 = vmatmul.mubr.bf16.gmra.mrb[0].mxu0 %v1346
  %v1905 = vpop.f32.mrb[0].mxu0
  %v1906 = vadd.f32 %v1805, %v1905
  %v1907 = vpop.f32.mrb[0].mxu0
  %v1908 = vadd.f32 %v1807, %v1907
  %v1909 = vpop.f32.mrb[0].mxu0
  %v1910 = vadd.f32 %v1809, %v1909
  %v1911 = vpop.f32.mrb[0].mxu0
  %v1912 = vadd.f32 %v1811, %v1911
  %1913 = vmatprep.mubr.bf16.mxu0 0
  %1914 = vmatmul.mubr.bf16.gmra.mrb[0].mxu0 %v1349
  %v1915 = vpop.f32.mrb[0].mxu0
  %v1916 = vadd.f32 %v1815, %v1915
  %v1917 = vpop.f32.mrb[0].mxu0
  %v1918 = vadd.f32 %v1817, %v1917
  %v1919 = vpop.f32.mrb[0].mxu0
  %v1920 = vadd.f32 %v1819, %v1919
  %v1921 = vpop.f32.mrb[0].mxu0
  %v1922 = vadd.f32 %v1821, %v1921
  %1923 = vmatprep.mubr.bf16.mxu0 0
  %1924 = vmatmul.mubr.bf16.gmra.mrb[0].mxu0 %v1352
  %v1925 = vpop.f32.mrb[0].mxu0
  %v1926 = vadd.f32 %v1825, %v1925
  %v1927 = vpop.f32.mrb[0].mxu0
  %v1928 = vadd.f32 %v1827, %v1927
  %v1929 = vpop.f32.mrb[0].mxu0
  %v1930 = vadd.f32 %v1829, %v1929
  %v1931 = vpop.f32.mrb[0].mxu0
  %v1932 = vadd.f32 %v1831, %v1931
  %1933 = vmatprep.mubr.bf16.mxu0 0
  %1934 = vmatmul.mubr.bf16.gmra.mrb[0].mxu0 %v1355
  %v1935 = vpop.f32.mrb[0].mxu0
  %v1936 = vadd.f32 %v1835, %v1935
  %v1937 = vpop.f32.mrb[0].mxu0
  %v1938 = vadd.f32 %v1837, %v1937
  %v1939 = vpop.f32.mrb[0].mxu0
  %v1940 = vadd.f32 %v1839, %v1939
  %v1941 = vpop.f32.mrb[0].mxu0
  %v1942 = vadd.f32 %v1841, %v1941
  %1943 = vmatprep.mubr.bf16.mxu0 0
  %1944 = vmatmul.mubr.bf16.gmra.mrb[0].mxu0 %v1358
  %v1945 = vpop.f32.mrb[0].mxu0
  %v1946 = vadd.f32 %v1845, %v1945
  %v1947 = vpop.f32.mrb[0].mxu0
  %v1948 = vadd.f32 %v1847, %v1947
  %v1949 = vpop.f32.mrb[0].mxu0
  %v1950 = vadd.f32 %v1849, %v1949
  %v1951 = vpop.f32.mrb[0].mxu0
  %v1952 = vadd.f32 %v1851, %v1951
  %1953 = vmatprep.mubr.bf16.mxu0 0
  %1954 = vmatmul.mubr.bf16.gmra.mrb[0].mxu0 %v1361
  %v1955 = vpop.f32.mrb[0].mxu0
  %v1956 = vadd.f32 %v1855, %v1955
  %v1957 = vpop.f32.mrb[0].mxu0
  %v1958 = vadd.f32 %v1857, %v1957
  %v1959 = vpop.f32.mrb[0].mxu0
  %v1960 = vadd.f32 %v1859, %v1959
  %v1961 = vpop.f32.mrb[0].mxu0
  %v1962 = vadd.f32 %v1861, %v1961
  %1963 = vmatprep.mubr.bf16.mxu0 0
  %1964 = vmatmul.mubr.bf16.gmra.mrb[0].mxu0 %v1364
  %v1965 = vpop.f32.mrb[0].mxu0
  %v1966 = vadd.f32 %v1865, %v1965
  %v1967 = vpop.f32.mrb[0].mxu0
  %v1968 = vadd.f32 %v1867, %v1967
  %v1969 = vpop.f32.mrb[0].mxu0
  %v1970 = vpop.f32.mrb[0].mxu0
  %1971 = vdwg.mxu0
  %1972 = vmatprep.subr.bf16.mxu0 %v951
  %1973 = vmatpush1.bf16.msra.mxu0 %v950
  %1974 = vmatprep.subr.bf16.mxu0 %v961
  %1975 = vmatpush1.bf16.msra.mxu0 %v960
  %1976 = vmatprep.subr.bf16.mxu0 %v971
  %1977 = vmatpush1.bf16.msra.mxu0 %v970
  %1978 = vmatprep.subr.bf16.mxu0 %v981
  %1979 = vmatpush1.bf16.msra.mxu0 %v980
  %1980 = vmatprep.subr.bf16.mxu0 %v991
  %1981 = vmatpush1.bf16.msra.mxu0 %v990
  %1982 = vmatprep.subr.bf16.mxu0 %v1001
  %1983 = vmatpush1.bf16.msra.mxu0 %v1000
  %1984 = vmatprep.subr.bf16.mxu0 %v1011
  %1985 = vmatpush1.bf16.msra.mxu0 %v1010
  %1986 = vmatprep.subr.bf16.mxu0 %v1021
  %1987 = vmatpush1.bf16.msra.mxu0 %v1020
  %1988 = vmatprep.subr.bf16.mxu0 %v1031
  %1989 = vmatpush1.bf16.msra.mxu0 %v1030
  %1990 = vmatprep.subr.bf16.mxu0 %v1041
  %1991 = vmatpush1.bf16.msra.mxu0 %v1040
  %1992 = vmatprep.subr.bf16.mxu0 %v1051
  %1993 = vmatpush1.bf16.msra.mxu0 %v1050
  %1994 = vmatprep.subr.bf16.mxu0 %v1061
  %1995 = vmatpush1.bf16.msra.mxu0 %v1060
  %1996 = vmatprep.subr.bf16.mxu0 %v1071
  %1997 = vmatpush1.bf16.msra.mxu0 %v1070
  %1998 = vmatprep.subr.bf16.mxu0 %v1081
  %1999 = vmatpush1.bf16.msra.mxu0 %v1080
  %2000 = vmatprep.subr.bf16.mxu0 %v1091
  %2001 = vmatpush1.bf16.msra.mxu0 %v1090
  %2002 = vmatprep.subr.bf16.mxu0 %v1101
  %2003 = vmatpush1.bf16.msra.mxu0 %v1100
  %2004 = vmatprep.mubr.bf16.mxu0 %v310
  %2005 = vmatmul.mubr.bf16.gmra.mrb[0].mxu0 %v309
  %v2006 = vpop.f32.mrb[0].mxu0
  %v2007 = vadd.f32 0.0, %v2006
  %v2008 = vpop.f32.mrb[0].mxu0
  %v2009 = vadd.f32 0.0, %v2008
  %v2010 = vpop.f32.mrb[0].mxu0
  %v2011 = vadd.f32 0.0, %v2010
  %v2012 = vpop.f32.mrb[0].mxu0
  %v2013 = vadd.f32 0.0, %v2012
  %2014 = vmatprep.mubr.bf16.mxu0 %v313
  %2015 = vmatmul.mubr.bf16.gmra.mrb[0].mxu0 %v312
  %v2016 = vpop.f32.mrb[0].mxu0
  %v2017 = vadd.f32 0.0, %v2016
  %v2018 = vpop.f32.mrb[0].mxu0
  %v2019 = vadd.f32 0.0, %v2018
  %v2020 = vpop.f32.mrb[0].mxu0
  %v2021 = vadd.f32 0.0, %v2020
  %v2022 = vpop.f32.mrb[0].mxu0
  %v2023 = vadd.f32 0.0, %v2022
  %2024 = vmatprep.mubr.bf16.mxu0 %v316
  %2025 = vmatmul.mubr.bf16.gmra.mrb[0].mxu0 %v315
  %v2026 = vpop.f32.mrb[0].mxu0
  %v2027 = vadd.f32 0.0, %v2026
  %v2028 = vpop.f32.mrb[0].mxu0
  %v2029 = vadd.f32 0.0, %v2028
  %v2030 = vpop.f32.mrb[0].mxu0
  %v2031 = vadd.f32 0.0, %v2030
  %v2032 = vpop.f32.mrb[0].mxu0
  %v2033 = vadd.f32 0.0, %v2032
  %2034 = vmatprep.mubr.bf16.mxu0 %v319
  %2035 = vmatmul.mubr.bf16.gmra.mrb[0].mxu0 %v318
  %v2036 = vpop.f32.mrb[0].mxu0
  %v2037 = vadd.f32 0.0, %v2036
  %v2038 = vpop.f32.mrb[0].mxu0
  %v2039 = vadd.f32 0.0, %v2038
  %v2040 = vpop.f32.mrb[0].mxu0
  %v2041 = vadd.f32 0.0, %v2040
  %v2042 = vpop.f32.mrb[0].mxu0
  %v2043 = vadd.f32 0.0, %v2042
  %2044 = vmatprep.mubr.bf16.mxu0 %v322
  %2045 = vmatmul.mubr.bf16.gmra.mrb[0].mxu0 %v321
  %v2046 = vpop.f32.mrb[0].mxu0
  %v2047 = vadd.f32 0.0, %v2046
  %v2048 = vpop.f32.mrb[0].mxu0
  %v2049 = vadd.f32 0.0, %v2048
  %v2050 = vpop.f32.mrb[0].mxu0
  %v2051 = vadd.f32 0.0, %v2050
  %v2052 = vpop.f32.mrb[0].mxu0
  %v2053 = vadd.f32 0.0, %v2052
  %2054 = vmatprep.mubr.bf16.mxu0 %v325
  %2055 = vmatmul.mubr.bf16.gmra.mrb[0].mxu0 %v324
  %v2056 = vpop.f32.mrb[0].mxu0
  %v2057 = vadd.f32 0.0, %v2056
  %v2058 = vpop.f32.mrb[0].mxu0
  %v2059 = vadd.f32 0.0, %v2058
  %v2060 = vpop.f32.mrb[0].mxu0
  %v2061 = vadd.f32 0.0, %v2060
  %v2062 = vpop.f32.mrb[0].mxu0
  %v2063 = vadd.f32 0.0, %v2062
  %2064 = vmatprep.mubr.bf16.mxu0 %v328
  %2065 = vmatmul.mubr.bf16.gmra.mrb[0].mxu0 %v327
  %v2066 = vpop.f32.mrb[0].mxu0
  %v2067 = vadd.f32 0.0, %v2066
  %v2068 = vpop.f32.mrb[0].mxu0
  %v2069 = vadd.f32 0.0, %v2068
  %v2070 = vpop.f32.mrb[0].mxu0
  %v2071 = vpop.f32.mrb[0].mxu0
  %2072 = vdwg.mxu0
  %2073 = vmatprep.subr.bf16.mxu0 %v1111
  %2074 = vmatpush1.bf16.msra.mxu0 %v1110
  %2075 = vmatprep.subr.bf16.mxu0 %v1121
  %2076 = vmatpush1.bf16.msra.mxu0 %v1120
  %2077 = vmatprep.subr.bf16.mxu0 %v1131
  %2078 = vmatpush1.bf16.msra.mxu0 %v1130
  %2079 = vmatprep.subr.bf16.mxu0 %v1141
  %2080 = vmatpush1.bf16.msra.mxu0 %v1140
  %2081 = vmatprep.subr.bf16.mxu0 0
  %2082 = vmatpush1.bf16.msra.mxu0 0
  %2083 = vmatprep.subr.bf16.mxu0 0
  %2084 = vmatpush1.bf16.msra.mxu0 0
  %2085 = vmatprep.subr.bf16.mxu0 0
  %2086 = vmatpush1.bf16.msra.mxu0 0
  %2087 = vmatprep.subr.bf16.mxu0 0
  %2088 = vmatpush1.bf16.msra.mxu0 0
  %2089 = vmatprep.subr.bf16.mxu0 0
  %2090 = vmatpush1.bf16.msra.mxu0 0
  %2091 = vmatprep.subr.bf16.mxu0 0
  %2092 = vmatpush1.bf16.msra.mxu0 0
  %2093 = vmatprep.subr.bf16.mxu0 0
  %2094 = vmatpush1.bf16.msra.mxu0 0
  %2095 = vmatprep.subr.bf16.mxu0 0
  %2096 = vmatpush1.bf16.msra.mxu0 0
  %2097 = vmatprep.subr.bf16.mxu0 0
  %2098 = vmatpush1.bf16.msra.mxu0 0
  %2099 = vmatprep.subr.bf16.mxu0 0
  %2100 = vmatpush1.bf16.msra.mxu0 0
  %2101 = vmatprep.subr.bf16.mxu0 0
  %2102 = vmatpush1.bf16.msra.mxu0 0
  %2103 = vmatprep.subr.bf16.mxu0 0
  %2104 = vmatpush1.bf16.msra.mxu0 0
  %2105 = vmatprep.mubr.bf16.mxu0 0
  %2106 = vmatmul.mubr.bf16.gmra.mrb[0].mxu0 %v1346
  %v2107 = vpop.f32.mrb[0].mxu0
  %v2108 = vadd.f32 %v2007, %v2107
  %v2109 = vpop.f32.mrb[0].mxu0
  %v2110 = vadd.f32 %v2009, %v2109
  %v2111 = vpop.f32.mrb[0].mxu0
  %v2112 = vadd.f32 %v2011, %v2111
  %v2113 = vpop.f32.mrb[0].mxu0
  %v2114 = vadd.f32 %v2013, %v2113
  %2115 = vmatprep.mubr.bf16.mxu0 0
  %2116 = vmatmul.mubr.bf16.gmra.mrb[0].mxu0 %v1349
  %v2117 = vpop.f32.mrb[0].mxu0
  %v2118 = vadd.f32 %v2017, %v2117
  %v2119 = vpop.f32.mrb[0].mxu0
  %v2120 = vadd.f32 %v2019, %v2119
  %v2121 = vpop.f32.mrb[0].mxu0
  %v2122 = vadd.f32 %v2021, %v2121
  %v2123 = vpop.f32.mrb[0].mxu0
  %v2124 = vadd.f32 %v2023, %v2123
  %2125 = vmatprep.mubr.bf16.mxu0 0
  %2126 = vmatmul.mubr.bf16.gmra.mrb[0].mxu0 %v1352
  %v2127 = vpop.f32.mrb[0].mxu0
  %v2128 = vadd.f32 %v2027, %v2127
  %v2129 = vpop.f32.mrb[0].mxu0
  %v2130 = vadd.f32 %v2029, %v2129
  %v2131 = vpop.f32.mrb[0].mxu0
  %v2132 = vadd.f32 %v2031, %v2131
  %v2133 = vpop.f32.mrb[0].mxu0
  %v2134 = vadd.f32 %v2033, %v2133
  %2135 = vmatprep.mubr.bf16.mxu0 0
  %2136 = vmatmul.mubr.bf16.gmra.mrb[0].mxu0 %v1355
  %v2137 = vpop.f32.mrb[0].mxu0
  %v2138 = vadd.f32 %v2037, %v2137
  %v2139 = vpop.f32.mrb[0].mxu0
  %v2140 = vadd.f32 %v2039, %v2139
  %v2141 = vpop.f32.mrb[0].mxu0
  %v2142 = vadd.f32 %v2041, %v2141
  %v2143 = vpop.f32.mrb[0].mxu0
  %v2144 = vadd.f32 %v2043, %v2143
  %2145 = vmatprep.mubr.bf16.mxu0 0
  %2146 = vmatmul.mubr.bf16.gmra.mrb[0].mxu0 %v1358
  %v2147 = vpop.f32.mrb[0].mxu0
  %v2148 = vadd.f32 %v2047, %v2147
  %v2149 = vpop.f32.mrb[0].mxu0
  %v2150 = vadd.f32 %v2049, %v2149
  %v2151 = vpop.f32.mrb[0].mxu0
  %v2152 = vadd.f32 %v2051, %v2151
  %v2153 = vpop.f32.mrb[0].mxu0
  %v2154 = vadd.f32 %v2053, %v2153
  %2155 = vmatprep.mubr.bf16.mxu0 0
  %2156 = vmatmul.mubr.bf16.gmra.mrb[0].mxu0 %v1361
  %v2157 = vpop.f32.mrb[0].mxu0
  %v2158 = vadd.f32 %v2057, %v2157
  %v2159 = vpop.f32.mrb[0].mxu0
  %v2160 = vadd.f32 %v2059, %v2159
  %v2161 = vpop.f32.mrb[0].mxu0
  %v2162 = vadd.f32 %v2061, %v2161
  %v2163 = vpop.f32.mrb[0].mxu0
  %v2164 = vadd.f32 %v2063, %v2163
  %2165 = vmatprep.mubr.bf16.mxu0 0
  %2166 = vmatmul.mubr.bf16.gmra.mrb[0].mxu0 %v1364
  %v2167 = vpop.f32.mrb[0].mxu0
  %v2168 = vadd.f32 %v2067, %v2167
  %v2169 = vpop.f32.mrb[0].mxu0
  %v2170 = vadd.f32 %v2069, %v2169
  %v2171 = vpop.f32.mrb[0].mxu0
  %v2172 = vpop.f32.mrb[0].mxu0
  %2173 = vdwg.mxu0
  %2174 = vmatprep.subr.bf16.mxu0 %v953
  %2175 = vmatpush1.bf16.msra.mxu0 %v952
  %2176 = vmatprep.subr.bf16.mxu0 %v963
  %2177 = vmatpush1.bf16.msra.mxu0 %v962
  %2178 = vmatprep.subr.bf16.mxu0 %v973
  %2179 = vmatpush1.bf16.msra.mxu0 %v972
  %2180 = vmatprep.subr.bf16.mxu0 %v983
  %2181 = vmatpush1.bf16.msra.mxu0 %v982
  %2182 = vmatprep.subr.bf16.mxu0 %v993
  %2183 = vmatpush1.bf16.msra.mxu0 %v992
  %2184 = vmatprep.subr.bf16.mxu0 %v1003
  %2185 = vmatpush1.bf16.msra.mxu0 %v1002
  %2186 = vmatprep.subr.bf16.mxu0 %v1013
  %2187 = vmatpush1.bf16.msra.mxu0 %v1012
  %2188 = vmatprep.subr.bf16.mxu0 %v1023
  %2189 = vmatpush1.bf16.msra.mxu0 %v1022
  %2190 = vmatprep.subr.bf16.mxu0 %v1033
  %2191 = vmatpush1.bf16.msra.mxu0 %v1032
  %2192 = vmatprep.subr.bf16.mxu0 %v1043
  %2193 = vmatpush1.bf16.msra.mxu0 %v1042
  %2194 = vmatprep.subr.bf16.mxu0 %v1053
  %2195 = vmatpush1.bf16.msra.mxu0 %v1052
  %2196 = vmatprep.subr.bf16.mxu0 %v1063
  %2197 = vmatpush1.bf16.msra.mxu0 %v1062
  %2198 = vmatprep.subr.bf16.mxu0 %v1073
  %2199 = vmatpush1.bf16.msra.mxu0 %v1072
  %2200 = vmatprep.subr.bf16.mxu0 %v1083
  %2201 = vmatpush1.bf16.msra.mxu0 %v1082
  %2202 = vmatprep.subr.bf16.mxu0 %v1093
  %2203 = vmatpush1.bf16.msra.mxu0 %v1092
  %2204 = vmatprep.subr.bf16.mxu0 %v1103
  %2205 = vmatpush1.bf16.msra.mxu0 %v1102
  %2206 = vmatprep.mubr.bf16.mxu0 %v310
  %2207 = vmatmul.mubr.bf16.gmra.mrb[0].mxu0 %v309
  %v2208 = vpop.f32.mrb[0].mxu0
  %v2209 = vadd.f32 0.0, %v2208
  %v2210 = vpop.f32.mrb[0].mxu0
  %v2211 = vadd.f32 0.0, %v2210
  %v2212 = vpop.f32.mrb[0].mxu0
  %v2213 = vadd.f32 0.0, %v2212
  %v2214 = vpop.f32.mrb[0].mxu0
  %v2215 = vadd.f32 0.0, %v2214
  %2216 = vmatprep.mubr.bf16.mxu0 %v313
  %2217 = vmatmul.mubr.bf16.gmra.mrb[0].mxu0 %v312
  %v2218 = vpop.f32.mrb[0].mxu0
  %v2219 = vadd.f32 0.0, %v2218
  %v2220 = vpop.f32.mrb[0].mxu0
  %v2221 = vadd.f32 0.0, %v2220
  %v2222 = vpop.f32.mrb[0].mxu0
  %v2223 = vadd.f32 0.0, %v2222
  %v2224 = vpop.f32.mrb[0].mxu0
  %v2225 = vadd.f32 0.0, %v2224
  %2226 = vmatprep.mubr.bf16.mxu0 %v316
  %2227 = vmatmul.mubr.bf16.gmra.mrb[0].mxu0 %v315
  %v2228 = vpop.f32.mrb[0].mxu0
  %v2229 = vadd.f32 0.0, %v2228
  %v2230 = vpop.f32.mrb[0].mxu0
  %v2231 = vadd.f32 0.0, %v2230
  %v2232 = vpop.f32.mrb[0].mxu0
  %v2233 = vadd.f32 0.0, %v2232
  %v2234 = vpop.f32.mrb[0].mxu0
  %v2235 = vadd.f32 0.0, %v2234
  %2236 = vmatprep.mubr.bf16.mxu0 %v319
  %2237 = vmatmul.mubr.bf16.gmra.mrb[0].mxu0 %v318
  %v2238 = vpop.f32.mrb[0].mxu0
  %v2239 = vadd.f32 0.0, %v2238
  %v2240 = vpop.f32.mrb[0].mxu0
  %v2241 = vadd.f32 0.0, %v2240
  %v2242 = vpop.f32.mrb[0].mxu0
  %v2243 = vadd.f32 0.0, %v2242
  %v2244 = vpop.f32.mrb[0].mxu0
  %v2245 = vadd.f32 0.0, %v2244
  %2246 = vmatprep.mubr.bf16.mxu0 %v322
  %2247 = vmatmul.mubr.bf16.gmra.mrb[0].mxu0 %v321
  %v2248 = vpop.f32.mrb[0].mxu0
  %v2249 = vadd.f32 0.0, %v2248
  %v2250 = vpop.f32.mrb[0].mxu0
  %v2251 = vadd.f32 0.0, %v2250
  %v2252 = vpop.f32.mrb[0].mxu0
  %v2253 = vadd.f32 0.0, %v2252
  %v2254 = vpop.f32.mrb[0].mxu0
  %v2255 = vadd.f32 0.0, %v2254
  %2256 = vmatprep.mubr.bf16.mxu0 %v325
  %2257 = vmatmul.mubr.bf16.gmra.mrb[0].mxu0 %v324
  %v2258 = vpop.f32.mrb[0].mxu0
  %v2259 = vadd.f32 0.0, %v2258
  %v2260 = vpop.f32.mrb[0].mxu0
  %v2261 = vadd.f32 0.0, %v2260
  %v2262 = vpop.f32.mrb[0].mxu0
  %v2263 = vadd.f32 0.0, %v2262
  %v2264 = vpop.f32.mrb[0].mxu0
  %v2265 = vadd.f32 0.0, %v2264
  %2266 = vmatprep.mubr.bf16.mxu0 %v328
  %2267 = vmatmul.mubr.bf16.gmra.mrb[0].mxu0 %v327
  %v2268 = vpop.f32.mrb[0].mxu0
  %v2269 = vadd.f32 0.0, %v2268
  %v2270 = vpop.f32.mrb[0].mxu0
  %v2271 = vadd.f32 0.0, %v2270
  %v2272 = vpop.f32.mrb[0].mxu0
  %v2273 = vpop.f32.mrb[0].mxu0
  %2274 = vdwg.mxu0
  %2275 = vmatprep.subr.bf16.mxu0 %v1113
  %2276 = vmatpush1.bf16.msra.mxu0 %v1112
  %2277 = vmatprep.subr.bf16.mxu0 %v1123
  %2278 = vmatpush1.bf16.msra.mxu0 %v1122
  %2279 = vmatprep.subr.bf16.mxu0 %v1133
  %2280 = vmatpush1.bf16.msra.mxu0 %v1132
  %2281 = vmatprep.subr.bf16.mxu0 %v1143
  %2282 = vmatpush1.bf16.msra.mxu0 %v1142
  %2283 = vmatprep.subr.bf16.mxu0 0
  %2284 = vmatpush1.bf16.msra.mxu0 0
  %2285 = vmatprep.subr.bf16.mxu0 0
  %2286 = vmatpush1.bf16.msra.mxu0 0
  %2287 = vmatprep.subr.bf16.mxu0 0
  %2288 = vmatpush1.bf16.msra.mxu0 0
  %2289 = vmatprep.subr.bf16.mxu0 0
  %2290 = vmatpush1.bf16.msra.mxu0 0
  %2291 = vmatprep.subr.bf16.mxu0 0
  %2292 = vmatpush1.bf16.msra.mxu0 0
  %2293 = vmatprep.subr.bf16.mxu0 0
  %2294 = vmatpush1.bf16.msra.mxu0 0
  %2295 = vmatprep.subr.bf16.mxu0 0
  %2296 = vmatpush1.bf16.msra.mxu0 0
  %2297 = vmatprep.subr.bf16.mxu0 0
  %2298 = vmatpush1.bf16.msra.mxu0 0
  %2299 = vmatprep.subr.bf16.mxu0 0
  %2300 = vmatpush1.bf16.msra.mxu0 0
  %2301 = vmatprep.subr.bf16.mxu0 0
  %2302 = vmatpush1.bf16.msra.mxu0 0
  %2303 = vmatprep.subr.bf16.mxu0 0
  %2304 = vmatpush1.bf16.msra.mxu0 0
  %2305 = vmatprep.subr.bf16.mxu0 0
  %2306 = vmatpush1.bf16.msra.mxu0 0
  %2307 = vmatprep.mubr.bf16.mxu0 0
  %2308 = vmatmul.mubr.bf16.gmra.mrb[0].mxu0 %v1346
  %v2309 = vpop.f32.mrb[0].mxu0
  %v2310 = vadd.f32 %v2209, %v2309
  %v2311 = vpop.f32.mrb[0].mxu0
  %v2312 = vadd.f32 %v2211, %v2311
  %v2313 = vpop.f32.mrb[0].mxu0
  %v2314 = vadd.f32 %v2213, %v2313
  %v2315 = vpop.f32.mrb[0].mxu0
  %v2316 = vadd.f32 %v2215, %v2315
  %2317 = vmatprep.mubr.bf16.mxu0 0
  %2318 = vmatmul.mubr.bf16.gmra.mrb[0].mxu0 %v1349
  %v2319 = vpop.f32.mrb[0].mxu0
  %v2320 = vadd.f32 %v2219, %v2319
  %v2321 = vpop.f32.mrb[0].mxu0
  %v2322 = vadd.f32 %v2221, %v2321
  %v2323 = vpop.f32.mrb[0].mxu0
  %v2324 = vadd.f32 %v2223, %v2323
  %v2325 = vpop.f32.mrb[0].mxu0
  %v2326 = vadd.f32 %v2225, %v2325
  %2327 = vmatprep.mubr.bf16.mxu0 0
  %2328 = vmatmul.mubr.bf16.gmra.mrb[0].mxu0 %v1352
  %v2329 = vpop.f32.mrb[0].mxu0
  %v2330 = vadd.f32 %v2229, %v2329
  %v2331 = vpop.f32.mrb[0].mxu0
  %v2332 = vadd.f32 %v2231, %v2331
  %v2333 = vpop.f32.mrb[0].mxu0
  %v2334 = vadd.f32 %v2233, %v2333
  %v2335 = vpop.f32.mrb[0].mxu0
  %v2336 = vadd.f32 %v2235, %v2335
  %2337 = vmatprep.mubr.bf16.mxu0 0
  %2338 = vmatmul.mubr.bf16.gmra.mrb[0].mxu0 %v1355
  %v2339 = vpop.f32.mrb[0].mxu0
  %v2340 = vadd.f32 %v2239, %v2339
  %v2341 = vpop.f32.mrb[0].mxu0
  %v2342 = vadd.f32 %v2241, %v2341
  %v2343 = vpop.f32.mrb[0].mxu0
  %v2344 = vadd.f32 %v2243, %v2343
  %v2345 = vpop.f32.mrb[0].mxu0
  %v2346 = vadd.f32 %v2245, %v2345
  %2347 = vmatprep.mubr.bf16.mxu0 0
  %2348 = vmatmul.mubr.bf16.gmra.mrb[0].mxu0 %v1358
  %v2349 = vpop.f32.mrb[0].mxu0
  %v2350 = vadd.f32 %v2249, %v2349
  %v2351 = vpop.f32.mrb[0].mxu0
  %v2352 = vadd.f32 %v2251, %v2351
  %v2353 = vpop.f32.mrb[0].mxu0
  %v2354 = vadd.f32 %v2253, %v2353
  %v2355 = vpop.f32.mrb[0].mxu0
  %v2356 = vadd.f32 %v2255, %v2355
  %2357 = vmatprep.mubr.bf16.mxu0 0
  %2358 = vmatmul.mubr.bf16.gmra.mrb[0].mxu0 %v1361
  %v2359 = vpop.f32.mrb[0].mxu0
  %v2360 = vadd.f32 %v2259, %v2359
  %v2361 = vpop.f32.mrb[0].mxu0
  %v2362 = vadd.f32 %v2261, %v2361
  %v2363 = vpop.f32.mrb[0].mxu0
  %v2364 = vadd.f32 %v2263, %v2363
  %v2365 = vpop.f32.mrb[0].mxu0
  %v2366 = vadd.f32 %v2265, %v2365
  %2367 = vmatprep.mubr.bf16.mxu0 0
  %2368 = vmatmul.mubr.bf16.gmra.mrb[0].mxu0 %v1364
  %v2369 = vpop.f32.mrb[0].mxu0
  %v2370 = vadd.f32 %v2269, %v2369
  %v2371 = vpop.f32.mrb[0].mxu0
  %v2372 = vadd.f32 %v2271, %v2371
  %v2373 = vpop.f32.mrb[0].mxu0
  %v2374 = vpop.f32.mrb[0].mxu0
  %2375 = vdwg.mxu0
  %v2376 = vxor.u32 %v1502, 2147483648
  %v2377 = vxor.u32 %v1504, 2147483648
  %v2378 = vxor.u32 %v1704, 2147483648
  %v2379 = vxor.u32 %v1706, 2147483648
  %v2380 = vxor.u32 %v1906, 2147483648
  %v2381 = vxor.u32 %v1908, 2147483648
  %v2382 = vxor.u32 %v2108, 2147483648
  %v2383 = vxor.u32 %v2110, 2147483648
  %v2384 = vxor.u32 %v2310, 2147483648
  %v2385 = vxor.u32 %v2312, 2147483648
  %v2386 = vxor.u32 %v1506, 2147483648
  %v2387 = vxor.u32 %v1508, 2147483648
  %v2388 = vxor.u32 %v1708, 2147483648
  %v2389 = vxor.u32 %v1710, 2147483648
  %v2390 = vxor.u32 %v1910, 2147483648
  %v2391 = vxor.u32 %v1912, 2147483648
  %v2392 = vxor.u32 %v2112, 2147483648
  %v2393 = vxor.u32 %v2114, 2147483648
  %v2394 = vxor.u32 %v2314, 2147483648
  %v2395 = vxor.u32 %v2316, 2147483648
  %v2396 = vxor.u32 %v1512, 2147483648
  %v2397 = vxor.u32 %v1514, 2147483648
  %v2398 = vxor.u32 %v1714, 2147483648
  %v2399 = vxor.u32 %v1716, 2147483648
  %v2400 = vxor.u32 %v1916, 2147483648
  %v2401 = vxor.u32 %v1918, 2147483648
  %v2402 = vxor.u32 %v2118, 2147483648
  %v2403 = vxor.u32 %v2120, 2147483648
  %v2404 = vxor.u32 %v2320, 2147483648
  %v2405 = vxor.u32 %v2322, 2147483648
  %v2406 = vxor.u32 %v1516, 2147483648
  %v2407 = vxor.u32 %v1518, 2147483648
  %v2408 = vxor.u32 %v1718, 2147483648
  %v2409 = vxor.u32 %v1720, 2147483648
  %v2410 = vxor.u32 %v1920, 2147483648
  %v2411 = vxor.u32 %v1922, 2147483648
  %v2412 = vxor.u32 %v2122, 2147483648
  %v2413 = vxor.u32 %v2124, 2147483648
  %v2414 = vxor.u32 %v2324, 2147483648
  %v2415 = vxor.u32 %v2326, 2147483648
  %v2416 = vxor.u32 %v1522, 2147483648
  %v2417 = vxor.u32 %v1524, 2147483648
  %v2418 = vxor.u32 %v1724, 2147483648
  %v2419 = vxor.u32 %v1726, 2147483648
  %v2420 = vxor.u32 %v1926, 2147483648
  %v2421 = vxor.u32 %v1928, 2147483648
  %v2422 = vxor.u32 %v2128, 2147483648
  %v2423 = vxor.u32 %v2130, 2147483648
  %v2424 = vxor.u32 %v2330, 2147483648
  %v2425 = vxor.u32 %v2332, 2147483648
  %v2426 = vxor.u32 %v1526, 2147483648
  %v2427 = vxor.u32 %v1528, 2147483648
  %v2428 = vxor.u32 %v1728, 2147483648
  %v2429 = vxor.u32 %v1730, 2147483648
  %v2430 = vxor.u32 %v1930, 2147483648
  %v2431 = vxor.u32 %v1932, 2147483648
  %v2432 = vxor.u32 %v2132, 2147483648
  %v2433 = vxor.u32 %v2134, 2147483648
  %v2434 = vxor.u32 %v2334, 2147483648
  %v2435 = vxor.u32 %v2336, 2147483648
  %v2436 = vxor.u32 %v1532, 2147483648
  %v2437 = vxor.u32 %v1534, 2147483648
  %v2438 = vxor.u32 %v1734, 2147483648
  %v2439 = vxor.u32 %v1736, 2147483648
  %v2440 = vxor.u32 %v1936, 2147483648
  %v2441 = vxor.u32 %v1938, 2147483648
  %v2442 = vxor.u32 %v2138, 2147483648
  %v2443 = vxor.u32 %v2140, 2147483648
  %v2444 = vxor.u32 %v2340, 2147483648
  %v2445 = vxor.u32 %v2342, 2147483648
  %v2446 = vxor.u32 %v1536, 2147483648
  %v2447 = vxor.u32 %v1538, 2147483648
  %v2448 = vxor.u32 %v1738, 2147483648
  %v2449 = vxor.u32 %v1740, 2147483648
  %v2450 = vxor.u32 %v1940, 2147483648
  %v2451 = vxor.u32 %v1942, 2147483648
  %v2452 = vxor.u32 %v2142, 2147483648
  %v2453 = vxor.u32 %v2144, 2147483648
  %v2454 = vxor.u32 %v2344, 2147483648
  %v2455 = vxor.u32 %v2346, 2147483648
  %v2456 = vxor.u32 %v1542, 2147483648
  %v2457 = vxor.u32 %v1544, 2147483648
  %v2458 = vxor.u32 %v1744, 2147483648
  %v2459 = vxor.u32 %v1746, 2147483648
  %v2460 = vxor.u32 %v1946, 2147483648
  %v2461 = vxor.u32 %v1948, 2147483648
  %v2462 = vxor.u32 %v2148, 2147483648
  %v2463 = vxor.u32 %v2150, 2147483648
  %v2464 = vxor.u32 %v2350, 2147483648
  %v2465 = vxor.u32 %v2352, 2147483648
  %v2466 = vxor.u32 %v1546, 2147483648
  %v2467 = vxor.u32 %v1548, 2147483648
  %v2468 = vxor.u32 %v1748, 2147483648
  %v2469 = vxor.u32 %v1750, 2147483648
  %v2470 = vxor.u32 %v1950, 2147483648
  %v2471 = vxor.u32 %v1952, 2147483648
  %v2472 = vxor.u32 %v2152, 2147483648
  %v2473 = vxor.u32 %v2154, 2147483648
  %v2474 = vxor.u32 %v2354, 2147483648
  %v2475 = vxor.u32 %v2356, 2147483648
  %v2476 = vxor.u32 %v1552, 2147483648
  %v2477 = vxor.u32 %v1554, 2147483648
  %v2478 = vxor.u32 %v1754, 2147483648
  %v2479 = vxor.u32 %v1756, 2147483648
  %v2480 = vxor.u32 %v1956, 2147483648
  %v2481 = vxor.u32 %v1958, 2147483648
  %v2482 = vxor.u32 %v2158, 2147483648
  %v2483 = vxor.u32 %v2160, 2147483648
  %v2484 = vxor.u32 %v2360, 2147483648
  %v2485 = vxor.u32 %v2362, 2147483648
  %v2486 = vxor.u32 %v1556, 2147483648
  %v2487 = vxor.u32 %v1558, 2147483648
  %v2488 = vxor.u32 %v1758, 2147483648
  %v2489 = vxor.u32 %v1760, 2147483648
  %v2490 = vxor.u32 %v1960, 2147483648
  %v2491 = vxor.u32 %v1962, 2147483648
  %v2492 = vxor.u32 %v2162, 2147483648
  %v2493 = vxor.u32 %v2164, 2147483648
  %v2494 = vxor.u32 %v2364, 2147483648
  %v2495 = vxor.u32 %v2366, 2147483648
  %v2496 = vxor.u32 %v1562, 2147483648
  %v2497 = vxor.u32 %v1564, 2147483648
  %v2498 = vxor.u32 %v1764, 2147483648
  %v2499 = vxor.u32 %v1766, 2147483648
  %v2500 = vxor.u32 %v1966, 2147483648
  %v2501 = vxor.u32 %v1968, 2147483648
  %v2502 = vxor.u32 %v2168, 2147483648
  %v2503 = vxor.u32 %v2170, 2147483648
  %v2504 = vxor.u32 %v2370, 2147483648
  %v2505 = vxor.u32 %v2372, 2147483648
  %v2506 = vmul.f32 %v2376, 1.442695
  %v2507 = vpow.pop %v2506
  %v2508 = vmul.f32 %v2377, 1.442695
  %v2509 = vpow.pop %v2508
  %v2510 = vmul.f32 %v2378, 1.442695
  %v2511 = vpow.pop %v2510
  %v2512 = vmul.f32 %v2379, 1.442695
  %v2513 = vpow.pop %v2512
  %v2514 = vmul.f32 %v2380, 1.442695
  %v2515 = vpow.pop %v2514
  %v2516 = vmul.f32 %v2381, 1.442695
  %v2517 = vpow.pop %v2516
  %v2518 = vmul.f32 %v2382, 1.442695
  %v2519 = vpow.pop %v2518
  %v2520 = vmul.f32 %v2383, 1.442695
  %v2521 = vpow.pop %v2520
  %v2522 = vmul.f32 %v2384, 1.442695
  %v2523 = vpow.pop %v2522
  %v2524 = vmul.f32 %v2385, 1.442695
  %v2525 = vpow.pop %v2524
  %v2526 = vmul.f32 %v2386, 1.442695
  %v2527 = vpow.pop %v2526
  %v2528 = vmul.f32 %v2387, 1.442695
  %v2529 = vpow.pop %v2528
  %v2530 = vmul.f32 %v2388, 1.442695
  %v2531 = vpow.pop %v2530
  %v2532 = vmul.f32 %v2389, 1.442695
  %v2533 = vpow.pop %v2532
  %v2534 = vmul.f32 %v2390, 1.442695
  %v2535 = vpow.pop %v2534
  %v2536 = vmul.f32 %v2391, 1.442695
  %v2537 = vpow.pop %v2536
  %v2538 = vmul.f32 %v2392, 1.442695
  %v2539 = vpow.pop %v2538
  %v2540 = vmul.f32 %v2393, 1.442695
  %v2541 = vpow.pop %v2540
  %v2542 = vmul.f32 %v2394, 1.442695
  %v2543 = vpow.pop %v2542
  %v2544 = vmul.f32 %v2395, 1.442695
  %v2545 = vpow.pop %v2544
  %v2546 = vmul.f32 %v2396, 1.442695
  %v2547 = vpow.pop %v2546
  %v2548 = vmul.f32 %v2397, 1.442695
  %v2549 = vpow.pop %v2548
  %v2550 = vmul.f32 %v2398, 1.442695
  %v2551 = vpow.pop %v2550
  %v2552 = vmul.f32 %v2399, 1.442695
  %v2553 = vpow.pop %v2552
  %v2554 = vmul.f32 %v2400, 1.442695
  %v2555 = vpow.pop %v2554
  %v2556 = vmul.f32 %v2401, 1.442695
  %v2557 = vpow.pop %v2556
  %v2558 = vmul.f32 %v2402, 1.442695
  %v2559 = vpow.pop %v2558
  %v2560 = vmul.f32 %v2403, 1.442695
  %v2561 = vpow.pop %v2560
  %v2562 = vmul.f32 %v2404, 1.442695
  %v2563 = vpow.pop %v2562
  %v2564 = vmul.f32 %v2405, 1.442695
  %v2565 = vpow.pop %v2564
  %v2566 = vmul.f32 %v2406, 1.442695
  %v2567 = vpow.pop %v2566
  %v2568 = vmul.f32 %v2407, 1.442695
  %v2569 = vpow.pop %v2568
  %v2570 = vmul.f32 %v2408, 1.442695
  %v2571 = vpow.pop %v2570
  %v2572 = vmul.f32 %v2409, 1.442695
  %v2573 = vpow.pop %v2572
  %v2574 = vmul.f32 %v2410, 1.442695
  %v2575 = vpow.pop %v2574
  %v2576 = vmul.f32 %v2411, 1.442695
  %v2577 = vpow.pop %v2576
  %v2578 = vmul.f32 %v2412, 1.442695
  %v2579 = vpow.pop %v2578
  %v2580 = vmul.f32 %v2413, 1.442695
  %v2581 = vpow.pop %v2580
  %v2582 = vmul.f32 %v2414, 1.442695
  %v2583 = vpow.pop %v2582
  %v2584 = vmul.f32 %v2415, 1.442695
  %v2585 = vpow.pop %v2584
  %v2586 = vmul.f32 %v2416, 1.442695
  %v2587 = vpow.pop %v2586
  %v2588 = vmul.f32 %v2417, 1.442695
  %v2589 = vpow.pop %v2588
  %v2590 = vmul.f32 %v2418, 1.442695
  %v2591 = vpow.pop %v2590
  %v2592 = vmul.f32 %v2419, 1.442695
  %v2593 = vpow.pop %v2592
  %v2594 = vmul.f32 %v2420, 1.442695
  %v2595 = vpow.pop %v2594
  %v2596 = vmul.f32 %v2421, 1.442695
  %v2597 = vpow.pop %v2596
  %v2598 = vmul.f32 %v2422, 1.442695
  %v2599 = vpow.pop %v2598
  %v2600 = vmul.f32 %v2423, 1.442695
  %v2601 = vpow.pop %v2600
  %v2602 = vmul.f32 %v2424, 1.442695
  %v2603 = vpow.pop %v2602
  %v2604 = vmul.f32 %v2425, 1.442695
  %v2605 = vpow.pop %v2604
  %v2606 = vmul.f32 %v2426, 1.442695
  %v2607 = vpow.pop %v2606
  %v2608 = vmul.f32 %v2427, 1.442695
  %v2609 = vpow.pop %v2608
  %v2610 = vmul.f32 %v2428, 1.442695
  %v2611 = vpow.pop %v2610
  %v2612 = vmul.f32 %v2429, 1.442695
  %v2613 = vpow.pop %v2612
  %v2614 = vmul.f32 %v2430, 1.442695
  %v2615 = vpow.pop %v2614
  %v2616 = vmul.f32 %v2431, 1.442695
  %v2617 = vpow.pop %v2616
  %v2618 = vmul.f32 %v2432, 1.442695
  %v2619 = vpow.pop %v2618
  %v2620 = vmul.f32 %v2433, 1.442695
  %v2621 = vpow.pop %v2620
  %v2622 = vmul.f32 %v2434, 1.442695
  %v2623 = vpow.pop %v2622
  %v2624 = vmul.f32 %v2435, 1.442695
  %v2625 = vpow.pop %v2624
  %v2626 = vmul.f32 %v2436, 1.442695
  %v2627 = vpow.pop %v2626
  %v2628 = vmul.f32 %v2437, 1.442695
  %v2629 = vpow.pop %v2628
  %v2630 = vmul.f32 %v2438, 1.442695
  %v2631 = vpow.pop %v2630
  %v2632 = vmul.f32 %v2439, 1.442695
  %v2633 = vpow.pop %v2632
  %v2634 = vmul.f32 %v2440, 1.442695
  %v2635 = vpow.pop %v2634
  %v2636 = vmul.f32 %v2441, 1.442695
  %v2637 = vpow.pop %v2636
  %v2638 = vmul.f32 %v2442, 1.442695
  %v2639 = vpow.pop %v2638
  %v2640 = vmul.f32 %v2443, 1.442695
  %v2641 = vpow.pop %v2640
  %v2642 = vmul.f32 %v2444, 1.442695
  %v2643 = vpow.pop %v2642
  %v2644 = vmul.f32 %v2445, 1.442695
  %v2645 = vpow.pop %v2644
  %v2646 = vmul.f32 %v2446, 1.442695
  %v2647 = vpow.pop %v2646
  %v2648 = vmul.f32 %v2447, 1.442695
  %v2649 = vpow.pop %v2648
  %v2650 = vmul.f32 %v2448, 1.442695
  %v2651 = vpow.pop %v2650
  %v2652 = vmul.f32 %v2449, 1.442695
  %v2653 = vpow.pop %v2652
  %v2654 = vmul.f32 %v2450, 1.442695
  %v2655 = vpow.pop %v2654
  %v2656 = vmul.f32 %v2451, 1.442695
  %v2657 = vpow.pop %v2656
  %v2658 = vmul.f32 %v2452, 1.442695
  %v2659 = vpow.pop %v2658
  %v2660 = vmul.f32 %v2453, 1.442695
  %v2661 = vpow.pop %v2660
  %v2662 = vmul.f32 %v2454, 1.442695
  %v2663 = vpow.pop %v2662
  %v2664 = vmul.f32 %v2455, 1.442695
  %v2665 = vpow.pop %v2664
  %v2666 = vmul.f32 %v2456, 1.442695
  %v2667 = vpow.pop %v2666
  %v2668 = vmul.f32 %v2457, 1.442695
  %v2669 = vpow.pop %v2668
  %v2670 = vmul.f32 %v2458, 1.442695
  %v2671 = vpow.pop %v2670
  %v2672 = vmul.f32 %v2459, 1.442695
  %v2673 = vpow.pop %v2672
  %v2674 = vmul.f32 %v2460, 1.442695
  %v2675 = vpow.pop %v2674
  %v2676 = vmul.f32 %v2461, 1.442695
  %v2677 = vpow.pop %v2676
  %v2678 = vmul.f32 %v2462, 1.442695
  %v2679 = vpow.pop %v2678
  %v2680 = vmul.f32 %v2463, 1.442695
  %v2681 = vpow.pop %v2680
  %v2682 = vmul.f32 %v2464, 1.442695
  %v2683 = vpow.pop %v2682
  %v2684 = vmul.f32 %v2465, 1.442695
  %v2685 = vpow.pop %v2684
  %v2686 = vmul.f32 %v2466, 1.442695
  %v2687 = vpow.pop %v2686
  %v2688 = vmul.f32 %v2467, 1.442695
  %v2689 = vpow.pop %v2688
  %v2690 = vmul.f32 %v2468, 1.442695
  %v2691 = vpow.pop %v2690
  %v2692 = vmul.f32 %v2469, 1.442695
  %v2693 = vpow.pop %v2692
  %v2694 = vmul.f32 %v2470, 1.442695
  %v2695 = vpow.pop %v2694
  %v2696 = vmul.f32 %v2471, 1.442695
  %v2697 = vpow.pop %v2696
  %v2698 = vmul.f32 %v2472, 1.442695
  %v2699 = vpow.pop %v2698
  %v2700 = vmul.f32 %v2473, 1.442695
  %v2701 = vpow.pop %v2700
  %v2702 = vmul.f32 %v2474, 1.442695
  %v2703 = vpow.pop %v2702
  %v2704 = vmul.f32 %v2475, 1.442695
  %v2705 = vpow.pop %v2704
  %v2706 = vmul.f32 %v2476, 1.442695
  %v2707 = vpow.pop %v2706
  %v2708 = vmul.f32 %v2477, 1.442695
  %v2709 = vpow.pop %v2708
  %v2710 = vmul.f32 %v2478, 1.442695
  %v2711 = vpow.pop %v2710
  %v2712 = vmul.f32 %v2479, 1.442695
  %v2713 = vpow.pop %v2712
  %v2714 = vmul.f32 %v2480, 1.442695
  %v2715 = vpow.pop %v2714
  %v2716 = vmul.f32 %v2481, 1.442695
  %v2717 = vpow.pop %v2716
  %v2718 = vmul.f32 %v2482, 1.442695
  %v2719 = vpow.pop %v2718
  %v2720 = vmul.f32 %v2483, 1.442695
  %v2721 = vpow.pop %v2720
  %v2722 = vmul.f32 %v2484, 1.442695
  %v2723 = vpow.pop %v2722
  %v2724 = vmul.f32 %v2485, 1.442695
  %v2725 = vpow.pop %v2724
  %v2726 = vmul.f32 %v2486, 1.442695
  %v2727 = vpow.pop %v2726
  %v2728 = vmul.f32 %v2487, 1.442695
  %v2729 = vpow.pop %v2728
  %v2730 = vmul.f32 %v2488, 1.442695
  %v2731 = vpow.pop %v2730
  %v2732 = vmul.f32 %v2489, 1.442695
  %v2733 = vpow.pop %v2732
  %v2734 = vmul.f32 %v2490, 1.442695
  %v2735 = vpow.pop %v2734
  %v2736 = vmul.f32 %v2491, 1.442695
  %v2737 = vpow.pop %v2736
  %v2738 = vmul.f32 %v2492, 1.442695
  %v2739 = vpow.pop %v2738
  %v2740 = vmul.f32 %v2493, 1.442695
  %v2741 = vpow.pop %v2740
  %v2742 = vmul.f32 %v2494, 1.442695
  %v2743 = vpow.pop %v2742
  %v2744 = vmul.f32 %v2495, 1.442695
  %v2745 = vpow.pop %v2744
  %v2746 = vmul.f32 %v2496, 1.442695
  %v2747 = vpow.pop %v2746
  %v2748 = vmul.f32 %v2497, 1.442695
  %v2749 = vpow.pop %v2748
  %v2750 = vmul.f32 %v2498, 1.442695
  %v2751 = vpow.pop %v2750
  %v2752 = vmul.f32 %v2499, 1.442695
  %v2753 = vpow.pop %v2752
  %v2754 = vmul.f32 %v2500, 1.442695
  %v2755 = vpow.pop %v2754
  %v2756 = vmul.f32 %v2501, 1.442695
  %v2757 = vpow.pop %v2756
  %v2758 = vmul.f32 %v2502, 1.442695
  %v2759 = vpow.pop %v2758
  %v2760 = vmul.f32 %v2503, 1.442695
  %v2761 = vpow.pop %v2760
  %v2762 = vmul.f32 %v2504, 1.442695
  %v2763 = vpow.pop %v2762
  %v2764 = vmul.f32 %v2505, 1.442695
  %v2765 = vpow.pop %v2764
  %v2766 = vadd.f32 %v2507, 1.0
  %v2767 = vadd.f32 %v2509, 1.0
  %v2768 = vadd.f32 %v2511, 1.0
  %v2769 = vadd.f32 %v2513, 1.0
  %v2770 = vadd.f32 %v2515, 1.0
  %v2771 = vadd.f32 %v2517, 1.0
  %v2772 = vadd.f32 %v2519, 1.0
  %v2773 = vadd.f32 %v2521, 1.0
  %v2774 = vadd.f32 %v2523, 1.0
  %v2775 = vadd.f32 %v2525, 1.0
  %v2776 = vadd.f32 %v2527, 1.0
  %v2777 = vadd.f32 %v2529, 1.0
  %v2778 = vadd.f32 %v2531, 1.0
  %v2779 = vadd.f32 %v2533, 1.0
  %v2780 = vadd.f32 %v2535, 1.0
  %v2781 = vadd.f32 %v2537, 1.0
  %v2782 = vadd.f32 %v2539, 1.0
  %v2783 = vadd.f32 %v2541, 1.0
  %v2784 = vadd.f32 %v2543, 1.0
  %v2785 = vadd.f32 %v2545, 1.0
  %v2786 = vadd.f32 %v2547, 1.0
  %v2787 = vadd.f32 %v2549, 1.0
  %v2788 = vadd.f32 %v2551, 1.0
  %v2789 = vadd.f32 %v2553, 1.0
  %v2790 = vadd.f32 %v2555, 1.0
  %v2791 = vadd.f32 %v2557, 1.0
  %v2792 = vadd.f32 %v2559, 1.0
  %v2793 = vadd.f32 %v2561, 1.0
  %v2794 = vadd.f32 %v2563, 1.0
  %v2795 = vadd.f32 %v2565, 1.0
  %v2796 = vadd.f32 %v2567, 1.0
  %v2797 = vadd.f32 %v2569, 1.0
  %v2798 = vadd.f32 %v2571, 1.0
  %v2799 = vadd.f32 %v2573, 1.0
  %v2800 = vadd.f32 %v2575, 1.0
  %v2801 = vadd.f32 %v2577, 1.0
  %v2802 = vadd.f32 %v2579, 1.0
  %v2803 = vadd.f32 %v2581, 1.0
  %v2804 = vadd.f32 %v2583, 1.0
  %v2805 = vadd.f32 %v2585, 1.0
  %v2806 = vadd.f32 %v2587, 1.0
  %v2807 = vadd.f32 %v2589, 1.0
  %v2808 = vadd.f32 %v2591, 1.0
  %v2809 = vadd.f32 %v2593, 1.0
  %v2810 = vadd.f32 %v2595, 1.0
  %v2811 = vadd.f32 %v2597, 1.0
  %v2812 = vadd.f32 %v2599, 1.0
  %v2813 = vadd.f32 %v2601, 1.0
  %v2814 = vadd.f32 %v2603, 1.0
  %v2815 = vadd.f32 %v2605, 1.0
  %v2816 = vadd.f32 %v2607, 1.0
  %v2817 = vadd.f32 %v2609, 1.0
  %v2818 = vadd.f32 %v2611, 1.0
  %v2819 = vadd.f32 %v2613, 1.0
  %v2820 = vadd.f32 %v2615, 1.0
  %v2821 = vadd.f32 %v2617, 1.0
  %v2822 = vadd.f32 %v2619, 1.0
  %v2823 = vadd.f32 %v2621, 1.0
  %v2824 = vadd.f32 %v2623, 1.0
  %v2825 = vadd.f32 %v2625, 1.0
  %v2826 = vadd.f32 %v2627, 1.0
  %v2827 = vadd.f32 %v2629, 1.0
  %v2828 = vadd.f32 %v2631, 1.0
  %v2829 = vadd.f32 %v2633, 1.0
  %v2830 = vadd.f32 %v2635, 1.0
  %v2831 = vadd.f32 %v2637, 1.0
  %v2832 = vadd.f32 %v2639, 1.0
  %v2833 = vadd.f32 %v2641, 1.0
  %v2834 = vadd.f32 %v2643, 1.0
  %v2835 = vadd.f32 %v2645, 1.0
  %v2836 = vadd.f32 %v2647, 1.0
  %v2837 = vadd.f32 %v2649, 1.0
  %v2838 = vadd.f32 %v2651, 1.0
  %v2839 = vadd.f32 %v2653, 1.0
  %v2840 = vadd.f32 %v2655, 1.0
  %v2841 = vadd.f32 %v2657, 1.0
  %v2842 = vadd.f32 %v2659, 1.0
  %v2843 = vadd.f32 %v2661, 1.0
  %v2844 = vadd.f32 %v2663, 1.0
  %v2845 = vadd.f32 %v2665, 1.0
  %v2846 = vadd.f32 %v2667, 1.0
  %v2847 = vadd.f32 %v2669, 1.0
  %v2848 = vadd.f32 %v2671, 1.0
  %v2849 = vadd.f32 %v2673, 1.0
  %v2850 = vadd.f32 %v2675, 1.0
  %v2851 = vadd.f32 %v2677, 1.0
  %v2852 = vadd.f32 %v2679, 1.0
  %v2853 = vadd.f32 %v2681, 1.0
  %v2854 = vadd.f32 %v2683, 1.0
  %v2855 = vadd.f32 %v2685, 1.0
  %v2856 = vadd.f32 %v2687, 1.0
  %v2857 = vadd.f32 %v2689, 1.0
  %v2858 = vadd.f32 %v2691, 1.0
  %v2859 = vadd.f32 %v2693, 1.0
  %v2860 = vadd.f32 %v2695, 1.0
  %v2861 = vadd.f32 %v2697, 1.0
  %v2862 = vadd.f32 %v2699, 1.0
  %v2863 = vadd.f32 %v2701, 1.0
  %v2864 = vadd.f32 %v2703, 1.0
  %v2865 = vadd.f32 %v2705, 1.0
  %v2866 = vadd.f32 %v2707, 1.0
  %v2867 = vadd.f32 %v2709, 1.0
  %v2868 = vadd.f32 %v2711, 1.0
  %v2869 = vadd.f32 %v2713, 1.0
  %v2870 = vadd.f32 %v2715, 1.0
  %v2871 = vadd.f32 %v2717, 1.0
  %v2872 = vadd.f32 %v2719, 1.0
  %v2873 = vadd.f32 %v2721, 1.0
  %v2874 = vadd.f32 %v2723, 1.0
  %v2875 = vadd.f32 %v2725, 1.0
  %v2876 = vadd.f32 %v2727, 1.0
  %v2877 = vadd.f32 %v2729, 1.0
  %v2878 = vadd.f32 %v2731, 1.0
  %v2879 = vadd.f32 %v2733, 1.0
  %v2880 = vadd.f32 %v2735, 1.0
  %v2881 = vadd.f32 %v2737, 1.0
  %v2882 = vadd.f32 %v2739, 1.0
  %v2883 = vadd.f32 %v2741, 1.0
  %v2884 = vadd.f32 %v2743, 1.0
  %v2885 = vadd.f32 %v2745, 1.0
  %v2886 = vadd.f32 %v2747, 1.0
  %v2887 = vadd.f32 %v2749, 1.0
  %v2888 = vadd.f32 %v2751, 1.0
  %v2889 = vadd.f32 %v2753, 1.0
  %v2890 = vadd.f32 %v2755, 1.0
  %v2891 = vadd.f32 %v2757, 1.0
  %v2892 = vadd.f32 %v2759, 1.0
  %v2893 = vadd.f32 %v2761, 1.0
  %v2894 = vadd.f32 %v2763, 1.0
  %v2895 = vadd.f32 %v2765, 1.0
  %v2896 = vrcp.pop %v2766
  %v2897 = vmul.f32 1.0, %v2896
  %v2898 = vrcp.pop %v2767
  %v2899 = vmul.f32 1.0, %v2898
  %v2900 = vrcp.pop %v2768
  %v2901 = vmul.f32 1.0, %v2900
  %v2902 = vrcp.pop %v2769
  %v2903 = vmul.f32 1.0, %v2902
  %v2904 = vrcp.pop %v2770
  %v2905 = vmul.f32 1.0, %v2904
  %v2906 = vrcp.pop %v2771
  %v2907 = vmul.f32 1.0, %v2906
  %v2908 = vrcp.pop %v2772
  %v2909 = vmul.f32 1.0, %v2908
  %v2910 = vrcp.pop %v2773
  %v2911 = vmul.f32 1.0, %v2910
  %v2912 = vrcp.pop %v2774
  %v2913 = vmul.f32 1.0, %v2912
  %v2914 = vrcp.pop %v2775
  %v2915 = vmul.f32 1.0, %v2914
  %v2916 = vrcp.pop %v2776
  %v2917 = vmul.f32 1.0, %v2916
  %v2918 = vrcp.pop %v2777
  %v2919 = vmul.f32 1.0, %v2918
  %v2920 = vrcp.pop %v2778
  %v2921 = vmul.f32 1.0, %v2920
  %v2922 = vrcp.pop %v2779
  %v2923 = vmul.f32 1.0, %v2922
  %v2924 = vrcp.pop %v2780
  %v2925 = vmul.f32 1.0, %v2924
  %v2926 = vrcp.pop %v2781
  %v2927 = vmul.f32 1.0, %v2926
  %v2928 = vrcp.pop %v2782
  %v2929 = vmul.f32 1.0, %v2928
  %v2930 = vrcp.pop %v2783
  %v2931 = vmul.f32 1.0, %v2930
  %v2932 = vrcp.pop %v2784
  %v2933 = vmul.f32 1.0, %v2932
  %v2934 = vrcp.pop %v2785
  %v2935 = vmul.f32 1.0, %v2934
  %v2936 = vrcp.pop %v2786
  %v2937 = vmul.f32 1.0, %v2936
  %v2938 = vrcp.pop %v2787
  %v2939 = vmul.f32 1.0, %v2938
  %v2940 = vrcp.pop %v2788
  %v2941 = vmul.f32 1.0, %v2940
  %v2942 = vrcp.pop %v2789
  %v2943 = vmul.f32 1.0, %v2942
  %v2944 = vrcp.pop %v2790
  %v2945 = vmul.f32 1.0, %v2944
  %v2946 = vrcp.pop %v2791
  %v2947 = vmul.f32 1.0, %v2946
  %v2948 = vrcp.pop %v2792
  %v2949 = vmul.f32 1.0, %v2948
  %v2950 = vrcp.pop %v2793
  %v2951 = vmul.f32 1.0, %v2950
  %v2952 = vrcp.pop %v2794
  %v2953 = vmul.f32 1.0, %v2952
  %v2954 = vrcp.pop %v2795
  %v2955 = vmul.f32 1.0, %v2954
  %v2956 = vrcp.pop %v2796
  %v2957 = vmul.f32 1.0, %v2956
  %v2958 = vrcp.pop %v2797
  %v2959 = vmul.f32 1.0, %v2958
  %v2960 = vrcp.pop %v2798
  %v2961 = vmul.f32 1.0, %v2960
  %v2962 = vrcp.pop %v2799
  %v2963 = vmul.f32 1.0, %v2962
  %v2964 = vrcp.pop %v2800
  %v2965 = vmul.f32 1.0, %v2964
  %v2966 = vrcp.pop %v2801
  %v2967 = vmul.f32 1.0, %v2966
  %v2968 = vrcp.pop %v2802
  %v2969 = vmul.f32 1.0, %v2968
  %v2970 = vrcp.pop %v2803
  %v2971 = vmul.f32 1.0, %v2970
  %v2972 = vrcp.pop %v2804
  %v2973 = vmul.f32 1.0, %v2972
  %v2974 = vrcp.pop %v2805
  %v2975 = vmul.f32 1.0, %v2974
  %v2976 = vrcp.pop %v2806
  %v2977 = vmul.f32 1.0, %v2976
  %v2978 = vrcp.pop %v2807
  %v2979 = vmul.f32 1.0, %v2978
  %v2980 = vrcp.pop %v2808
  %v2981 = vmul.f32 1.0, %v2980
  %v2982 = vrcp.pop %v2809
  %v2983 = vmul.f32 1.0, %v2982
  %v2984 = vrcp.pop %v2810
  %v2985 = vmul.f32 1.0, %v2984
  %v2986 = vrcp.pop %v2811
  %v2987 = vmul.f32 1.0, %v2986
  %v2988 = vrcp.pop %v2812
  %v2989 = vmul.f32 1.0, %v2988
  %v2990 = vrcp.pop %v2813
  %v2991 = vmul.f32 1.0, %v2990
  %v2992 = vrcp.pop %v2814
  %v2993 = vmul.f32 1.0, %v2992
  %v2994 = vrcp.pop %v2815
  %v2995 = vmul.f32 1.0, %v2994
  %v2996 = vrcp.pop %v2816
  %v2997 = vmul.f32 1.0, %v2996
  %v2998 = vrcp.pop %v2817
  %v2999 = vmul.f32 1.0, %v2998
  %v3000 = vrcp.pop %v2818
  %v3001 = vmul.f32 1.0, %v3000
  %v3002 = vrcp.pop %v2819
  %v3003 = vmul.f32 1.0, %v3002
  %v3004 = vrcp.pop %v2820
  %v3005 = vmul.f32 1.0, %v3004
  %v3006 = vrcp.pop %v2821
  %v3007 = vmul.f32 1.0, %v3006
  %v3008 = vrcp.pop %v2822
  %v3009 = vmul.f32 1.0, %v3008
  %v3010 = vrcp.pop %v2823
  %v3011 = vmul.f32 1.0, %v3010
  %v3012 = vrcp.pop %v2824
  %v3013 = vmul.f32 1.0, %v3012
  %v3014 = vrcp.pop %v2825
  %v3015 = vmul.f32 1.0, %v3014
  %v3016 = vrcp.pop %v2826
  %v3017 = vmul.f32 1.0, %v3016
  %v3018 = vrcp.pop %v2827
  %v3019 = vmul.f32 1.0, %v3018
  %v3020 = vrcp.pop %v2828
  %v3021 = vmul.f32 1.0, %v3020
  %v3022 = vrcp.pop %v2829
  %v3023 = vmul.f32 1.0, %v3022
  %v3024 = vrcp.pop %v2830
  %v3025 = vmul.f32 1.0, %v3024
  %v3026 = vrcp.pop %v2831
  %v3027 = vmul.f32 1.0, %v3026
  %v3028 = vrcp.pop %v2832
  %v3029 = vmul.f32 1.0, %v3028
  %v3030 = vrcp.pop %v2833
  %v3031 = vmul.f32 1.0, %v3030
  %v3032 = vrcp.pop %v2834
  %v3033 = vmul.f32 1.0, %v3032
  %v3034 = vrcp.pop %v2835
  %v3035 = vmul.f32 1.0, %v3034
  %v3036 = vrcp.pop %v2836
  %v3037 = vmul.f32 1.0, %v3036
  %v3038 = vrcp.pop %v2837
  %v3039 = vmul.f32 1.0, %v3038
  %v3040 = vrcp.pop %v2838
  %v3041 = vmul.f32 1.0, %v3040
  %v3042 = vrcp.pop %v2839
  %v3043 = vmul.f32 1.0, %v3042
  %v3044 = vrcp.pop %v2840
  %v3045 = vmul.f32 1.0, %v3044
  %v3046 = vrcp.pop %v2841
  %v3047 = vmul.f32 1.0, %v3046
  %v3048 = vrcp.pop %v2842
  %v3049 = vmul.f32 1.0, %v3048
  %v3050 = vrcp.pop %v2843
  %v3051 = vmul.f32 1.0, %v3050
  %v3052 = vrcp.pop %v2844
  %v3053 = vmul.f32 1.0, %v3052
  %v3054 = vrcp.pop %v2845
  %v3055 = vmul.f32 1.0, %v3054
  %v3056 = vrcp.pop %v2846
  %v3057 = vmul.f32 1.0, %v3056
  %v3058 = vrcp.pop %v2847
  %v3059 = vmul.f32 1.0, %v3058
  %v3060 = vrcp.pop %v2848
  %v3061 = vmul.f32 1.0, %v3060
  %v3062 = vrcp.pop %v2849
  %v3063 = vmul.f32 1.0, %v3062
  %v3064 = vrcp.pop %v2850
  %v3065 = vmul.f32 1.0, %v3064
  %v3066 = vrcp.pop %v2851
  %v3067 = vmul.f32 1.0, %v3066
  %v3068 = vrcp.pop %v2852
  %v3069 = vmul.f32 1.0, %v3068
  %v3070 = vrcp.pop %v2853
  %v3071 = vmul.f32 1.0, %v3070
  %v3072 = vrcp.pop %v2854
  %v3073 = vmul.f32 1.0, %v3072
  %v3074 = vrcp.pop %v2855
  %v3075 = vmul.f32 1.0, %v3074
  %v3076 = vrcp.pop %v2856
  %v3077 = vmul.f32 1.0, %v3076
  %v3078 = vrcp.pop %v2857
  %v3079 = vmul.f32 1.0, %v3078
  %v3080 = vrcp.pop %v2858
  %v3081 = vmul.f32 1.0, %v3080
  %v3082 = vrcp.pop %v2859
  %v3083 = vmul.f32 1.0, %v3082
  %v3084 = vrcp.pop %v2860
  %v3085 = vmul.f32 1.0, %v3084
  %v3086 = vrcp.pop %v2861
  %v3087 = vmul.f32 1.0, %v3086
  %v3088 = vrcp.pop %v2862
  %v3089 = vmul.f32 1.0, %v3088
  %v3090 = vrcp.pop %v2863
  %v3091 = vmul.f32 1.0, %v3090
  %v3092 = vrcp.pop %v2864
  %v3093 = vmul.f32 1.0, %v3092
  %v3094 = vrcp.pop %v2865
  %v3095 = vmul.f32 1.0, %v3094
  %v3096 = vrcp.pop %v2866
  %v3097 = vmul.f32 1.0, %v3096
  %v3098 = vrcp.pop %v2867
  %v3099 = vmul.f32 1.0, %v3098
  %v3100 = vrcp.pop %v2868
  %v3101 = vmul.f32 1.0, %v3100
  %v3102 = vrcp.pop %v2869
  %v3103 = vmul.f32 1.0, %v3102
  %v3104 = vrcp.pop %v2870
  %v3105 = vmul.f32 1.0, %v3104
  %v3106 = vrcp.pop %v2871
  %v3107 = vmul.f32 1.0, %v3106
  %v3108 = vrcp.pop %v2872
  %v3109 = vmul.f32 1.0, %v3108
  %v3110 = vrcp.pop %v2873
  %v3111 = vmul.f32 1.0, %v3110
  %v3112 = vrcp.pop %v2874
  %v3113 = vmul.f32 1.0, %v3112
  %v3114 = vrcp.pop %v2875
  %v3115 = vmul.f32 1.0, %v3114
  %v3116 = vrcp.pop %v2876
  %v3117 = vmul.f32 1.0, %v3116
  %v3118 = vrcp.pop %v2877
  %v3119 = vmul.f32 1.0, %v3118
  %v3120 = vrcp.pop %v2878
  %v3121 = vmul.f32 1.0, %v3120
  %v3122 = vrcp.pop %v2879
  %v3123 = vmul.f32 1.0, %v3122
  %v3124 = vrcp.pop %v2880
  %v3125 = vmul.f32 1.0, %v3124
  %v3126 = vrcp.pop %v2881
  %v3127 = vmul.f32 1.0, %v3126
  %v3128 = vrcp.pop %v2882
  %v3129 = vmul.f32 1.0, %v3128
  %v3130 = vrcp.pop %v2883
  %v3131 = vmul.f32 1.0, %v3130
  %v3132 = vrcp.pop %v2884
  %v3133 = vmul.f32 1.0, %v3132
  %v3134 = vrcp.pop %v2885
  %v3135 = vmul.f32 1.0, %v3134
  %v3136 = vrcp.pop %v2886
  %v3137 = vmul.f32 1.0, %v3136
  %v3138 = vrcp.pop %v2887
  %v3139 = vmul.f32 1.0, %v3138
  %v3140 = vrcp.pop %v2888
  %v3141 = vmul.f32 1.0, %v3140
  %v3142 = vrcp.pop %v2889
  %v3143 = vmul.f32 1.0, %v3142
  %v3144 = vrcp.pop %v2890
  %v3145 = vmul.f32 1.0, %v3144
  %v3146 = vrcp.pop %v2891
  %v3147 = vmul.f32 1.0, %v3146
  %v3148 = vrcp.pop %v2892
  %v3149 = vmul.f32 1.0, %v3148
  %v3150 = vrcp.pop %v2893
  %v3151 = vmul.f32 1.0, %v3150
  %v3152 = vrcp.pop %v2894
  %v3153 = vmul.f32 1.0, %v3152
  %v3154 = vrcp.pop %v2895
  %v3155 = vmul.f32 1.0, %v3154
  %v3156 = vmul.f32 %v1502, %v2897
  %v3157 = vmul.f32 %v1504, %v2899
  %v3158 = vmul.f32 %v1704, %v2901
  %v3159 = vmul.f32 %v1706, %v2903
  %v3160 = vmul.f32 %v1906, %v2905
  %v3161 = vmul.f32 %v1908, %v2907
  %v3162 = vmul.f32 %v2108, %v2909
  %v3163 = vmul.f32 %v2110, %v2911
  %v3164 = vmul.f32 %v2310, %v2913
  %v3165 = vmul.f32 %v2312, %v2915
  %v3166 = vmul.f32 %v1506, %v2917
  %v3167 = vmul.f32 %v1508, %v2919
  %v3168 = vmul.f32 %v1708, %v2921
  %v3169 = vmul.f32 %v1710, %v2923
  %v3170 = vmul.f32 %v1910, %v2925
  %v3171 = vmul.f32 %v1912, %v2927
  %v3172 = vmul.f32 %v2112, %v2929
  %v3173 = vmul.f32 %v2114, %v2931
  %v3174 = vmul.f32 %v2314, %v2933
  %v3175 = vmul.f32 %v2316, %v2935
  %v3176 = vmul.f32 %v1512, %v2937
  %v3177 = vmul.f32 %v1514, %v2939
  %v3178 = vmul.f32 %v1714, %v2941
  %v3179 = vmul.f32 %v1716, %v2943
  %v3180 = vmul.f32 %v1916, %v2945
  %v3181 = vmul.f32 %v1918, %v2947
  %v3182 = vmul.f32 %v2118, %v2949
  %v3183 = vmul.f32 %v2120, %v2951
  %v3184 = vmul.f32 %v2320, %v2953
  %v3185 = vmul.f32 %v2322, %v2955
  %v3186 = vmul.f32 %v1516, %v2957
  %v3187 = vmul.f32 %v1518, %v2959
  %v3188 = vmul.f32 %v1718, %v2961
  %v3189 = vmul.f32 %v1720, %v2963
  %v3190 = vmul.f32 %v1920, %v2965
  %v3191 = vmul.f32 %v1922, %v2967
  %v3192 = vmul.f32 %v2122, %v2969
  %v3193 = vmul.f32 %v2124, %v2971
  %v3194 = vmul.f32 %v2324, %v2973
  %v3195 = vmul.f32 %v2326, %v2975
  %v3196 = vmul.f32 %v1522, %v2977
  %v3197 = vmul.f32 %v1524, %v2979
  %v3198 = vmul.f32 %v1724, %v2981
  %v3199 = vmul.f32 %v1726, %v2983
  %v3200 = vmul.f32 %v1926, %v2985
  %v3201 = vmul.f32 %v1928, %v2987
  %v3202 = vmul.f32 %v2128, %v2989
  %v3203 = vmul.f32 %v2130, %v2991
  %v3204 = vmul.f32 %v2330, %v2993
  %v3205 = vmul.f32 %v2332, %v2995
  %v3206 = vmul.f32 %v1526, %v2997
  %v3207 = vmul.f32 %v1528, %v2999
  %v3208 = vmul.f32 %v1728, %v3001
  %v3209 = vmul.f32 %v1730, %v3003
  %v3210 = vmul.f32 %v1930, %v3005
  %v3211 = vmul.f32 %v1932, %v3007
  %v3212 = vmul.f32 %v2132, %v3009
  %v3213 = vmul.f32 %v2134, %v3011
  %v3214 = vmul.f32 %v2334, %v3013
  %v3215 = vmul.f32 %v2336, %v3015
  %v3216 = vmul.f32 %v1532, %v3017
  %v3217 = vmul.f32 %v1534, %v3019
  %v3218 = vmul.f32 %v1734, %v3021
  %v3219 = vmul.f32 %v1736, %v3023
  %v3220 = vmul.f32 %v1936, %v3025
  %v3221 = vmul.f32 %v1938, %v3027
  %v3222 = vmul.f32 %v2138, %v3029
  %v3223 = vmul.f32 %v2140, %v3031
  %v3224 = vmul.f32 %v2340, %v3033
  %v3225 = vmul.f32 %v2342, %v3035
  %v3226 = vmul.f32 %v1536, %v3037
  %v3227 = vmul.f32 %v1538, %v3039
  %v3228 = vmul.f32 %v1738, %v3041
  %v3229 = vmul.f32 %v1740, %v3043
  %v3230 = vmul.f32 %v1940, %v3045
  %v3231 = vmul.f32 %v1942, %v3047
  %v3232 = vmul.f32 %v2142, %v3049
  %v3233 = vmul.f32 %v2144, %v3051
  %v3234 = vmul.f32 %v2344, %v3053
  %v3235 = vmul.f32 %v2346, %v3055
  %v3236 = vmul.f32 %v1542, %v3057
  %v3237 = vmul.f32 %v1544, %v3059
  %v3238 = vmul.f32 %v1744, %v3061
  %v3239 = vmul.f32 %v1746, %v3063
  %v3240 = vmul.f32 %v1946, %v3065
  %v3241 = vmul.f32 %v1948, %v3067
  %v3242 = vmul.f32 %v2148, %v3069
  %v3243 = vmul.f32 %v2150, %v3071
  %v3244 = vmul.f32 %v2350, %v3073
  %v3245 = vmul.f32 %v2352, %v3075
  %v3246 = vmul.f32 %v1546, %v3077
  %v3247 = vmul.f32 %v1548, %v3079
  %v3248 = vmul.f32 %v1748, %v3081
  %v3249 = vmul.f32 %v1750, %v3083
  %v3250 = vmul.f32 %v1950, %v3085
  %v3251 = vmul.f32 %v1952, %v3087
  %v3252 = vmul.f32 %v2152, %v3089
  %v3253 = vmul.f32 %v2154, %v3091
  %v3254 = vmul.f32 %v2354, %v3093
  %v3255 = vmul.f32 %v2356, %v3095
  %v3256 = vmul.f32 %v1552, %v3097
  %v3257 = vmul.f32 %v1554, %v3099
  %v3258 = vmul.f32 %v1754, %v3101
  %v3259 = vmul.f32 %v1756, %v3103
  %v3260 = vmul.f32 %v1956, %v3105
  %v3261 = vmul.f32 %v1958, %v3107
  %v3262 = vmul.f32 %v2158, %v3109
  %v3263 = vmul.f32 %v2160, %v3111
  %v3264 = vmul.f32 %v2360, %v3113
  %v3265 = vmul.f32 %v2362, %v3115
  %v3266 = vmul.f32 %v1556, %v3117
  %v3267 = vmul.f32 %v1558, %v3119
  %v3268 = vmul.f32 %v1758, %v3121
  %v3269 = vmul.f32 %v1760, %v3123
  %v3270 = vmul.f32 %v1960, %v3125
  %v3271 = vmul.f32 %v1962, %v3127
  %v3272 = vmul.f32 %v2162, %v3129
  %v3273 = vmul.f32 %v2164, %v3131
  %v3274 = vmul.f32 %v2364, %v3133
  %v3275 = vmul.f32 %v2366, %v3135
  %v3276 = vmul.f32 %v1562, %v3137
  %v3277 = vmul.f32 %v1564, %v3139
  %v3278 = vmul.f32 %v1764, %v3141
  %v3279 = vmul.f32 %v1766, %v3143
  %v3280 = vmul.f32 %v1966, %v3145
  %v3281 = vmul.f32 %v1968, %v3147
  %v3282 = vmul.f32 %v2168, %v3149
  %v3283 = vmul.f32 %v2170, %v3151
  %v3284 = vmul.f32 %v2370, %v3153
  %v3285 = vmul.f32 %v2372, %v3155
  %v3286 = vld [vmem:[%s2] sm:$0x3]
  %vm3287 = vcmask 850944
  %v3289 = vsel %vm3287, %v3286, 0
  %3291 = vmatprep.subr.mxu0 %v3157
  %3292 = vmatpush1.msra.mxu0 %v3156
  %3293 = vmatprep.subr.mxu0 %v3167
  %3294 = vmatpush1.msra.mxu0 %v3166
  %3295 = vmatprep.subr.mxu0 %v3177
  %3296 = vmatpush1.msra.mxu0 %v3176
  %3297 = vmatprep.subr.mxu0 %v3187
  %3298 = vmatpush1.msra.mxu0 %v3186
  %3299 = vmatprep.subr.mxu0 %v3197
  %3300 = vmatpush1.msra.mxu0 %v3196
  %3301 = vmatprep.subr.mxu0 %v3207
  %3302 = vmatpush1.msra.mxu0 %v3206
  %3303 = vmatprep.subr.mxu0 %v3217
  %3304 = vmatpush1.msra.mxu0 %v3216
  %3305 = vmatprep.subr.mxu0 %v3227
  %3306 = vmatpush1.msra.mxu0 %v3226
  %3307 = vmatprep.subr.mxu0 %v3237
  %3308 = vmatpush1.msra.mxu0 %v3236
  %3309 = vmatprep.subr.mxu0 %v3247
  %3310 = vmatpush1.msra.mxu0 %v3246
  %3311 = vmatprep.subr.mxu0 %v3257
  %3312 = vmatpush1.msra.mxu0 %v3256
  %3313 = vmatprep.subr.mxu0 %v3267
  %3314 = vmatpush1.msra.mxu0 %v3266
  %3315 = vmatprep.subr.mxu0 %v3277
  %3316 = vmatpush1.msra.mxu0 %v3276
  %3317 = vmatprep.subr.mxu0 0.0
  %3318 = vmatpush1.msra.mxu0 0.0
  %3319 = vmatprep.subr.mxu0 0.0
  %3320 = vmatpush1.msra.mxu0 0.0
  %3321 = vmatprep.subr.mxu0 0.0
  %3322 = vmatpush1.msra.mxu0 0.0
  %3323 = vmatprep.subr.mxu0 0.0
  %3324 = vmatpush1.msra.mxu0 0.0
  %3325 = vmatprep.subr.mxu0 0.0
  %3326 = vmatpush1.msra.mxu0 0.0
  %3327 = vmatprep.subr.mxu0 0.0
  %3328 = vmatpush1.msra.mxu0 0.0
  %3329 = vmatprep.subr.mxu0 0.0
  %3330 = vmatpush1.msra.mxu0 0.0
  %3331 = vmatprep.subr.mxu0 0.0
  %3332 = vmatpush1.msra.mxu0 0.0
  %3333 = vmatprep.subr.mxu0 0.0
  %3334 = vmatpush1.msra.mxu0 0.0
  %3335 = vmatprep.subr.mxu0 0.0
  %3336 = vmatpush1.msra.mxu0 0.0
  %3337 = vmatprep.subr.mxu0 0.0
  %3338 = vmatpush1.msra.mxu0 0.0
  %3339 = vmatprep.subr.mxu0 0.0
  %3340 = vmatpush1.msra.mxu0 0.0
  %3341 = vmatprep.subr.mxu0 0.0
  %3342 = vmatpush1.msra.mxu0 0.0
  %3343 = vmatprep.subr.mxu0 0.0
  %3344 = vmatpush1.msra.mxu0 0.0
  %3345 = vmatprep.subr.mxu0 0.0
  %3346 = vmatpush1.msra.mxu0 0.0
  %3347 = vmatprep.subr.mxu0 0.0
  %3348 = vmatpush1.msra.mxu0 0.0
  %3349 = vmatprep.subr.mxu0 0.0
  %3350 = vmatpush1.msra.mxu0 0.0
  %3351 = vmatprep.subr.mxu0 0.0
  %3352 = vmatpush1.msra.mxu0 0.0
  %3353 = vmatprep.subr.mxu0 0.0
  %3354 = vmatpush1.msra.mxu0 0.0
  %3355 = vmatprep.mubr.f32.mxu0 0.0
  %3356 = vmatmul.mubr.f32.gmra.mrb[0].mxu0 %v3289
  %v3357 = vpop.f32.mrb[0].mxu0
  %v3358 = vadd.f32 0.0, %v3357
  %v3359 = vpop.f32.mrb[0].mxu0
  %v3360 = vadd.f32 0.0, %v3359
  %3361 = vdwg.mxu0
  %3362 = vmatprep.subr.mxu0 %v3159
  %3363 = vmatpush1.msra.mxu0 %v3158
  %3364 = vmatprep.subr.mxu0 %v3169
  %3365 = vmatpush1.msra.mxu0 %v3168
  %3366 = vmatprep.subr.mxu0 %v3179
  %3367 = vmatpush1.msra.mxu0 %v3178
  %3368 = vmatprep.subr.mxu0 %v3189
  %3369 = vmatpush1.msra.mxu0 %v3188
  %3370 = vmatprep.subr.mxu0 %v3199
  %3371 = vmatpush1.msra.mxu0 %v3198
  %3372 = vmatprep.subr.mxu0 %v3209
  %3373 = vmatpush1.msra.mxu0 %v3208
  %3374 = vmatprep.subr.mxu0 %v3219
  %3375 = vmatpush1.msra.mxu0 %v3218
  %3376 = vmatprep.subr.mxu0 %v3229
  %3377 = vmatpush1.msra.mxu0 %v3228
  %3378 = vmatprep.subr.mxu0 %v3239
  %3379 = vmatpush1.msra.mxu0 %v3238
  %3380 = vmatprep.subr.mxu0 %v3249
  %3381 = vmatpush1.msra.mxu0 %v3248
  %3382 = vmatprep.subr.mxu0 %v3259
  %3383 = vmatpush1.msra.mxu0 %v3258
  %3384 = vmatprep.subr.mxu0 %v3269
  %3385 = vmatpush1.msra.mxu0 %v3268
  %3386 = vmatprep.subr.mxu0 %v3279
  %3387 = vmatpush1.msra.mxu0 %v3278
  %3388 = vmatprep.subr.mxu0 0.0
  %3389 = vmatpush1.msra.mxu0 0.0
  %3390 = vmatprep.subr.mxu0 0.0
  %3391 = vmatpush1.msra.mxu0 0.0
  %3392 = vmatprep.subr.mxu0 0.0
  %3393 = vmatpush1.msra.mxu0 0.0
  %3394 = vmatprep.subr.mxu0 0.0
  %3395 = vmatpush1.msra.mxu0 0.0
  %3396 = vmatprep.subr.mxu0 0.0
  %3397 = vmatpush1.msra.mxu0 0.0
  %3398 = vmatprep.subr.mxu0 0.0
  %3399 = vmatpush1.msra.mxu0 0.0
  %3400 = vmatprep.subr.mxu0 0.0
  %3401 = vmatpush1.msra.mxu0 0.0
  %3402 = vmatprep.subr.mxu0 0.0
  %3403 = vmatpush1.msra.mxu0 0.0
  %3404 = vmatprep.subr.mxu0 0.0
  %3405 = vmatpush1.msra.mxu0 0.0
  %3406 = vmatprep.subr.mxu0 0.0
  %3407 = vmatpush1.msra.mxu0 0.0
  %3408 = vmatprep.subr.mxu0 0.0
  %3409 = vmatpush1.msra.mxu0 0.0
  %3410 = vmatprep.subr.mxu0 0.0
  %3411 = vmatpush1.msra.mxu0 0.0
  %3412 = vmatprep.subr.mxu0 0.0
  %3413 = vmatpush1.msra.mxu0 0.0
  %3414 = vmatprep.subr.mxu0 0.0
  %3415 = vmatpush1.msra.mxu0 0.0
  %3416 = vmatprep.subr.mxu0 0.0
  %3417 = vmatpush1.msra.mxu0 0.0
  %3418 = vmatprep.subr.mxu0 0.0
  %3419 = vmatpush1.msra.mxu0 0.0
  %3420 = vmatprep.subr.mxu0 0.0
  %3421 = vmatpush1.msra.mxu0 0.0
  %3422 = vmatprep.subr.mxu0 0.0
  %3423 = vmatpush1.msra.mxu0 0.0
  %3424 = vmatprep.subr.mxu0 0.0
  %3425 = vmatpush1.msra.mxu0 0.0
  %3426 = vmatprep.mubr.f32.mxu0 0.0
  %3427 = vmatmul.mubr.f32.gmra.mrb[0].mxu0 %v3289
  %v3428 = vpop.f32.mrb[0].mxu0
  %v3429 = vadd.f32 0.0, %v3428
  %v3430 = vpop.f32.mrb[0].mxu0
  %v3431 = vadd.f32 0.0, %v3430
  %3432 = vdwg.mxu0
  %3433 = vmatprep.subr.mxu0 %v3161
  %3434 = vmatpush1.msra.mxu0 %v3160
  %3435 = vmatprep.subr.mxu0 %v3171
  %3436 = vmatpush1.msra.mxu0 %v3170
  %3437 = vmatprep.subr.mxu0 %v3181
  %3438 = vmatpush1.msra.mxu0 %v3180
  %3439 = vmatprep.subr.mxu0 %v3191
  %3440 = vmatpush1.msra.mxu0 %v3190
  %3441 = vmatprep.subr.mxu0 %v3201
  %3442 = vmatpush1.msra.mxu0 %v3200
  %3443 = vmatprep.subr.mxu0 %v3211
  %3444 = vmatpush1.msra.mxu0 %v3210
  %3445 = vmatprep.subr.mxu0 %v3221
  %3446 = vmatpush1.msra.mxu0 %v3220
  %3447 = vmatprep.subr.mxu0 %v3231
  %3448 = vmatpush1.msra.mxu0 %v3230
  %3449 = vmatprep.subr.mxu0 %v3241
  %3450 = vmatpush1.msra.mxu0 %v3240
  %3451 = vmatprep.subr.mxu0 %v3251
  %3452 = vmatpush1.msra.mxu0 %v3250
  %3453 = vmatprep.subr.mxu0 %v3261
  %3454 = vmatpush1.msra.mxu0 %v3260
  %3455 = vmatprep.subr.mxu0 %v3271
  %3456 = vmatpush1.msra.mxu0 %v3270
  %3457 = vmatprep.subr.mxu0 %v3281
  %3458 = vmatpush1.msra.mxu0 %v3280
  %3459 = vmatprep.subr.mxu0 0.0
  %3460 = vmatpush1.msra.mxu0 0.0
  %3461 = vmatprep.subr.mxu0 0.0
  %3462 = vmatpush1.msra.mxu0 0.0
  %3463 = vmatprep.subr.mxu0 0.0
  %3464 = vmatpush1.msra.mxu0 0.0
  %3465 = vmatprep.subr.mxu0 0.0
  %3466 = vmatpush1.msra.mxu0 0.0
  %3467 = vmatprep.subr.mxu0 0.0
  %3468 = vmatpush1.msra.mxu0 0.0
  %3469 = vmatprep.subr.mxu0 0.0
  %3470 = vmatpush1.msra.mxu0 0.0
  %3471 = vmatprep.subr.mxu0 0.0
  %3472 = vmatpush1.msra.mxu0 0.0
  %3473 = vmatprep.subr.mxu0 0.0
  %3474 = vmatpush1.msra.mxu0 0.0
  %3475 = vmatprep.subr.mxu0 0.0
  %3476 = vmatpush1.msra.mxu0 0.0
  %3477 = vmatprep.subr.mxu0 0.0
  %3478 = vmatpush1.msra.mxu0 0.0
  %3479 = vmatprep.subr.mxu0 0.0
  %3480 = vmatpush1.msra.mxu0 0.0
  %3481 = vmatprep.subr.mxu0 0.0
  %3482 = vmatpush1.msra.mxu0 0.0
  %3483 = vmatprep.subr.mxu0 0.0
  %3484 = vmatpush1.msra.mxu0 0.0
  %3485 = vmatprep.subr.mxu0 0.0
  %3486 = vmatpush1.msra.mxu0 0.0
  %3487 = vmatprep.subr.mxu0 0.0
  %3488 = vmatpush1.msra.mxu0 0.0
  %3489 = vmatprep.subr.mxu0 0.0
  %3490 = vmatpush1.msra.mxu0 0.0
  %3491 = vmatprep.subr.mxu0 0.0
  %3492 = vmatpush1.msra.mxu0 0.0
  %3493 = vmatprep.subr.mxu0 0.0
  %3494 = vmatpush1.msra.mxu0 0.0
  %3495 = vmatprep.subr.mxu0 0.0
  %3496 = vmatpush1.msra.mxu0 0.0
  %3497 = vmatprep.mubr.f32.mxu0 0.0
  %3498 = vmatmul.mubr.f32.gmra.mrb[0].mxu0 %v3289
  %v3499 = vpop.f32.mrb[0].mxu0
  %v3500 = vadd.f32 0.0, %v3499
  %v3501 = vpop.f32.mrb[0].mxu0
  %v3502 = vadd.f32 0.0, %v3501
  %3503 = vdwg.mxu0
  %3504 = vmatprep.subr.mxu0 %v3163
  %3505 = vmatpush1.msra.mxu0 %v3162
  %3506 = vmatprep.subr.mxu0 %v3173
  %3507 = vmatpush1.msra.mxu0 %v3172
  %3508 = vmatprep.subr.mxu0 %v3183
  %3509 = vmatpush1.msra.mxu0 %v3182
  %3510 = vmatprep.subr.mxu0 %v3193
  %3511 = vmatpush1.msra.mxu0 %v3192
  %3512 = vmatprep.subr.mxu0 %v3203
  %3513 = vmatpush1.msra.mxu0 %v3202
  %3514 = vmatprep.subr.mxu0 %v3213
  %3515 = vmatpush1.msra.mxu0 %v3212
  %3516 = vmatprep.subr.mxu0 %v3223
  %3517 = vmatpush1.msra.mxu0 %v3222
  %3518 = vmatprep.subr.mxu0 %v3233
  %3519 = vmatpush1.msra.mxu0 %v3232
  %3520 = vmatprep.subr.mxu0 %v3243
  %3521 = vmatpush1.msra.mxu0 %v3242
  %3522 = vmatprep.subr.mxu0 %v3253
  %3523 = vmatpush1.msra.mxu0 %v3252
  %3524 = vmatprep.subr.mxu0 %v3263
  %3525 = vmatpush1.msra.mxu0 %v3262
  %3526 = vmatprep.subr.mxu0 %v3273
  %3527 = vmatpush1.msra.mxu0 %v3272
  %3528 = vmatprep.subr.mxu0 %v3283
  %3529 = vmatpush1.msra.mxu0 %v3282
  %3530 = vmatprep.subr.mxu0 0.0
  %3531 = vmatpush1.msra.mxu0 0.0
  %3532 = vmatprep.subr.mxu0 0.0
  %3533 = vmatpush1.msra.mxu0 0.0
  %3534 = vmatprep.subr.mxu0 0.0
  %3535 = vmatpush1.msra.mxu0 0.0
  %3536 = vmatprep.subr.mxu0 0.0
  %3537 = vmatpush1.msra.mxu0 0.0
  %3538 = vmatprep.subr.mxu0 0.0
  %3539 = vmatpush1.msra.mxu0 0.0
  %3540 = vmatprep.subr.mxu0 0.0
  %3541 = vmatpush1.msra.mxu0 0.0
  %3542 = vmatprep.subr.mxu0 0.0
  %3543 = vmatpush1.msra.mxu0 0.0
  %3544 = vmatprep.subr.mxu0 0.0
  %3545 = vmatpush1.msra.mxu0 0.0
  %3546 = vmatprep.subr.mxu0 0.0
  %3547 = vmatpush1.msra.mxu0 0.0
  %3548 = vmatprep.subr.mxu0 0.0
  %3549 = vmatpush1.msra.mxu0 0.0
  %3550 = vmatprep.subr.mxu0 0.0
  %3551 = vmatpush1.msra.mxu0 0.0
  %3552 = vmatprep.subr.mxu0 0.0
  %3553 = vmatpush1.msra.mxu0 0.0
  %3554 = vmatprep.subr.mxu0 0.0
  %3555 = vmatpush1.msra.mxu0 0.0
  %3556 = vmatprep.subr.mxu0 0.0
  %3557 = vmatpush1.msra.mxu0 0.0
  %3558 = vmatprep.subr.mxu0 0.0
  %3559 = vmatpush1.msra.mxu0 0.0
  %3560 = vmatprep.subr.mxu0 0.0
  %3561 = vmatpush1.msra.mxu0 0.0
  %3562 = vmatprep.subr.mxu0 0.0
  %3563 = vmatpush1.msra.mxu0 0.0
  %3564 = vmatprep.subr.mxu0 0.0
  %3565 = vmatpush1.msra.mxu0 0.0
  %3566 = vmatprep.subr.mxu0 0.0
  %3567 = vmatpush1.msra.mxu0 0.0
  %3568 = vmatprep.mubr.f32.mxu0 0.0
  %3569 = vmatmul.mubr.f32.gmra.mrb[0].mxu0 %v3289
  %v3570 = vpop.f32.mrb[0].mxu0
  %v3571 = vadd.f32 0.0, %v3570
  %v3572 = vpop.f32.mrb[0].mxu0
  %v3573 = vadd.f32 0.0, %v3572
  %3574 = vdwg.mxu0
  %3575 = vmatprep.subr.mxu0 %v3165
  %3576 = vmatpush1.msra.mxu0 %v3164
  %3577 = vmatprep.subr.mxu0 %v3175
  %3578 = vmatpush1.msra.mxu0 %v3174
  %3579 = vmatprep.subr.mxu0 %v3185
  %3580 = vmatpush1.msra.mxu0 %v3184
  %3581 = vmatprep.subr.mxu0 %v3195
  %3582 = vmatpush1.msra.mxu0 %v3194
  %3583 = vmatprep.subr.mxu0 %v3205
  %3584 = vmatpush1.msra.mxu0 %v3204
  %3585 = vmatprep.subr.mxu0 %v3215
  %3586 = vmatpush1.msra.mxu0 %v3214
  %3587 = vmatprep.subr.mxu0 %v3225
  %3588 = vmatpush1.msra.mxu0 %v3224
  %3589 = vmatprep.subr.mxu0 %v3235
  %3590 = vmatpush1.msra.mxu0 %v3234
  %3591 = vmatprep.subr.mxu0 %v3245
  %3592 = vmatpush1.msra.mxu0 %v3244
  %3593 = vmatprep.subr.mxu0 %v3255
  %3594 = vmatpush1.msra.mxu0 %v3254
  %3595 = vmatprep.subr.mxu0 %v3265
  %3596 = vmatpush1.msra.mxu0 %v3264
  %3597 = vmatprep.subr.mxu0 %v3275
  %3598 = vmatpush1.msra.mxu0 %v3274
  %3599 = vmatprep.subr.mxu0 %v3285
  %3600 = vmatpush1.msra.mxu0 %v3284
  %3601 = vmatprep.subr.mxu0 0.0
  %3602 = vmatpush1.msra.mxu0 0.0
  %3603 = vmatprep.subr.mxu0 0.0
  %3604 = vmatpush1.msra.mxu0 0.0
  %3605 = vmatprep.subr.mxu0 0.0
  %3606 = vmatpush1.msra.mxu0 0.0
  %3607 = vmatprep.subr.mxu0 0.0
  %3608 = vmatpush1.msra.mxu0 0.0
  %3609 = vmatprep.subr.mxu0 0.0
  %3610 = vmatpush1.msra.mxu0 0.0
  %3611 = vmatprep.subr.mxu0 0.0
  %3612 = vmatpush1.msra.mxu0 0.0
  %3613 = vmatprep.subr.mxu0 0.0
  %3614 = vmatpush1.msra.mxu0 0.0
  %3615 = vmatprep.subr.mxu0 0.0
  %3616 = vmatpush1.msra.mxu0 0.0
  %3617 = vmatprep.subr.mxu0 0.0
  %3618 = vmatpush1.msra.mxu0 0.0
  %3619 = vmatprep.subr.mxu0 0.0
  %3620 = vmatpush1.msra.mxu0 0.0
  %3621 = vmatprep.subr.mxu0 0.0
  %3622 = vmatpush1.msra.mxu0 0.0
  %3623 = vmatprep.subr.mxu0 0.0
  %3624 = vmatpush1.msra.mxu0 0.0
  %3625 = vmatprep.subr.mxu0 0.0
  %3626 = vmatpush1.msra.mxu0 0.0
  %3627 = vmatprep.subr.mxu0 0.0
  %3628 = vmatpush1.msra.mxu0 0.0
  %3629 = vmatprep.subr.mxu0 0.0
  %3630 = vmatpush1.msra.mxu0 0.0
  %3631 = vmatprep.subr.mxu0 0.0
  %3632 = vmatpush1.msra.mxu0 0.0
  %3633 = vmatprep.subr.mxu0 0.0
  %3634 = vmatpush1.msra.mxu0 0.0
  %3635 = vmatprep.subr.mxu0 0.0
  %3636 = vmatpush1.msra.mxu0 0.0
  %3637 = vmatprep.subr.mxu0 0.0
  %3638 = vmatpush1.msra.mxu0 0.0
  %3639 = vmatprep.mubr.f32.mxu0 0.0
  %3640 = vmatmul.mubr.f32.gmra.mrb[0].mxu0 %v3289
  %v3641 = vpop.f32.mrb[0].mxu0
  %v3642 = vadd.f32 0.0, %v3641
  %v3643 = vpop.f32.mrb[0].mxu0
  %v3644 = vadd.f32 0.0, %v3643
  %3645 = vdwg.mxu0
  %v3646 = vld [vmem:[%s3] sm:$0xff]
  %v3647 = vld [vmem:[%s3 + $0x8] sm:$0xff]
  %v3648 = vld [vmem:[%s3 + $0x10] sm:$0xff]
  %v3649 = vld [vmem:[%s3 + $0x18] sm:$0xff]
  %v3650 = vld [vmem:[%s3 + $0x20] sm:$0xff]
  %v3651 = vld [vmem:[%s3 + $0x28] sm:$0xff]
  %v3652 = vld [vmem:[%s3 + $0x30] sm:$0xff]
  %v3653 = vld [vmem:[%s3 + $0x38] sm:$0xff]
  %v3654 = vld [vmem:[%s3 + $0x40] sm:$0xff]
  %v3655 = vld [vmem:[%s3 + $0x48] sm:$0xff]
  %v3656 = vld [vmem:[%s3 + $0x50] sm:$0xff]
  %v3657 = vld [vmem:[%s3 + $0x58] sm:$0xff]
  %v3658 = vld [vmem:[%s3 + $0x60] sm:$0xff]
  %v3659 = vld [vmem:[%s3 + $0x68] sm:$0xff]
  %v3660 = vld [vmem:[%s3 + $0x70] sm:$0xff]
  %v3661 = vld [vmem:[%s3 + $0x78] sm:$0xff]
  %v3662 = vld [vmem:[%s3 + $0x80] sm:$0xff]
  %v3663 = vld [vmem:[%s3 + $0x88] sm:$0xff]
  %v3664 = vld [vmem:[%s3 + $0x90] sm:$0xff]
  %v3665 = vld [vmem:[%s3 + $0x98] sm:$0xff]
  %v3666 = vld [vmem:[%s3 + $0xa0] sm:$0xff]
  %v3667 = vld [vmem:[%s3 + $0xa8] sm:$0xff]
  %v3668 = vld [vmem:[%s3 + $0xb0] sm:$0xff]
  %v3669 = vld [vmem:[%s3 + $0xb8] sm:$0xff]
  %v3670 = vld [vmem:[%s3 + $0xc0] sm:$0xff]
  %v3671 = vld [vmem:[%s3 + $0xc8] sm:$0xff]
  %v3672 = vld [vmem:[%s3 + $0xd0] sm:$0xff]
  %v3673 = vld [vmem:[%s3 + $0xd8] sm:$0xff]
  %v3674 = vld [vmem:[%s3 + $0xe0] sm:$0xff]
  %v3675 = vld [vmem:[%s3 + $0xe8] sm:$0xff]
  %v3676 = vld [vmem:[%s3 + $0xf0] sm:$0xff]
  %v3677 = vld [vmem:[%s3 + $0xf8] sm:$0xff]
  %v3678 = vld [vmem:[%s3 + $0x100] sm:$0xff]
  %v3679 = vld [vmem:[%s3 + $0x108] sm:$0xff]
  %v3680 = vld [vmem:[%s3 + $0x110] sm:$0xff]
  %v3681 = vld [vmem:[%s3 + $0x118] sm:$0xff]
  %v3682 = vld [vmem:[%s3 + $0x120] sm:$0xff]
  %v3683 = vld [vmem:[%s3 + $0x128] sm:$0xff]
  %v3684 = vld [vmem:[%s3 + $0x130] sm:$0xff]
  %v3685 = vld [vmem:[%s3 + $0x138] sm:$0xff]
  %v3686 = vld [vmem:[%s3 + $0x140] sm:$0xff]
  %v3687 = vld [vmem:[%s3 + $0x148] sm:$0xff]
  %v3688 = vld [vmem:[%s3 + $0x150] sm:$0xff]
  %v3689 = vld [vmem:[%s3 + $0x158] sm:$0xff]
  %v3690 = vld [vmem:[%s3 + $0x160] sm:$0xff]
  %v3691 = vld [vmem:[%s3 + $0x168] sm:$0xff]
  %v3692 = vld [vmem:[%s3 + $0x170] sm:$0xff]
  %v3693 = vld [vmem:[%s3 + $0x178] sm:$0xff]
  %v3694 = vld [vmem:[%s3 + $0x180] sm:$0xff]
  %v3695 = vld [vmem:[%s3 + $0x188] sm:$0xff]
  %v3696 = vld [vmem:[%s3 + $0x190] sm:$0xff]
  %v3697 = vld [vmem:[%s3 + $0x198] sm:$0xff]
  %v3698 = vld [vmem:[%s3 + $0x1a0] sm:$0xff]
  %v3699 = vld [vmem:[%s3 + $0x1a8] sm:$0xff]
  %v3700 = vld [vmem:[%s3 + $0x1b0] sm:$0xff]
  %v3701 = vld [vmem:[%s3 + $0x1b8] sm:$0xff]
  %v3702 = vld [vmem:[%s3 + $0x1c0] sm:$0xff]
  %v3703 = vld [vmem:[%s3 + $0x1c8] sm:$0xff]
  %v3704 = vld [vmem:[%s3 + $0x1d0] sm:$0xff]
  %v3705 = vld [vmem:[%s3 + $0x1d8] sm:$0xff]
  %v3706 = vld [vmem:[%s3 + $0x1e0] sm:$0xff]
  %v3707 = vld [vmem:[%s3 + $0x1e8] sm:$0xff]
  %v3708 = vld [vmem:[%s3 + $0x1f0] sm:$0xff]
  %v3709 = vld [vmem:[%s3 + $0x1f8] sm:$0xff]
  %v3710 = vld [vmem:[%s3 + $0x200] sm:$0xff]
  %v3711 = vld [vmem:[%s3 + $0x208] sm:$0xff]
  %v3712 = vld [vmem:[%s3 + $0x210] sm:$0xff]
  %v3713 = vld [vmem:[%s3 + $0x218] sm:$0xff]
  %v3714 = vld [vmem:[%s3 + $0x220] sm:$0xff]
  %v3715 = vld [vmem:[%s3 + $0x228] sm:$0xff]
  %v3716 = vld [vmem:[%s3 + $0x230] sm:$0xff]
  %v3717 = vld [vmem:[%s3 + $0x238] sm:$0xff]
  %v3718 = vld [vmem:[%s3 + $0x240] sm:$0xff]
  %v3719 = vld [vmem:[%s3 + $0x248] sm:$0xff]
  %v3720 = vld [vmem:[%s3 + $0x250] sm:$0xff]
  %v3721 = vld [vmem:[%s3 + $0x258] sm:$0xff]
  %v3722 = vld [vmem:[%s3 + $0x260] sm:$0xff]
  %v3723 = vld [vmem:[%s3 + $0x268] sm:$0xff]
  %v3724 = vld [vmem:[%s3 + $0x270] sm:$0xff]
  %v3725 = vld [vmem:[%s3 + $0x278] sm:$0xff]
  %v3726 = vld [vmem:[%s3 + $0x280] sm:$0xff]
  %v3727 = vld [vmem:[%s3 + $0x288] sm:$0xff]
  %v3728 = vld [vmem:[%s3 + $0x290] sm:$0xff]
  %v3729 = vld [vmem:[%s3 + $0x298] sm:$0xff]
  %v3730 = vld [vmem:[%s3 + $0x2a0] sm:$0xff]
  %v3731 = vld [vmem:[%s3 + $0x2a8] sm:$0xff]
  %v3732 = vld [vmem:[%s3 + $0x2b0] sm:$0xff]
  %v3733 = vld [vmem:[%s3 + $0x2b8] sm:$0xff]
  %v3734 = vld [vmem:[%s3 + $0x2c0] sm:$0xff]
  %v3735 = vld [vmem:[%s3 + $0x2c8] sm:$0xff]
  %v3736 = vld [vmem:[%s3 + $0x2d0] sm:$0xff]
  %v3737 = vld [vmem:[%s3 + $0x2d8] sm:$0xff]
  %v3738 = vld [vmem:[%s3 + $0x2e0] sm:$0xff]
  %v3739 = vld [vmem:[%s3 + $0x2e8] sm:$0xff]
  %v3740 = vld [vmem:[%s3 + $0x2f0] sm:$0xff]
  %v3741 = vld [vmem:[%s3 + $0x2f8] sm:$0xff]
  %v3742 = vld [vmem:[%s3 + $0x300] sm:$0xff]
  %v3743 = vld [vmem:[%s3 + $0x308] sm:$0xff]
  %v3744 = vld [vmem:[%s3 + $0x310] sm:$0xff]
  %v3745 = vld [vmem:[%s3 + $0x318] sm:$0xff]
  %v3746 = vld [vmem:[%s3 + $0x320] sm:$0xff]
  %v3747 = vld [vmem:[%s3 + $0x328] sm:$0xff]
  %v3748 = vld [vmem:[%s3 + $0x330] sm:$0xff]
  %v3749 = vld [vmem:[%s3 + $0x338] sm:$0xff]
  %v3750 = vld [vmem:[%s3 + $0x340] sm:$0xff]
  %v3751 = vld [vmem:[%s3 + $0x348] sm:$0xff]
  %v3752 = vld [vmem:[%s3 + $0x350] sm:$0xff]
  %v3753 = vld [vmem:[%s3 + $0x358] sm:$0xff]
  %v3754 = vld [vmem:[%s3 + $0x360] sm:$0xff]
  %v3755 = vld [vmem:[%s3 + $0x368] sm:$0xff]
  %v3756 = vld [vmem:[%s3 + $0x370] sm:$0xff]
  %v3757 = vld [vmem:[%s3 + $0x378] sm:$0xff]
  %v3758 = vld [vmem:[%s3 + $0x380] sm:$0xff]
  %v3759 = vld [vmem:[%s3 + $0x388] sm:$0xff]
  %v3760 = vld [vmem:[%s3 + $0x390] sm:$0xff]
  %v3761 = vld [vmem:[%s3 + $0x398] sm:$0xff]
  %v3762 = vld [vmem:[%s3 + $0x3a0] sm:$0xff]
  %v3763 = vld [vmem:[%s3 + $0x3a8] sm:$0xff]
  %v3764 = vld [vmem:[%s3 + $0x3b0] sm:$0xff]
  %v3765 = vld [vmem:[%s3 + $0x3b8] sm:$0xff]
  %v3766 = vld [vmem:[%s3 + $0x3c0] sm:$0xff]
  %v3767 = vld [vmem:[%s3 + $0x3c8] sm:$0xff]
  %v3768 = vld [vmem:[%s3 + $0x3d0] sm:$0xff]
  %v3769 = vld [vmem:[%s3 + $0x3d8] sm:$0xff]
  %v3770 = vld [vmem:[%s3 + $0x3e0] sm:$0xff]
  %v3771 = vld [vmem:[%s3 + $0x3e8] sm:$0xff]
  %v3772 = vld [vmem:[%s3 + $0x3f0] sm:$0xff]
  %v3773 = vld [vmem:[%s3 + $0x3f8] sm:$0xff]
  %v3774 = vld [vmem:[%s3 + $0x400] sm:$0xff]
  %v3775 = vld [vmem:[%s3 + $0x408] sm:$0xff]
  %v3776 = vld [vmem:[%s3 + $0x410] sm:$0xff]
  %v3777 = vld [vmem:[%s3 + $0x418] sm:$0xff]
  %v3778 = vld [vmem:[%s3 + $0x420] sm:$0xff]
  %v3779 = vld [vmem:[%s3 + $0x428] sm:$0xff]
  %v3780 = vld [vmem:[%s3 + $0x430] sm:$0xff]
  %v3781 = vld [vmem:[%s3 + $0x438] sm:$0xff]
  %v3782 = vld [vmem:[%s3 + $0x440] sm:$0xff]
  %v3783 = vld [vmem:[%s3 + $0x448] sm:$0xff]
  %v3784 = vld [vmem:[%s3 + $0x450] sm:$0xff]
  %v3785 = vld [vmem:[%s3 + $0x458] sm:$0xff]
  %v3786 = vld [vmem:[%s3 + $0x460] sm:$0xff]
  %v3787 = vld [vmem:[%s3 + $0x468] sm:$0xff]
  %v3788 = vld [vmem:[%s3 + $0x470] sm:$0xff]
  %v3789 = vld [vmem:[%s3 + $0x478] sm:$0xff]
  %v3790 = vld [vmem:[%s3 + $0x480] sm:$0xff]
  %v3791 = vld [vmem:[%s3 + $0x488] sm:$0xff]
  %v3792 = vld [vmem:[%s3 + $0x490] sm:$0xff]
  %v3793 = vld [vmem:[%s3 + $0x498] sm:$0xff]
  %v3794 = vld [vmem:[%s3 + $0x4a0] sm:$0xff]
  %v3795 = vld [vmem:[%s3 + $0x4a8] sm:$0xff]
  %v3796 = vld [vmem:[%s3 + $0x4b0] sm:$0xff]
  %v3797 = vld [vmem:[%s3 + $0x4b8] sm:$0xff]
  %v3798 = vld [vmem:[%s3 + $0x4c0] sm:$0xff]
  %v3799 = vld [vmem:[%s3 + $0x4c8] sm:$0xff]
  %v3800 = vld [vmem:[%s3 + $0x4d0] sm:$0xff]
  %v3801 = vld [vmem:[%s3 + $0x4d8] sm:$0xff]
  %v3802 = vld [vmem:[%s3 + $0x4e0] sm:$0xff]
  %v3803 = vld [vmem:[%s3 + $0x4e8] sm:$0xff]
  %v3804 = vld [vmem:[%s3 + $0x4f0] sm:$0xff]
  %v3805 = vld [vmem:[%s3 + $0x4f8] sm:$0xff]
  %3806 = vmatprep.subr.mxu0 0.0
  %3807 = vmatpush1.msra.mxu0 %v3646
  %3808 = vmatprep.subr.mxu0 0.0
  %3809 = vmatpush1.msra.mxu0 %v3647
  %3810 = vmatprep.subr.mxu0 0.0
  %3811 = vmatpush1.msra.mxu0 %v3648
  %3812 = vmatprep.subr.mxu0 0.0
  %3813 = vmatpush1.msra.mxu0 %v3649
  %3814 = vmatprep.subr.mxu0 0.0
  %3815 = vmatpush1.msra.mxu0 %v3650
  %3816 = vmatprep.subr.mxu0 0.0
  %3817 = vmatpush1.msra.mxu0 %v3651
  %3818 = vmatprep.subr.mxu0 0.0
  %3819 = vmatpush1.msra.mxu0 %v3652
  %3820 = vmatprep.subr.mxu0 0.0
  %3821 = vmatpush1.msra.mxu0 %v3653
  %3822 = vmatprep.subr.mxu0 0.0
  %3823 = vmatpush1.msra.mxu0 %v3654
  %3824 = vmatprep.subr.mxu0 0.0
  %3825 = vmatpush1.msra.mxu0 %v3655
  %3826 = vmatprep.subr.mxu0 0.0
  %3827 = vmatpush1.msra.mxu0 %v3656
  %3828 = vmatprep.subr.mxu0 0.0
  %3829 = vmatpush1.msra.mxu0 %v3657
  %3830 = vmatprep.subr.mxu0 0.0
  %3831 = vmatpush1.msra.mxu0 %v3658
  %3832 = vmatprep.subr.mxu0 0.0
  %3833 = vmatpush1.msra.mxu0 %v3659
  %3834 = vmatprep.subr.mxu0 0.0
  %3835 = vmatpush1.msra.mxu0 %v3660
  %3836 = vmatprep.subr.mxu0 0.0
  %3837 = vmatpush1.msra.mxu0 %v3661
  %3838 = vmatprep.subr.mxu0 0.0
  %3839 = vmatpush1.msra.mxu0 %v3662
  %3840 = vmatprep.subr.mxu0 0.0
  %3841 = vmatpush1.msra.mxu0 %v3663
  %3842 = vmatprep.subr.mxu0 0.0
  %3843 = vmatpush1.msra.mxu0 %v3664
  %3844 = vmatprep.subr.mxu0 0.0
  %3845 = vmatpush1.msra.mxu0 %v3665
  %3846 = vmatprep.subr.mxu0 0.0
  %3847 = vmatpush1.msra.mxu0 %v3666
  %3848 = vmatprep.subr.mxu0 0.0
  %3849 = vmatpush1.msra.mxu0 %v3667
  %3850 = vmatprep.subr.mxu0 0.0
  %3851 = vmatpush1.msra.mxu0 %v3668
  %3852 = vmatprep.subr.mxu0 0.0
  %3853 = vmatpush1.msra.mxu0 %v3669
  %3854 = vmatprep.subr.mxu0 0.0
  %3855 = vmatpush1.msra.mxu0 %v3670
  %3856 = vmatprep.subr.mxu0 0.0
  %3857 = vmatpush1.msra.mxu0 %v3671
  %3858 = vmatprep.subr.mxu0 0.0
  %3859 = vmatpush1.msra.mxu0 %v3672
  %3860 = vmatprep.subr.mxu0 0.0
  %3861 = vmatpush1.msra.mxu0 %v3673
  %3862 = vmatprep.subr.mxu0 0.0
  %3863 = vmatpush1.msra.mxu0 %v3674
  %3864 = vmatprep.subr.mxu0 0.0
  %3865 = vmatpush1.msra.mxu0 %v3675
  %3866 = vmatprep.subr.mxu0 0.0
  %3867 = vmatpush1.msra.mxu0 %v3676
  %3868 = vmatprep.subr.mxu0 0.0
  %3869 = vmatpush1.msra.mxu0 %v3677
  %3870 = vmatprep.mubr.f32.mxu0 %v3360
  %3871 = vmatmul.mubr.f32.gmra.mrb[0].mxu0 %v3358
  %v3872 = vpop.f32.mrb[0].mxu0
  %v3873 = vadd.f32 0.0, %v3872
  %v3874 = vpop.f32.mrb[0].mxu0
  %3875 = vdwg.mxu0
  %3876 = vmatprep.subr.mxu0 0.0
  %3877 = vmatpush1.msra.mxu0 %v3678
  %3878 = vmatprep.subr.mxu0 0.0
  %3879 = vmatpush1.msra.mxu0 %v3679
  %3880 = vmatprep.subr.mxu0 0.0
  %3881 = vmatpush1.msra.mxu0 %v3680
  %3882 = vmatprep.subr.mxu0 0.0
  %3883 = vmatpush1.msra.mxu0 %v3681
  %3884 = vmatprep.subr.mxu0 0.0
  %3885 = vmatpush1.msra.mxu0 %v3682
  %3886 = vmatprep.subr.mxu0 0.0
  %3887 = vmatpush1.msra.mxu0 %v3683
  %3888 = vmatprep.subr.mxu0 0.0
  %3889 = vmatpush1.msra.mxu0 %v3684
  %3890 = vmatprep.subr.mxu0 0.0
  %3891 = vmatpush1.msra.mxu0 %v3685
  %3892 = vmatprep.subr.mxu0 0.0
  %3893 = vmatpush1.msra.mxu0 %v3686
  %3894 = vmatprep.subr.mxu0 0.0
  %3895 = vmatpush1.msra.mxu0 %v3687
  %3896 = vmatprep.subr.mxu0 0.0
  %3897 = vmatpush1.msra.mxu0 %v3688
  %3898 = vmatprep.subr.mxu0 0.0
  %3899 = vmatpush1.msra.mxu0 %v3689
  %3900 = vmatprep.subr.mxu0 0.0
  %3901 = vmatpush1.msra.mxu0 %v3690
  %3902 = vmatprep.subr.mxu0 0.0
  %3903 = vmatpush1.msra.mxu0 %v3691
  %3904 = vmatprep.subr.mxu0 0.0
  %3905 = vmatpush1.msra.mxu0 %v3692
  %3906 = vmatprep.subr.mxu0 0.0
  %3907 = vmatpush1.msra.mxu0 %v3693
  %3908 = vmatprep.subr.mxu0 0.0
  %3909 = vmatpush1.msra.mxu0 %v3694
  %3910 = vmatprep.subr.mxu0 0.0
  %3911 = vmatpush1.msra.mxu0 %v3695
  %3912 = vmatprep.subr.mxu0 0.0
  %3913 = vmatpush1.msra.mxu0 %v3696
  %3914 = vmatprep.subr.mxu0 0.0
  %3915 = vmatpush1.msra.mxu0 %v3697
  %3916 = vmatprep.subr.mxu0 0.0
  %3917 = vmatpush1.msra.mxu0 %v3698
  %3918 = vmatprep.subr.mxu0 0.0
  %3919 = vmatpush1.msra.mxu0 %v3699
  %3920 = vmatprep.subr.mxu0 0.0
  %3921 = vmatpush1.msra.mxu0 %v3700
  %3922 = vmatprep.subr.mxu0 0.0
  %3923 = vmatpush1.msra.mxu0 %v3701
  %3924 = vmatprep.subr.mxu0 0.0
  %3925 = vmatpush1.msra.mxu0 %v3702
  %3926 = vmatprep.subr.mxu0 0.0
  %3927 = vmatpush1.msra.mxu0 %v3703
  %3928 = vmatprep.subr.mxu0 0.0
  %3929 = vmatpush1.msra.mxu0 %v3704
  %3930 = vmatprep.subr.mxu0 0.0
  %3931 = vmatpush1.msra.mxu0 %v3705
  %3932 = vmatprep.subr.mxu0 0.0
  %3933 = vmatpush1.msra.mxu0 %v3706
  %3934 = vmatprep.subr.mxu0 0.0
  %3935 = vmatpush1.msra.mxu0 %v3707
  %3936 = vmatprep.subr.mxu0 0.0
  %3937 = vmatpush1.msra.mxu0 %v3708
  %3938 = vmatprep.subr.mxu0 0.0
  %3939 = vmatpush1.msra.mxu0 %v3709
  %3940 = vmatprep.mubr.f32.mxu0 %v3431
  %3941 = vmatmul.mubr.f32.gmra.mrb[0].mxu0 %v3429
  %v3942 = vpop.f32.mrb[0].mxu0
  %v3943 = vadd.f32 %v3873, %v3942
  %v3944 = vpop.f32.mrb[0].mxu0
  %3945 = vdwg.mxu0
  %3946 = vmatprep.subr.mxu0 0.0
  %3947 = vmatpush1.msra.mxu0 %v3710
  %3948 = vmatprep.subr.mxu0 0.0
  %3949 = vmatpush1.msra.mxu0 %v3711
  %3950 = vmatprep.subr.mxu0 0.0
  %3951 = vmatpush1.msra.mxu0 %v3712
  %3952 = vmatprep.subr.mxu0 0.0
  %3953 = vmatpush1.msra.mxu0 %v3713
  %3954 = vmatprep.subr.mxu0 0.0
  %3955 = vmatpush1.msra.mxu0 %v3714
  %3956 = vmatprep.subr.mxu0 0.0
  %3957 = vmatpush1.msra.mxu0 %v3715
  %3958 = vmatprep.subr.mxu0 0.0
  %3959 = vmatpush1.msra.mxu0 %v3716
  %3960 = vmatprep.subr.mxu0 0.0
  %3961 = vmatpush1.msra.mxu0 %v3717
  %3962 = vmatprep.subr.mxu0 0.0
  %3963 = vmatpush1.msra.mxu0 %v3718
  %3964 = vmatprep.subr.mxu0 0.0
  %3965 = vmatpush1.msra.mxu0 %v3719
  %3966 = vmatprep.subr.mxu0 0.0
  %3967 = vmatpush1.msra.mxu0 %v3720
  %3968 = vmatprep.subr.mxu0 0.0
  %3969 = vmatpush1.msra.mxu0 %v3721
  %3970 = vmatprep.subr.mxu0 0.0
  %3971 = vmatpush1.msra.mxu0 %v3722
  %3972 = vmatprep.subr.mxu0 0.0
  %3973 = vmatpush1.msra.mxu0 %v3723
  %3974 = vmatprep.subr.mxu0 0.0
  %3975 = vmatpush1.msra.mxu0 %v3724
  %3976 = vmatprep.subr.mxu0 0.0
  %3977 = vmatpush1.msra.mxu0 %v3725
  %3978 = vmatprep.subr.mxu0 0.0
  %3979 = vmatpush1.msra.mxu0 %v3726
  %3980 = vmatprep.subr.mxu0 0.0
  %3981 = vmatpush1.msra.mxu0 %v3727
  %3982 = vmatprep.subr.mxu0 0.0
  %3983 = vmatpush1.msra.mxu0 %v3728
  %3984 = vmatprep.subr.mxu0 0.0
  %3985 = vmatpush1.msra.mxu0 %v3729
  %3986 = vmatprep.subr.mxu0 0.0
  %3987 = vmatpush1.msra.mxu0 %v3730
  %3988 = vmatprep.subr.mxu0 0.0
  %3989 = vmatpush1.msra.mxu0 %v3731
  %3990 = vmatprep.subr.mxu0 0.0
  %3991 = vmatpush1.msra.mxu0 %v3732
  %3992 = vmatprep.subr.mxu0 0.0
  %3993 = vmatpush1.msra.mxu0 %v3733
  %3994 = vmatprep.subr.mxu0 0.0
  %3995 = vmatpush1.msra.mxu0 %v3734
  %3996 = vmatprep.subr.mxu0 0.0
  %3997 = vmatpush1.msra.mxu0 %v3735
  %3998 = vmatprep.subr.mxu0 0.0
  %3999 = vmatpush1.msra.mxu0 %v3736
  %4000 = vmatprep.subr.mxu0 0.0
  %4001 = vmatpush1.msra.mxu0 %v3737
  %4002 = vmatprep.subr.mxu0 0.0
  %4003 = vmatpush1.msra.mxu0 %v3738
  %4004 = vmatprep.subr.mxu0 0.0
  %4005 = vmatpush1.msra.mxu0 %v3739
  %4006 = vmatprep.subr.mxu0 0.0
  %4007 = vmatpush1.msra.mxu0 %v3740
  %4008 = vmatprep.subr.mxu0 0.0
  %4009 = vmatpush1.msra.mxu0 %v3741
  %4010 = vmatprep.mubr.f32.mxu0 %v3502
  %4011 = vmatmul.mubr.f32.gmra.mrb[0].mxu0 %v3500
  %v4012 = vpop.f32.mrb[0].mxu0
  %v4013 = vadd.f32 %v3943, %v4012
  %v4014 = vpop.f32.mrb[0].mxu0
  %4015 = vdwg.mxu0
  %4016 = vmatprep.subr.mxu0 0.0
  %4017 = vmatpush1.msra.mxu0 %v3742
  %4018 = vmatprep.subr.mxu0 0.0
  %4019 = vmatpush1.msra.mxu0 %v3743
  %4020 = vmatprep.subr.mxu0 0.0
  %4021 = vmatpush1.msra.mxu0 %v3744
  %4022 = vmatprep.subr.mxu0 0.0
  %4023 = vmatpush1.msra.mxu0 %v3745
  %4024 = vmatprep.subr.mxu0 0.0
  %4025 = vmatpush1.msra.mxu0 %v3746
  %4026 = vmatprep.subr.mxu0 0.0
  %4027 = vmatpush1.msra.mxu0 %v3747
  %4028 = vmatprep.subr.mxu0 0.0
  %4029 = vmatpush1.msra.mxu0 %v3748
  %4030 = vmatprep.subr.mxu0 0.0
  %4031 = vmatpush1.msra.mxu0 %v3749
  %4032 = vmatprep.subr.mxu0 0.0
  %4033 = vmatpush1.msra.mxu0 %v3750
  %4034 = vmatprep.subr.mxu0 0.0
  %4035 = vmatpush1.msra.mxu0 %v3751
  %4036 = vmatprep.subr.mxu0 0.0
  %4037 = vmatpush1.msra.mxu0 %v3752
  %4038 = vmatprep.subr.mxu0 0.0
  %4039 = vmatpush1.msra.mxu0 %v3753
  %4040 = vmatprep.subr.mxu0 0.0
  %4041 = vmatpush1.msra.mxu0 %v3754
  %4042 = vmatprep.subr.mxu0 0.0
  %4043 = vmatpush1.msra.mxu0 %v3755
  %4044 = vmatprep.subr.mxu0 0.0
  %4045 = vmatpush1.msra.mxu0 %v3756
  %4046 = vmatprep.subr.mxu0 0.0
  %4047 = vmatpush1.msra.mxu0 %v3757
  %4048 = vmatprep.subr.mxu0 0.0
  %4049 = vmatpush1.msra.mxu0 %v3758
  %4050 = vmatprep.subr.mxu0 0.0
  %4051 = vmatpush1.msra.mxu0 %v3759
  %4052 = vmatprep.subr.mxu0 0.0
  %4053 = vmatpush1.msra.mxu0 %v3760
  %4054 = vmatprep.subr.mxu0 0.0
  %4055 = vmatpush1.msra.mxu0 %v3761
  %4056 = vmatprep.subr.mxu0 0.0
  %4057 = vmatpush1.msra.mxu0 %v3762
  %4058 = vmatprep.subr.mxu0 0.0
  %4059 = vmatpush1.msra.mxu0 %v3763
  %4060 = vmatprep.subr.mxu0 0.0
  %4061 = vmatpush1.msra.mxu0 %v3764
  %4062 = vmatprep.subr.mxu0 0.0
  %4063 = vmatpush1.msra.mxu0 %v3765
  %4064 = vmatprep.subr.mxu0 0.0
  %4065 = vmatpush1.msra.mxu0 %v3766
  %4066 = vmatprep.subr.mxu0 0.0
  %4067 = vmatpush1.msra.mxu0 %v3767
  %4068 = vmatprep.subr.mxu0 0.0
  %4069 = vmatpush1.msra.mxu0 %v3768
  %4070 = vmatprep.subr.mxu0 0.0
  %4071 = vmatpush1.msra.mxu0 %v3769
  %4072 = vmatprep.subr.mxu0 0.0
  %4073 = vmatpush1.msra.mxu0 %v3770
  %4074 = vmatprep.subr.mxu0 0.0
  %4075 = vmatpush1.msra.mxu0 %v3771
  %4076 = vmatprep.subr.mxu0 0.0
  %4077 = vmatpush1.msra.mxu0 %v3772
  %4078 = vmatprep.subr.mxu0 0.0
  %4079 = vmatpush1.msra.mxu0 %v3773
  %4080 = vmatprep.mubr.f32.mxu0 %v3573
  %4081 = vmatmul.mubr.f32.gmra.mrb[0].mxu0 %v3571
  %v4082 = vpop.f32.mrb[0].mxu0
  %v4083 = vadd.f32 %v4013, %v4082
  %v4084 = vpop.f32.mrb[0].mxu0
  %4085 = vdwg.mxu0
  %4086 = vmatprep.subr.mxu0 0.0
  %4087 = vmatpush1.msra.mxu0 %v3774
  %4088 = vmatprep.subr.mxu0 0.0
  %4089 = vmatpush1.msra.mxu0 %v3775
  %4090 = vmatprep.subr.mxu0 0.0
  %4091 = vmatpush1.msra.mxu0 %v3776
  %4092 = vmatprep.subr.mxu0 0.0
  %4093 = vmatpush1.msra.mxu0 %v3777
  %4094 = vmatprep.subr.mxu0 0.0
  %4095 = vmatpush1.msra.mxu0 %v3778
  %4096 = vmatprep.subr.mxu0 0.0
  %4097 = vmatpush1.msra.mxu0 %v3779
  %4098 = vmatprep.subr.mxu0 0.0
  %4099 = vmatpush1.msra.mxu0 %v3780
  %4100 = vmatprep.subr.mxu0 0.0
  %4101 = vmatpush1.msra.mxu0 %v3781
  %4102 = vmatprep.subr.mxu0 0.0
  %4103 = vmatpush1.msra.mxu0 %v3782
  %4104 = vmatprep.subr.mxu0 0.0
  %4105 = vmatpush1.msra.mxu0 %v3783
  %4106 = vmatprep.subr.mxu0 0.0
  %4107 = vmatpush1.msra.mxu0 %v3784
  %4108 = vmatprep.subr.mxu0 0.0
  %4109 = vmatpush1.msra.mxu0 %v3785
  %4110 = vmatprep.subr.mxu0 0.0
  %4111 = vmatpush1.msra.mxu0 %v3786
  %4112 = vmatprep.subr.mxu0 0.0
  %4113 = vmatpush1.msra.mxu0 %v3787
  %4114 = vmatprep.subr.mxu0 0.0
  %4115 = vmatpush1.msra.mxu0 %v3788
  %4116 = vmatprep.subr.mxu0 0.0
  %4117 = vmatpush1.msra.mxu0 %v3789
  %4118 = vmatprep.subr.mxu0 0.0
  %4119 = vmatpush1.msra.mxu0 %v3790
  %4120 = vmatprep.subr.mxu0 0.0
  %4121 = vmatpush1.msra.mxu0 %v3791
  %4122 = vmatprep.subr.mxu0 0.0
  %4123 = vmatpush1.msra.mxu0 %v3792
  %4124 = vmatprep.subr.mxu0 0.0
  %4125 = vmatpush1.msra.mxu0 %v3793
  %4126 = vmatprep.subr.mxu0 0.0
  %4127 = vmatpush1.msra.mxu0 %v3794
  %4128 = vmatprep.subr.mxu0 0.0
  %4129 = vmatpush1.msra.mxu0 %v3795
  %4130 = vmatprep.subr.mxu0 0.0
  %4131 = vmatpush1.msra.mxu0 %v3796
  %4132 = vmatprep.subr.mxu0 0.0
  %4133 = vmatpush1.msra.mxu0 %v3797
  %4134 = vmatprep.subr.mxu0 0.0
  %4135 = vmatpush1.msra.mxu0 %v3798
  %4136 = vmatprep.subr.mxu0 0.0
  %4137 = vmatpush1.msra.mxu0 %v3799
  %4138 = vmatprep.subr.mxu0 0.0
  %4139 = vmatpush1.msra.mxu0 %v3800
  %4140 = vmatprep.subr.mxu0 0.0
  %4141 = vmatpush1.msra.mxu0 %v3801
  %4142 = vmatprep.subr.mxu0 0.0
  %4143 = vmatpush1.msra.mxu0 %v3802
  %4144 = vmatprep.subr.mxu0 0.0
  %4145 = vmatpush1.msra.mxu0 %v3803
  %4146 = vmatprep.subr.mxu0 0.0
  %4147 = vmatpush1.msra.mxu0 %v3804
  %4148 = vmatprep.subr.mxu0 0.0
  %4149 = vmatpush1.msra.mxu0 %v3805
  %4150 = vmatprep.mubr.f32.mxu0 %v3644
  %4151 = vmatmul.mubr.f32.gmra.mrb[0].mxu0 %v3642
  %v4152 = vpop.f32.mrb[0].mxu0
  %v4153 = vadd.f32 %v4083, %v4152
  %v4154 = vpop.f32.mrb[0].mxu0
  %4155 = vdwg.mxu0
  %vm4156 = vcmask 25600
  %4157 = vst.msk [vmem:[%s4] sm:$0x3] %vm4156, %v4153
  // Predicated region
  $region18: #{classifier_forward.1} parent=0 // pred_check
    _
  $region19: #{classifier_forward.1} parent=0 // pred_check_branch
    %4159 = sbr.rel (0) target = $region21
  $region20: #{classifier_forward.1} parent=0 // pred_region
    _
  $region21: #{classifier_forward.1} parent=0 // pred_fallthru
    _
  // Predicated region
  $region22: #{classifier_forward.1} parent=0 // pred_check
    _
  $region23: #{classifier_forward.1} parent=0 // pred_check_branch
    %4161 = sbr.rel (0) target = $region25
  $region24: #{classifier_forward.1} parent=0 // pred_region
    _
  $region25: #{classifier_forward.1} parent=0 // pred_fallthru
    _

</llo_original>
